<compile_context>
chip_gen: v7x
topology: tpu7x:2x2x1
jax: 0.10.0
libtpu: 0.0.40
codegen_flags: <defaults>
</compile_context>

<pallas_src>
import functools

import jax
import jax.numpy as jnp
from jax.experimental import pallas as pl
from jax.experimental.pallas import tpu as pltpu

LANE = 128  # TPU vreg lane width


def _round_up(x, m):
    return (x + m - 1) // m * m


# ----------------------------------------------------------------------------
# Fused Pallas kernel: whole VAE forward for one batch tile
# ----------------------------------------------------------------------------
def _vae_fused_kernel(
    x_ref, eps_ref,
    w1_ref, b1_ref, w2_ref, b2_ref, w3_ref, b3_ref,   # encoder (weights bf16, biases f32)
    w4_ref, b4_ref, w5_ref, b5_ref, w6_ref, b6_ref,   # decoder
    recon_ref, mulogvar_ref,
    *, lat_pad,
):
    bf16 = jnp.bfloat16
    f32 = jnp.float32

    # ---------------- encoder (MXU in bf16, f32 accumulation) ----------------
    x = x_ref[...].astype(bf16)
    h = jnp.dot(x, w1_ref[...], preferred_element_type=f32) + b1_ref[...]
    h = jnp.maximum(h, 0.0)
    h = jnp.dot(h.astype(bf16), w2_ref[...], preferred_element_type=f32) + b2_ref[...]
    h = jnp.maximum(h, 0.0)
    h = jnp.dot(h.astype(bf16), w3_ref[...], preferred_element_type=f32) + b3_ref[...]

    # lane-dense (TILE_B, 2*lat_pad) writeback; caller slices mu/logvar out
    mulogvar_ref[...] = h

    # ------------- reparameterize (split lands on a 128-lane boundary) -------
    mu = h[:, :lat_pad]
    logvar = h[:, lat_pad:]
    std = jnp.exp(0.5 * logvar)          # padded cols: exp(0)=1, harmless
    z = mu + eps_ref[...] * std          # padded cols: 0 + 0*1 = 0

    # ---------------- decoder ----------------
    d = jnp.dot(z.astype(bf16), w4_ref[...], preferred_element_type=f32) + b4_ref[...]
    d = jnp.maximum(d, 0.0)
    d = jnp.dot(d.astype(bf16), w5_ref[...], preferred_element_type=f32) + b5_ref[...]
    d = jnp.maximum(d, 0.0)
    d = jnp.dot(d.astype(bf16), w6_ref[...], preferred_element_type=f32) + b6_ref[...]
    recon_ref[...] = jax.nn.sigmoid(d)


# ----------------------------------------------------------------------------
# Tile policy: fill the MXU M dim, keep >= 2 grid steps for v7x's 2 TCs
# ----------------------------------------------------------------------------
def _default_tile_b(batch):
    if batch >= 512:
        return 256               # fills 2x256 MXU (v6e/v7x), >= 2 grid steps
    if batch >= 256:
        return 128               # still fills v5e's 128-row MXU; >= 2 steps
    # small batches: one block covering the whole (8-rounded) batch
    return batch if batch % 8 == 0 else _round_up(batch, 8)


# ----------------------------------------------------------------------------
# Parameter init (mirrors the PyTorch module) + kernel-ready preparation
# ----------------------------------------------------------------------------
def init_vae_params(key, input_dim, latent_dim):
    """Each Linear: weight stored (in, out) so y = x @ W + b; bias 2D (1, out)."""
    enc_dims = [(input_dim, 512), (512, 256), (256, latent_dim * 2)]
    dec_dims = [(latent_dim, 256), (256, 512), (512, input_dim)]
    params = {"enc": [], "dec": []}
    keys = jax.random.split(key, len(enc_dims) + len(dec_dims))
    for i, (fan_in, fan_out) in enumerate(enc_dims):
        scale = 1.0 / jnp.sqrt(jnp.float32(fan_in))
        w = jax.random.normal(keys[i], (fan_in, fan_out), jnp.float32) * scale
        params["enc"].append((w, jnp.zeros((1, fan_out), jnp.float32)))
    for j, (fan_in, fan_out) in enumerate(dec_dims):
        scale = 1.0 / jnp.sqrt(jnp.float32(fan_in))
        w = jax.random.normal(keys[len(enc_dims) + j], (fan_in, fan_out), jnp.float32) * scale
        params["dec"].append((w, jnp.zeros((1, fan_out), jnp.float32)))
    return params


def prepare_vae_params(params, input_dim, latent_dim):
    """Pad the latent block to 128-lane boundaries and cast matmul weights to bf16.

    Layout: layer-3 output has mu in cols [0, latent) and logvar in cols
    [lat_pad, lat_pad + latent); w4's K dim is zero-padded to lat_pad rows.
    """
    lat_pad = _round_up(latent_dim, LANE)
    (w1, b1), (w2, b2), (w3, b3) = params["enc"]
    (w4, b4), (w5, b5), (w6, b6) = params["dec"]

    w3p = jnp.zeros((w3.shape[0], 2 * lat_pad), jnp.float32)
    w3p = w3p.at[:, :latent_dim].set(w3[:, :latent_dim])
    w3p = w3p.at[:, lat_pad:lat_pad + latent_dim].set(w3[:, latent_dim:])
    b3p = jnp.zeros((1, 2 * lat_pad), jnp.float32)
    b3p = b3p.at[:, :latent_dim].set(b3[:, :latent_dim])
    b3p = b3p.at[:, lat_pad:lat_pad + latent_dim].set(b3[:, latent_dim:])
    w4p = jnp.zeros((lat_pad, w4.shape[1]), jnp.float32).at[:latent_dim, :].set(w4)

    bf16 = jnp.bfloat16
    weights = [
        w1.astype(bf16), b1, w2.astype(bf16), b2, w3p.astype(bf16), b3p,
        w4p.astype(bf16), b4, w5.astype(bf16), b5, w6.astype(bf16), b6,
    ]
    return {"weights": weights, "input_dim": input_dim,
            "latent_dim": latent_dim, "lat_pad": lat_pad}


# ----------------------------------------------------------------------------
# Wrapper: batch-tiled grid, weights resident in VMEM across the grid
# ----------------------------------------------------------------------------
def vae_forward(prepped, x, eps, *, tile_b=None):
    """x: (B, input_dim) f32, eps: (B, latent_dim) f32 -> (recon, mu, logvar)."""
    batch, input_dim = x.shape
    latent_dim = prepped["latent_dim"]
    lat_pad = prepped["lat_pad"]
    assert input_dim == prepped["input_dim"]
    assert eps.shape == (batch, latent_dim)

    if tile_b is None:
        tile_b = _default_tile_b(batch)
    grid = (pl.cdiv(batch, tile_b),)   # last block may be partial (writes clipped)

    # Lane-pad eps with zeros (w4's padded rows are zero, so padded z is inert).
    eps_p = jnp.zeros((batch, lat_pad), jnp.float32).at[:, :latent_dim].set(eps)

    weights = prepped["weights"]

    def row_spec(feat):
        # batch-tiled: block i covers rows [i*tile_b, (i+1)*tile_b)
        return pl.BlockSpec((tile_b, feat), lambda i: (i, 0))

    def resident_spec(arr):
        # constant block index -> stays VMEM-resident across the whole grid
        return pl.BlockSpec(arr.shape, lambda i: (0, 0))

    in_specs = [row_spec(input_dim), row_spec(lat_pad)]
    in_specs += [resident_spec(a) for a in weights]

    out_shape = (
        jax.ShapeDtypeStruct((batch, input_dim), jnp.float32),
        jax.ShapeDtypeStruct((batch, 2 * lat_pad), jnp.float32),
    )
    out_specs = (row_spec(input_dim), row_spec(2 * lat_pad))

    # Advisory cost estimate for XLA's scheduler.
    per_row_flops = 2 * (input_dim * 512 + 512 * 256 + 256 * 2 * lat_pad
                         + lat_pad * 256 + 256 * 512 + 512 * input_dim)
    weight_bytes = sum(int(a.size) * a.dtype.itemsize for a in weights)
    io_bytes = batch * (input_dim + lat_pad + 2 * lat_pad + input_dim) * 4
    cost = pl.CostEstimate(
        flops=batch * per_row_flops,
        transcendentals=batch * (lat_pad + input_dim),
        bytes_accessed=weight_bytes + io_bytes,
    )

    recon, mulogvar = pl.pallas_call(
        functools.partial(_vae_fused_kernel, lat_pad=lat_pad),
        grid=grid,
        in_specs=in_specs,
        out_specs=out_specs,
        out_shape=out_shape,
        compiler_params=pltpu.CompilerParams(
            dimension_semantics=("parallel",),     # shard batch tiles on v7x 2 TCs
            vmem_limit_bytes=32 * 1024 * 1024,     # ~1 MB weights + few MB acts; safe everywhere
        ),
        cost_estimate=cost,
    )(x, eps_p, *weights)

    mu = mulogvar[:, :latent_dim]
    logvar = mulogvar[:, lat_pad:lat_pad + latent_dim]
    return recon, mu, logvar


# ----------------------------------------------------------------------------
# Pure-JAX f32 reference for correctness checking
# ----------------------------------------------------------------------------
def vae_forward_ref(params, x, eps):
    h = jnp.maximum(x @ params["enc"][0][0] + params["enc"][0][1], 0.0)
    h = jnp.maximum(h @ params["enc"][1][0] + params["enc"][1][1], 0.0)
    h = h @ params["enc"][2][0] + params["enc"][2][1]
    mu, logvar = jnp.split(h, 2, axis=1)
    z = mu + eps * jnp.exp(0.5 * logvar)
    h = jnp.maximum(z @ params["dec"][0][0] + params["dec"][0][1], 0.0)
    h = jnp.maximum(h @ params["dec"][1][0] + params["dec"][1][1], 0.0)
    recon = jax.nn.sigmoid(h @ params["dec"][2][0] + params["dec"][2][1])
    return recon, mu, logvar


if __name__ == "__main__":
    batch, input_dim, latent_dim = 512, 64, 16   # -> tile_b=256, 2-step grid

    root = jax.random.PRNGKey(0)
    k_params, k_x, k_eps = jax.random.split(root, 3)

    params = init_vae_params(k_params, input_dim, latent_dim)
    prepped = prepare_vae_params(params, input_dim, latent_dim)
    x = jax.random.uniform(k_x, (batch, input_dim), jnp.float32)
    eps = jax.random.normal(k_eps, (batch, latent_dim), jnp.float32)

    recon, mu, logvar = vae_forward(prepped, x, eps)
    jax.block_until_ready((recon, mu, logvar))

    # correctness check against pure-JAX f32 reference (bf16 matmuls -> loose tol)
    recon_r, mu_r, logvar_r = vae_forward_ref(params, x, eps)
    assert recon.shape == (batch, input_dim)
    assert mu.shape == (batch, latent_dim) and logvar.shape == (batch, latent_dim)
    assert jnp.allclose(mu, mu_r, atol=5e-2, rtol=5e-2)
    assert jnp.allclose(logvar, logvar_r, atol=5e-2, rtol=5e-2)
    assert jnp.allclose(recon, recon_r, atol=5e-2, rtol=5e-2)

    print("KERNEL_OK")
</pallas_src>

<mosaic_0001>
module attributes {stable_mosaic.version = 11 : i64} {
  func.func @_vae_fused_kernel(%arg0: i32, %arg1: memref<256x64xf32, #tpu.memory_space<vmem>>, %arg2: memref<256x128xf32, #tpu.memory_space<vmem>>, %arg3: memref<64x512xbf16, #tpu.memory_space<vmem>>, %arg4: memref<1x512xf32, #tpu.memory_space<vmem>>, %arg5: memref<512x256xbf16, #tpu.memory_space<vmem>>, %arg6: memref<1x256xf32, #tpu.memory_space<vmem>>, %arg7: memref<256x256xbf16, #tpu.memory_space<vmem>>, %arg8: memref<1x256xf32, #tpu.memory_space<vmem>>, %arg9: memref<128x256xbf16, #tpu.memory_space<vmem>>, %arg10: memref<1x256xf32, #tpu.memory_space<vmem>>, %arg11: memref<256x512xbf16, #tpu.memory_space<vmem>>, %arg12: memref<1x512xf32, #tpu.memory_space<vmem>>, %arg13: memref<512x64xbf16, #tpu.memory_space<vmem>>, %arg14: memref<1x64xf32, #tpu.memory_space<vmem>>, %arg15: memref<256x64xf32, #tpu.memory_space<vmem>>, %arg16: memref<256x256xf32, #tpu.memory_space<vmem>>) attributes {dimension_semantics = [#tpu.dimension_semantics<parallel>], iteration_bounds = array<i64: 2>, scalar_prefetch = 0 : i64, scratch_operands = 0 : i64, tpu.core_type = #tpu.core_type<tc>, window_params = [{transform_indices = @transform_0, window_bounds = array<i64: 256, 64>}, {transform_indices = @transform_1, window_bounds = array<i64: 256, 128>}, {pipeline_mode = #tpu.pipeline_mode<synchronous>, transform_indices = @transform_2, window_bounds = array<i64: 64, 512>}, {pipeline_mode = #tpu.pipeline_mode<synchronous>, transform_indices = @transform_3, window_bounds = array<i64: 1, 512>}, {pipeline_mode = #tpu.pipeline_mode<synchronous>, transform_indices = @transform_4, window_bounds = array<i64: 512, 256>}, {pipeline_mode = #tpu.pipeline_mode<synchronous>, transform_indices = @transform_5, window_bounds = array<i64: 1, 256>}, {pipeline_mode = #tpu.pipeline_mode<synchronous>, transform_indices = @transform_6, window_bounds = array<i64: 256, 256>}, {pipeline_mode = #tpu.pipeline_mode<synchronous>, transform_indices = @transform_7, window_bounds = array<i64: 1, 256>}, {pipeline_mode = #tpu.pipeline_mode<synchronous>, transform_indices = @transform_8, window_bounds = array<i64: 128, 256>}, {pipeline_mode = #tpu.pipeline_mode<synchronous>, transform_indices = @transform_9, window_bounds = array<i64: 1, 256>}, {pipeline_mode = #tpu.pipeline_mode<synchronous>, transform_indices = @transform_10, window_bounds = array<i64: 256, 512>}, {pipeline_mode = #tpu.pipeline_mode<synchronous>, transform_indices = @transform_11, window_bounds = array<i64: 1, 512>}, {pipeline_mode = #tpu.pipeline_mode<synchronous>, transform_indices = @transform_12, window_bounds = array<i64: 512, 64>}, {pipeline_mode = #tpu.pipeline_mode<synchronous>, transform_indices = @transform_13, window_bounds = array<i64: 1, 64>}, {transform_indices = @transform_14, window_bounds = array<i64: 256, 64>}, {transform_indices = @transform_15, window_bounds = array<i64: 256, 256>}]} {
    %c0 = arith.constant 0 : index
    %c0_0 = arith.constant 0 : index
    %0 = vector.load %arg1[%c0, %c0_0] : memref<256x64xf32, #tpu.memory_space<vmem>>, vector<256x64xf32>
    %1 = arith.truncf %0 : vector<256x64xf32> to vector<256x64xbf16>
    %c0_1 = arith.constant 0 : index
    %c0_2 = arith.constant 0 : index
    %2 = vector.load %arg3[%c0_1, %c0_2] : memref<64x512xbf16, #tpu.memory_space<vmem>>, vector<64x512xbf16>
    %cst = arith.constant dense<0.000000e+00> : vector<256x512xf32>
    %3 = tpu.matmul %1, %2, %cst {dimension_numbers = #tpu.dot_dimension_numbers<[1], [0], [0], [1], [0, 0, 1, 1], [], []>} : vector<256x64xbf16>, vector<64x512xbf16>, vector<256x512xf32> -> vector<256x512xf32>
    %c0_3 = arith.constant 0 : index
    %c0_4 = arith.constant 0 : index
    %4 = vector.load %arg4[%c0_3, %c0_4] : memref<1x512xf32, #tpu.memory_space<vmem>>, vector<1x512xf32>
    %5 = vector.broadcast %4 : vector<1x512xf32> to vector<256x512xf32>
    %6 = arith.addf %3, %5 : vector<256x512xf32>
    %cst_5 = arith.constant 0.000000e+00 : f32
    %7 = vector.broadcast %cst_5 : f32 to vector<256x512xf32>
    %8 = arith.maximumf %6, %7 : vector<256x512xf32>
    %9 = arith.truncf %8 : vector<256x512xf32> to vector<256x512xbf16>
    %c0_6 = arith.constant 0 : index
    %c0_7 = arith.constant 0 : index
    %10 = vector.load %arg5[%c0_6, %c0_7] : memref<512x256xbf16, #tpu.memory_space<vmem>>, vector<512x256xbf16>
    %cst_8 = arith.constant dense<0.000000e+00> : vector<256x256xf32>
    %11 = tpu.matmul %9, %10, %cst_8 {dimension_numbers = #tpu.dot_dimension_numbers<[1], [0], [0], [1], [0, 0, 1, 1], [], []>} : vector<256x512xbf16>, vector<512x256xbf16>, vector<256x256xf32> -> vector<256x256xf32>
    %c0_9 = arith.constant 0 : index
    %c0_10 = arith.constant 0 : index
    %12 = vector.load %arg6[%c0_9, %c0_10] : memref<1x256xf32, #tpu.memory_space<vmem>>, vector<1x256xf32>
    %13 = vector.broadcast %12 : vector<1x256xf32> to vector<256x256xf32>
    %14 = arith.addf %11, %13 : vector<256x256xf32>
    %cst_11 = arith.constant 0.000000e+00 : f32
    %15 = vector.broadcast %cst_11 : f32 to vector<256x256xf32>
    %16 = arith.maximumf %14, %15 : vector<256x256xf32>
    %17 = arith.truncf %16 : vector<256x256xf32> to vector<256x256xbf16>
    %c0_12 = arith.constant 0 : index
    %c0_13 = arith.constant 0 : index
    %18 = vector.load %arg7[%c0_12, %c0_13] : memref<256x256xbf16, #tpu.memory_space<vmem>>, vector<256x256xbf16>
    %cst_14 = arith.constant dense<0.000000e+00> : vector<256x256xf32>
    %19 = tpu.matmul %17, %18, %cst_14 {dimension_numbers = #tpu.dot_dimension_numbers<[1], [0], [0], [1], [0, 0, 1, 1], [], []>} : vector<256x256xbf16>, vector<256x256xbf16>, vector<256x256xf32> -> vector<256x256xf32>
    %c0_15 = arith.constant 0 : index
    %c0_16 = arith.constant 0 : index
    %20 = vector.load %arg8[%c0_15, %c0_16] : memref<1x256xf32, #tpu.memory_space<vmem>>, vector<1x256xf32>
    %21 = vector.broadcast %20 : vector<1x256xf32> to vector<256x256xf32>
    %22 = arith.addf %19, %21 : vector<256x256xf32>
    %c0_17 = arith.constant 0 : index
    %c0_18 = arith.constant 0 : index
    %23 = vector.load %arg16[%c0_17, %c0_18] : memref<256x256xf32, #tpu.memory_space<vmem>>, vector<256x256xf32>
    tpu.vector_store %arg16[%c0_17, %c0_18], %22 {strides = array<i32>} : memref<256x256xf32, #tpu.memory_space<vmem>>, vector<256x256xf32>,
    %24 = vector.extract_strided_slice %22 {offsets = [0, 0], sizes = [256, 128], strides = [1, 1]} : vector<256x256xf32> to vector<256x128xf32>
    %25 = vector.extract_strided_slice %22 {offsets = [0, 128], sizes = [256, 128], strides = [1, 1]} : vector<256x256xf32> to vector<256x128xf32>
    %cst_19 = arith.constant 5.000000e-01 : f32
    %26 = vector.broadcast %cst_19 : f32 to vector<256x128xf32>
    %27 = arith.mulf %26, %25 : vector<256x128xf32>
    %28 = math.exp %27 : vector<256x128xf32>
    %c0_20 = arith.constant 0 : index
    %c0_21 = arith.constant 0 : index
    %29 = vector.load %arg2[%c0_20, %c0_21] : memref<256x128xf32, #tpu.memory_space<vmem>>, vector<256x128xf32>
    %30 = arith.mulf %29, %28 : vector<256x128xf32>
    %31 = arith.addf %24, %30 : vector<256x128xf32>
    %32 = arith.truncf %31 : vector<256x128xf32> to vector<256x128xbf16>
    %c0_22 = arith.constant 0 : index
    %c0_23 = arith.constant 0 : index
    %33 = vector.load %arg9[%c0_22, %c0_23] : memref<128x256xbf16, #tpu.memory_space<vmem>>, vector<128x256xbf16>
    %cst_24 = arith.constant dense<0.000000e+00> : vector<256x256xf32>
    %34 = tpu.matmul %32, %33, %cst_24 {dimension_numbers = #tpu.dot_dimension_numbers<[1], [0], [0], [1], [0, 0, 1, 1], [], []>} : vector<256x128xbf16>, vector<128x256xbf16>, vector<256x256xf32> -> vector<256x256xf32>
    %c0_25 = arith.constant 0 : index
    %c0_26 = arith.constant 0 : index
    %35 = vector.load %arg10[%c0_25, %c0_26] : memref<1x256xf32, #tpu.memory_space<vmem>>, vector<1x256xf32>
    %36 = vector.broadcast %35 : vector<1x256xf32> to vector<256x256xf32>
    %37 = arith.addf %34, %36 : vector<256x256xf32>
    %cst_27 = arith.constant 0.000000e+00 : f32
    %38 = vector.broadcast %cst_27 : f32 to vector<256x256xf32>
    %39 = arith.maximumf %37, %38 : vector<256x256xf32>
    %40 = arith.truncf %39 : vector<256x256xf32> to vector<256x256xbf16>
    %c0_28 = arith.constant 0 : index
    %c0_29 = arith.constant 0 : index
    %41 = vector.load %arg11[%c0_28, %c0_29] : memref<256x512xbf16, #tpu.memory_space<vmem>>, vector<256x512xbf16>
    %cst_30 = arith.constant dense<0.000000e+00> : vector<256x512xf32>
    %42 = tpu.matmul %40, %41, %cst_30 {dimension_numbers = #tpu.dot_dimension_numbers<[1], [0], [0], [1], [0, 0, 1, 1], [], []>} : vector<256x256xbf16>, vector<256x512xbf16>, vector<256x512xf32> -> vector<256x512xf32>
    %c0_31 = arith.constant 0 : index
    %c0_32 = arith.constant 0 : index
    %43 = vector.load %arg12[%c0_31, %c0_32] : memref<1x512xf32, #tpu.memory_space<vmem>>, vector<1x512xf32>
    %44 = vector.broadcast %43 : vector<1x512xf32> to vector<256x512xf32>
    %45 = arith.addf %42, %44 : vector<256x512xf32>
    %cst_33 = arith.constant 0.000000e+00 : f32
    %46 = vector.broadcast %cst_33 : f32 to vector<256x512xf32>
    %47 = arith.maximumf %45, %46 : vector<256x512xf32>
    %48 = arith.truncf %47 : vector<256x512xf32> to vector<256x512xbf16>
    %c0_34 = arith.constant 0 : index
    %c0_35 = arith.constant 0 : index
    %49 = vector.load %arg13[%c0_34, %c0_35] : memref<512x64xbf16, #tpu.memory_space<vmem>>, vector<512x64xbf16>
    %cst_36 = arith.constant dense<0.000000e+00> : vector<256x64xf32>
    %50 = tpu.matmul %48, %49, %cst_36 {dimension_numbers = #tpu.dot_dimension_numbers<[1], [0], [0], [1], [0, 0, 1, 1], [], []>} : vector<256x512xbf16>, vector<512x64xbf16>, vector<256x64xf32> -> vector<256x64xf32>
    %c0_37 = arith.constant 0 : index
    %c0_38 = arith.constant 0 : index
    %51 = vector.load %arg14[%c0_37, %c0_38] : memref<1x64xf32, #tpu.memory_space<vmem>>, vector<1x64xf32>
    %52 = vector.broadcast %51 : vector<1x64xf32> to vector<256x64xf32>
    %53 = arith.addf %50, %52 : vector<256x64xf32>
    %54 = arith.negf %53 : vector<256x64xf32>
    %55 = math.exp %54 : vector<256x64xf32>
    %cst_39 = arith.constant 1.000000e+00 : f32
    %56 = vector.broadcast %cst_39 : f32 to vector<256x64xf32>
    %57 = arith.addf %56, %55 : vector<256x64xf32>
    %58 = arith.divf %56, %57 : vector<256x64xf32>
    %c0_40 = arith.constant 0 : index
    %c0_41 = arith.constant 0 : index
    %59 = vector.load %arg15[%c0_40, %c0_41] : memref<256x64xf32, #tpu.memory_space<vmem>>, vector<256x64xf32>
    tpu.vector_store %arg15[%c0_40, %c0_41], %58 {strides = array<i32>} : memref<256x64xf32, #tpu.memory_space<vmem>>, vector<256x64xf32>,
    return
  }
  func.func @transform_0(%arg0: i32) -> (i32, i32) {
    %c0_i32 = arith.constant 0 : i32
    %c0_i32_0 = arith.constant 0 : i32
    return %arg0, %c0_i32 : i32, i32
  }
  func.func @transform_1(%arg0: i32) -> (i32, i32) {
    %c0_i32 = arith.constant 0 : i32
    %c0_i32_0 = arith.constant 0 : i32
    return %arg0, %c0_i32 : i32, i32
  }
  func.func @transform_2(%arg0: i32) -> (i32, i32) {
    %c0_i32 = arith.constant 0 : i32
    %c0_i32_0 = arith.constant 0 : i32
    %c0_i32_1 = arith.constant 0 : i32
    return %c0_i32, %c0_i32_0 : i32, i32
  }
  func.func @transform_3(%arg0: i32) -> (i32, i32) {
    %c0_i32 = arith.constant 0 : i32
    %c0_i32_0 = arith.constant 0 : i32
    %c0_i32_1 = arith.constant 0 : i32
    return %c0_i32, %c0_i32_0 : i32, i32
  }
  func.func @transform_4(%arg0: i32) -> (i32, i32) {
    %c0_i32 = arith.constant 0 : i32
    %c0_i32_0 = arith.constant 0 : i32
    %c0_i32_1 = arith.constant 0 : i32
    return %c0_i32, %c0_i32_0 : i32, i32
  }
  func.func @transform_5(%arg0: i32) -> (i32, i32) {
    %c0_i32 = arith.constant 0 : i32
    %c0_i32_0 = arith.constant 0 : i32
    %c0_i32_1 = arith.constant 0 : i32
    return %c0_i32, %c0_i32_0 : i32, i32
  }
  func.func @transform_6(%arg0: i32) -> (i32, i32) {
    %c0_i32 = arith.constant 0 : i32
    %c0_i32_0 = arith.constant 0 : i32
    %c0_i32_1 = arith.constant 0 : i32
    return %c0_i32, %c0_i32_0 : i32, i32
  }
  func.func @transform_7(%arg0: i32) -> (i32, i32) {
    %c0_i32 = arith.constant 0 : i32
    %c0_i32_0 = arith.constant 0 : i32
    %c0_i32_1 = arith.constant 0 : i32
    return %c0_i32, %c0_i32_0 : i32, i32
  }
  func.func @transform_8(%arg0: i32) -> (i32, i32) {
    %c0_i32 = arith.constant 0 : i32
    %c0_i32_0 = arith.constant 0 : i32
    %c0_i32_1 = arith.constant 0 : i32
    return %c0_i32, %c0_i32_0 : i32, i32
  }
  func.func @transform_9(%arg0: i32) -> (i32, i32) {
    %c0_i32 = arith.constant 0 : i32
    %c0_i32_0 = arith.constant 0 : i32
    %c0_i32_1 = arith.constant 0 : i32
    return %c0_i32, %c0_i32_0 : i32, i32
  }
  func.func @transform_10(%arg0: i32) -> (i32, i32) {
    %c0_i32 = arith.constant 0 : i32
    %c0_i32_0 = arith.constant 0 : i32
    %c0_i32_1 = arith.constant 0 : i32
    return %c0_i32, %c0_i32_0 : i32, i32
  }
  func.func @transform_11(%arg0: i32) -> (i32, i32) {
    %c0_i32 = arith.constant 0 : i32
    %c0_i32_0 = arith.constant 0 : i32
    %c0_i32_1 = arith.constant 0 : i32
    return %c0_i32, %c0_i32_0 : i32, i32
  }
  func.func @transform_12(%arg0: i32) -> (i32, i32) {
    %c0_i32 = arith.constant 0 : i32
    %c0_i32_0 = arith.constant 0 : i32
    %c0_i32_1 = arith.constant 0 : i32
    return %c0_i32, %c0_i32_0 : i32, i32
  }
  func.func @transform_13(%arg0: i32) -> (i32, i32) {
    %c0_i32 = arith.constant 0 : i32
    %c0_i32_0 = arith.constant 0 : i32
    %c0_i32_1 = arith.constant 0 : i32
    return %c0_i32, %c0_i32_0 : i32, i32
  }
  func.func @transform_14(%arg0: i32) -> (i32, i32) {
    %c0_i32 = arith.constant 0 : i32
    %c0_i32_0 = arith.constant 0 : i32
    return %arg0, %c0_i32 : i32, i32
  }
  func.func @transform_15(%arg0: i32) -> (i32, i32) {
    %c0_i32 = arith.constant 0 : i32
    %c0_i32_0 = arith.constant 0 : i32
    return %arg0, %c0_i32 : i32, i32
  }
}

</mosaic_0001>

<llo_original>
// kernel: tpu_custom_call.1
$region0: #{tpu_custom_call.1}
  #allocation0 [shape = 'u32[]', space=smem, size = 0x4, offset = 0x4, fixed_abs, tag = 'smem constant byte address 0x4 - core index']
  #allocation1 [shape = 'u32[144,128]{1,0:T(1,128)}', space=vmem, size = 0x12000, scoped, tag = 'internal scratch']
  %s0 = inlined_call_operand.vmem [shape: f32[512,64], index: 0, kind: input, shape index: {}]
  %s1 = inlined_call_operand.vmem [shape: f32[512,128], index: 1, kind: input, shape index: {}]
  %s2 = inlined_call_operand.vmem [shape: bf16[64,512], index: 2, kind: input, shape index: {}]
  %s3 = inlined_call_operand.hbm [shape: f32[1,512], index: 3, kind: input, shape index: {}]
  %s4 = inlined_call_operand.hbm [shape: bf16[512,256], index: 4, kind: input, shape index: {}]
  %s5 = inlined_call_operand.vmem [shape: f32[1,256], index: 5, kind: input, shape index: {}]
  %s6 = inlined_call_operand.vmem [shape: bf16[256,256], index: 6, kind: input, shape index: {}]
  %s7 = inlined_call_operand.vmem [shape: f32[1,256], index: 7, kind: input, shape index: {}]
  %s8 = inlined_call_operand.hbm [shape: bf16[128,256], index: 8, kind: input, shape index: {}]
  %s9 = inlined_call_operand.vmem [shape: f32[1,256], index: 9, kind: input, shape index: {}]
  %s10 = inlined_call_operand.hbm [shape: bf16[256,512], index: 10, kind: input, shape index: {}]
  %s11 = inlined_call_operand.vmem [shape: f32[1,512], index: 11, kind: input, shape index: {}]
  %s12 = inlined_call_operand.vmem [shape: bf16[512,64], index: 12, kind: input, shape index: {}]
  %s13 = inlined_call_operand.vmem [shape: f32[1,64], index: 13, kind: input, shape index: {}]
  %s14 = inlined_call_operand.vmem [shape: f32[512,64], index: 14, kind: output, shape index: {0}]
  %s15 = inlined_call_operand.hbm [shape: f32[512,256], index: 15, kind: output, shape index: {1}]
  %16 = xla_tuple %s14, %s15
  %s17 = sld [smem:[#allocation0]]
  $region113: #{tpu_custom_call.1} parent=0
    _
  %s19 = ssub.s32 1, %s17
  %s20 = scalar_select 0, %s19, %s17
  $region1: #{tpu_custom_call.1} parent=0
    #allocation2 [shape = 'u8[2048]{0}', space=vmem, size = 0x800, scoped, tag = 'input window, operand 3, single buffered']
    #allocation3 [shape = 's32[2]{0}', space=sflag, size = 0x8, scoped, tag = 'scoped memory for tpu_custom_call.1']
    #allocation4 [shape = 's32[2]{0}', space=sflag, size = 0x8, scoped, tag = 'scoped memory for tpu_custom_call.1']
    #allocation5 [shape = 'u8[262144]{0}', space=vmem, size = 0x40000, scoped, tag = 'input window, operand 4, single buffered']
    #allocation6 [shape = 's32[1]{0}', space=sflag, size = 0x4, scoped, tag = 'scoped memory for tpu_custom_call.1']
    #allocation7 [shape = 'u8[65536]{0}', space=vmem, size = 0x10000, scoped, tag = 'input window, operand 8, single buffered']
    #allocation8 [shape = 'u8[262144]{0}', space=vmem, size = 0x40000, scoped, tag = 'input window, operand 10, single buffered']
    #allocation9 [shape = 's32[1]{0}', space=sflag, size = 0x4, scoped, tag = 'scoped memory for tpu_custom_call.1']
    #allocation10 [shape = 'u8[524288]{0}', space=vmem, size = 0x80000, scoped, tag = 'output window, operand 1']
    %21 = vsyncpa [#allocation3], 0
    %22 = vsyncpa [#allocation6], 0
    %23 = vsyncpa [#allocation9], 0
    %24 = vsyncpa [#allocation4], 0
    %s25 = scalar_lea.sflag [#allocation4], 1
    %26 = vsyncpa %s25, 0
    loop: start=0, step=1, limit=4
    $region2: #{tpu_custom_call.1} parent=1 // loop_pre_header
      _
    $region3: #{tpu_custom_call.1} parent=1 // loop_header
      %s28 = sphi 0, %s32
      %p29 = scmp.ge.s32.totalorder %s28, 4
      %s38 = sphi 0, %s40
      %s41 = sphi 0, %s38
      %s42 = sphi 0, %s41
      %s58 = sphi 0, %s42
      %s64 = sphi 0, %s66
      %s67 = sphi 0, %s64
      %s68 = sphi 0, %s67
      %s84 = sphi 0, %s68
      %s88 = sphi 0, %s88
      %s90 = sphi 0, %s88
      %s91 = sphi 0, %s90
      %s105 = sphi 0, %s91
      %s109 = sphi 0, %s109
      %s111 = sphi 0, %s109
      %s112 = sphi 0, %s111
      %s126 = sphi 0, %s112
      %s130 = sphi 0, %s130
      %s132 = sphi 0, %s130
      %s133 = sphi 0, %s132
      %s147 = sphi 0, %s133
      %s151 = sphi 0, %s151
      %s153 = sphi 0, %s151
      %s154 = sphi 0, %s153
      %s168 = sphi 0, %s154
      %s172 = sphi 0, %s172
      %s174 = sphi 0, %s172
      %s175 = sphi 0, %s174
      %s189 = sphi 0, %s175
      %s193 = sphi 0, %s193
      %s195 = sphi 0, %s193
      %s196 = sphi 0, %s195
      %s210 = sphi 0, %s196
      %s214 = sphi 0, %s214
      %s216 = sphi 0, %s214
      %s217 = sphi 0, %s216
      %s231 = sphi 0, %s217
      %s235 = sphi 0, %s235
      %s237 = sphi 0, %s235
      %s238 = sphi 0, %s237
      %s252 = sphi 0, %s238
      %s256 = sphi 0, %s256
      %s258 = sphi 0, %s256
      %s259 = sphi 0, %s258
      %s273 = sphi 0, %s259
      %s277 = sphi 0, %s277
      %s279 = sphi 0, %s277
      %s280 = sphi 0, %s279
      %s294 = sphi 0, %s280
      %s298 = sphi 0, %s298
      %s300 = sphi 0, %s298
      %s301 = sphi 0, %s300
      %s315 = sphi 0, %s301
      %s319 = sphi 0, %s319
      %s321 = sphi 0, %s319
      %s322 = sphi 0, %s321
      %s336 = sphi 0, %s322
      %s342 = sphi 0, %s344
      %s345 = sphi 0, %s342
      %s346 = sphi 0, %s345
      %s362 = sphi 0, %s346
      %s368 = sphi 0, %s370
      %s371 = sphi 0, %s368
      %s372 = sphi 0, %s371
      %s388 = sphi 0, %s372
    $region4: #{tpu_custom_call.1} parent=1 // loop_header_branch
      %31 = sbr.rel (%p29) target = $region8
    $region5: #{tpu_custom_call.1} parent=1 // loop_body
      %s33 = ssub.s32 %s28, 1
      %s34 = ssub.s32 %s28, 2
      %s35 = sadd.s32 %s28, 1
      %s36 = ssub.s32 %s28, %s35
      %p37 = scmp.eq.s32.totalorder %s36, 0
      %s39 = sadd.s32 %s38, 1
      %s40 = scalar_select %p37, %s38, %s39
      %p43 = pneg %p37
      %p44 = scmp.eq.s32.totalorder %s28, 1
      %p45 = por %p43, %p44
      %p46 = scmp.ne.s32.totalorder %s38, %s41
      %p47 = scmp.eq.s32.totalorder %s28, 0
      %p48 = por %p46, %p47
      %p49 = scmp.ne.s32.totalorder %s38, %s41
      %p50 = scmp.eq.s32.totalorder %s33, 1
      %p51 = por %p49, %p50
      %p52 = scmp.ne.s32.totalorder %s41, %s42
      %p53 = scmp.eq.s32.totalorder %s33, 0
      %p54 = por %p52, %p53
      %p55 = scmp.ne.s32.totalorder %s41, %s42
      %p56 = scmp.eq.s32.totalorder %s34, 1
      %p57 = por %p55, %p56
      %p59 = scmp.ne.s32.totalorder %s42, %s58
      %p60 = scmp.eq.s32.totalorder %s34, 0
      %p61 = por %p59, %p60
      %s62 = ssub.s32 %s28, %s35
      %p63 = scmp.eq.s32.totalorder %s62, 0
      %s65 = sadd.s32 %s64, 1
      %s66 = scalar_select %p63, %s64, %s65
      %p69 = pneg %p63
      %p70 = scmp.eq.s32.totalorder %s28, 1
      %p71 = por %p69, %p70
      %p72 = scmp.ne.s32.totalorder %s64, %s67
      %p73 = scmp.eq.s32.totalorder %s28, 0
      %p74 = por %p72, %p73
      %p75 = scmp.ne.s32.totalorder %s64, %s67
      %p76 = scmp.eq.s32.totalorder %s33, 1
      %p77 = por %p75, %p76
      %p78 = scmp.ne.s32.totalorder %s67, %s68
      %p79 = scmp.eq.s32.totalorder %s33, 0
      %p80 = por %p78, %p79
      %p81 = scmp.ne.s32.totalorder %s67, %s68
      %p82 = scmp.eq.s32.totalorder %s34, 1
      %p83 = por %p81, %p82
      %p85 = scmp.ne.s32.totalorder %s68, %s84
      %p86 = scmp.eq.s32.totalorder %s34, 0
      %p87 = por %p85, %p86
      %s89 = sadd.s32 %s88, 1
      %p92 = scmp.eq.s32.totalorder %s28, 1
      %p93 = scmp.ne.s32.totalorder %s88, %s90
      %p94 = scmp.eq.s32.totalorder %s28, 0
      %p95 = por %p93, %p94
      %p96 = scmp.ne.s32.totalorder %s88, %s90
      %p97 = scmp.eq.s32.totalorder %s33, 1
      %p98 = por %p96, %p97
      %p99 = scmp.ne.s32.totalorder %s90, %s91
      %p100 = scmp.eq.s32.totalorder %s33, 0
      %p101 = por %p99, %p100
      %p102 = scmp.ne.s32.totalorder %s90, %s91
      %p103 = scmp.eq.s32.totalorder %s34, 1
      %p104 = por %p102, %p103
      %p106 = scmp.ne.s32.totalorder %s91, %s105
      %p107 = scmp.eq.s32.totalorder %s34, 0
      %p108 = por %p106, %p107
      %s110 = sadd.s32 %s109, 1
      %p113 = scmp.eq.s32.totalorder %s28, 1
      %p114 = scmp.ne.s32.totalorder %s109, %s111
      %p115 = scmp.eq.s32.totalorder %s28, 0
      %p116 = por %p114, %p115
      %p117 = scmp.ne.s32.totalorder %s109, %s111
      %p118 = scmp.eq.s32.totalorder %s33, 1
      %p119 = por %p117, %p118
      %p120 = scmp.ne.s32.totalorder %s111, %s112
      %p121 = scmp.eq.s32.totalorder %s33, 0
      %p122 = por %p120, %p121
      %p123 = scmp.ne.s32.totalorder %s111, %s112
      %p124 = scmp.eq.s32.totalorder %s34, 1
      %p125 = por %p123, %p124
      %p127 = scmp.ne.s32.totalorder %s112, %s126
      %p128 = scmp.eq.s32.totalorder %s34, 0
      %p129 = por %p127, %p128
      %s131 = sadd.s32 %s130, 1
      %p134 = scmp.eq.s32.totalorder %s28, 1
      %p135 = scmp.ne.s32.totalorder %s130, %s132
      %p136 = scmp.eq.s32.totalorder %s28, 0
      %p137 = por %p135, %p136
      %p138 = scmp.ne.s32.totalorder %s130, %s132
      %p139 = scmp.eq.s32.totalorder %s33, 1
      %p140 = por %p138, %p139
      %p141 = scmp.ne.s32.totalorder %s132, %s133
      %p142 = scmp.eq.s32.totalorder %s33, 0
      %p143 = por %p141, %p142
      %p144 = scmp.ne.s32.totalorder %s132, %s133
      %p145 = scmp.eq.s32.totalorder %s34, 1
      %p146 = por %p144, %p145
      %p148 = scmp.ne.s32.totalorder %s133, %s147
      %p149 = scmp.eq.s32.totalorder %s34, 0
      %p150 = por %p148, %p149
      %s152 = sadd.s32 %s151, 1
      %p155 = scmp.eq.s32.totalorder %s28, 1
      %p156 = scmp.ne.s32.totalorder %s151, %s153
      %p157 = scmp.eq.s32.totalorder %s28, 0
      %p158 = por %p156, %p157
      %p159 = scmp.ne.s32.totalorder %s151, %s153
      %p160 = scmp.eq.s32.totalorder %s33, 1
      %p161 = por %p159, %p160
      %p162 = scmp.ne.s32.totalorder %s153, %s154
      %p163 = scmp.eq.s32.totalorder %s33, 0
      %p164 = por %p162, %p163
      %p165 = scmp.ne.s32.totalorder %s153, %s154
      %p166 = scmp.eq.s32.totalorder %s34, 1
      %p167 = por %p165, %p166
      %p169 = scmp.ne.s32.totalorder %s154, %s168
      %p170 = scmp.eq.s32.totalorder %s34, 0
      %p171 = por %p169, %p170
      %s173 = sadd.s32 %s172, 1
      %p176 = scmp.eq.s32.totalorder %s28, 1
      %p177 = scmp.ne.s32.totalorder %s172, %s174
      %p178 = scmp.eq.s32.totalorder %s28, 0
      %p179 = por %p177, %p178
      %p180 = scmp.ne.s32.totalorder %s172, %s174
      %p181 = scmp.eq.s32.totalorder %s33, 1
      %p182 = por %p180, %p181
      %p183 = scmp.ne.s32.totalorder %s174, %s175
      %p184 = scmp.eq.s32.totalorder %s33, 0
      %p185 = por %p183, %p184
      %p186 = scmp.ne.s32.totalorder %s174, %s175
      %p187 = scmp.eq.s32.totalorder %s34, 1
      %p188 = por %p186, %p187
      %p190 = scmp.ne.s32.totalorder %s175, %s189
      %p191 = scmp.eq.s32.totalorder %s34, 0
      %p192 = por %p190, %p191
      %s194 = sadd.s32 %s193, 1
      %p197 = scmp.eq.s32.totalorder %s28, 1
      %p198 = scmp.ne.s32.totalorder %s193, %s195
      %p199 = scmp.eq.s32.totalorder %s28, 0
      %p200 = por %p198, %p199
      %p201 = scmp.ne.s32.totalorder %s193, %s195
      %p202 = scmp.eq.s32.totalorder %s33, 1
      %p203 = por %p201, %p202
      %p204 = scmp.ne.s32.totalorder %s195, %s196
      %p205 = scmp.eq.s32.totalorder %s33, 0
      %p206 = por %p204, %p205
      %p207 = scmp.ne.s32.totalorder %s195, %s196
      %p208 = scmp.eq.s32.totalorder %s34, 1
      %p209 = por %p207, %p208
      %p211 = scmp.ne.s32.totalorder %s196, %s210
      %p212 = scmp.eq.s32.totalorder %s34, 0
      %p213 = por %p211, %p212
      %s215 = sadd.s32 %s214, 1
      %p218 = scmp.eq.s32.totalorder %s28, 1
      %p219 = scmp.ne.s32.totalorder %s214, %s216
      %p220 = scmp.eq.s32.totalorder %s28, 0
      %p221 = por %p219, %p220
      %p222 = scmp.ne.s32.totalorder %s214, %s216
      %p223 = scmp.eq.s32.totalorder %s33, 1
      %p224 = por %p222, %p223
      %p225 = scmp.ne.s32.totalorder %s216, %s217
      %p226 = scmp.eq.s32.totalorder %s33, 0
      %p227 = por %p225, %p226
      %p228 = scmp.ne.s32.totalorder %s216, %s217
      %p229 = scmp.eq.s32.totalorder %s34, 1
      %p230 = por %p228, %p229
      %p232 = scmp.ne.s32.totalorder %s217, %s231
      %p233 = scmp.eq.s32.totalorder %s34, 0
      %p234 = por %p232, %p233
      %s236 = sadd.s32 %s235, 1
      %p239 = scmp.eq.s32.totalorder %s28, 1
      %p240 = scmp.ne.s32.totalorder %s235, %s237
      %p241 = scmp.eq.s32.totalorder %s28, 0
      %p242 = por %p240, %p241
      %p243 = scmp.ne.s32.totalorder %s235, %s237
      %p244 = scmp.eq.s32.totalorder %s33, 1
      %p245 = por %p243, %p244
      %p246 = scmp.ne.s32.totalorder %s237, %s238
      %p247 = scmp.eq.s32.totalorder %s33, 0
      %p248 = por %p246, %p247
      %p249 = scmp.ne.s32.totalorder %s237, %s238
      %p250 = scmp.eq.s32.totalorder %s34, 1
      %p251 = por %p249, %p250
      %p253 = scmp.ne.s32.totalorder %s238, %s252
      %p254 = scmp.eq.s32.totalorder %s34, 0
      %p255 = por %p253, %p254
      %s257 = sadd.s32 %s256, 1
      %p260 = scmp.eq.s32.totalorder %s28, 1
      %p261 = scmp.ne.s32.totalorder %s256, %s258
      %p262 = scmp.eq.s32.totalorder %s28, 0
      %p263 = por %p261, %p262
      %p264 = scmp.ne.s32.totalorder %s256, %s258
      %p265 = scmp.eq.s32.totalorder %s33, 1
      %p266 = por %p264, %p265
      %p267 = scmp.ne.s32.totalorder %s258, %s259
      %p268 = scmp.eq.s32.totalorder %s33, 0
      %p269 = por %p267, %p268
      %p270 = scmp.ne.s32.totalorder %s258, %s259
      %p271 = scmp.eq.s32.totalorder %s34, 1
      %p272 = por %p270, %p271
      %p274 = scmp.ne.s32.totalorder %s259, %s273
      %p275 = scmp.eq.s32.totalorder %s34, 0
      %p276 = por %p274, %p275
      %s278 = sadd.s32 %s277, 1
      %p281 = scmp.eq.s32.totalorder %s28, 1
      %p282 = scmp.ne.s32.totalorder %s277, %s279
      %p283 = scmp.eq.s32.totalorder %s28, 0
      %p284 = por %p282, %p283
      %p285 = scmp.ne.s32.totalorder %s277, %s279
      %p286 = scmp.eq.s32.totalorder %s33, 1
      %p287 = por %p285, %p286
      %p288 = scmp.ne.s32.totalorder %s279, %s280
      %p289 = scmp.eq.s32.totalorder %s33, 0
      %p290 = por %p288, %p289
      %p291 = scmp.ne.s32.totalorder %s279, %s280
      %p292 = scmp.eq.s32.totalorder %s34, 1
      %p293 = por %p291, %p292
      %p295 = scmp.ne.s32.totalorder %s280, %s294
      %p296 = scmp.eq.s32.totalorder %s34, 0
      %p297 = por %p295, %p296
      %s299 = sadd.s32 %s298, 1
      %p302 = scmp.eq.s32.totalorder %s28, 1
      %p303 = scmp.ne.s32.totalorder %s298, %s300
      %p304 = scmp.eq.s32.totalorder %s28, 0
      %p305 = por %p303, %p304
      %p306 = scmp.ne.s32.totalorder %s298, %s300
      %p307 = scmp.eq.s32.totalorder %s33, 1
      %p308 = por %p306, %p307
      %p309 = scmp.ne.s32.totalorder %s300, %s301
      %p310 = scmp.eq.s32.totalorder %s33, 0
      %p311 = por %p309, %p310
      %p312 = scmp.ne.s32.totalorder %s300, %s301
      %p313 = scmp.eq.s32.totalorder %s34, 1
      %p314 = por %p312, %p313
      %p316 = scmp.ne.s32.totalorder %s301, %s315
      %p317 = scmp.eq.s32.totalorder %s34, 0
      %p318 = por %p316, %p317
      %s320 = sadd.s32 %s319, 1
      %p323 = scmp.eq.s32.totalorder %s28, 1
      %p324 = scmp.ne.s32.totalorder %s319, %s321
      %p325 = scmp.eq.s32.totalorder %s28, 0
      %p326 = por %p324, %p325
      %p327 = scmp.ne.s32.totalorder %s319, %s321
      %p328 = scmp.eq.s32.totalorder %s33, 1
      %p329 = por %p327, %p328
      %p330 = scmp.ne.s32.totalorder %s321, %s322
      %p331 = scmp.eq.s32.totalorder %s33, 0
      %p332 = por %p330, %p331
      %p333 = scmp.ne.s32.totalorder %s321, %s322
      %p334 = scmp.eq.s32.totalorder %s34, 1
      %p335 = por %p333, %p334
      %p337 = scmp.ne.s32.totalorder %s322, %s336
      %p338 = scmp.eq.s32.totalorder %s34, 0
      %p339 = por %p337, %p338
      %s340 = ssub.s32 %s28, %s35
      %p341 = scmp.eq.s32.totalorder %s340, 0
      %s343 = sadd.s32 %s342, 1
      %s344 = scalar_select %p341, %s342, %s343
      %p347 = pneg %p341
      %p348 = scmp.eq.s32.totalorder %s28, 1
      %p349 = por %p347, %p348
      %p350 = scmp.ne.s32.totalorder %s342, %s345
      %p351 = scmp.eq.s32.totalorder %s28, 0
      %p352 = por %p350, %p351
      %p353 = scmp.ne.s32.totalorder %s342, %s345
      %p354 = scmp.eq.s32.totalorder %s33, 1
      %p355 = por %p353, %p354
      %p356 = scmp.ne.s32.totalorder %s345, %s346
      %p357 = scmp.eq.s32.totalorder %s33, 0
      %p358 = por %p356, %p357
      %p359 = scmp.ne.s32.totalorder %s345, %s346
      %p360 = scmp.eq.s32.totalorder %s34, 1
      %p361 = por %p359, %p360
      %p363 = scmp.ne.s32.totalorder %s346, %s362
      %p364 = scmp.eq.s32.totalorder %s34, 0
      %p365 = por %p363, %p364
      %s366 = ssub.s32 %s28, %s35
      %p367 = scmp.eq.s32.totalorder %s366, 0
      %s369 = sadd.s32 %s368, 1
      %s370 = scalar_select %p367, %s368, %s369
      %p373 = pneg %p367
      %p374 = scmp.eq.s32.totalorder %s28, 1
      %p375 = por %p373, %p374
      %p376 = scmp.ne.s32.totalorder %s368, %s371
      %p377 = scmp.eq.s32.totalorder %s28, 0
      %p378 = por %p376, %p377
      %p379 = scmp.ne.s32.totalorder %s368, %s371
      %p380 = scmp.eq.s32.totalorder %s33, 1
      %p381 = por %p379, %p380
      %p382 = scmp.ne.s32.totalorder %s371, %s372
      %p383 = scmp.eq.s32.totalorder %s33, 0
      %p384 = por %p382, %p383
      %p385 = scmp.ne.s32.totalorder %s371, %s372
      %p386 = scmp.eq.s32.totalorder %s34, 1
      %p387 = por %p385, %p386
      %p389 = scmp.ne.s32.totalorder %s372, %s388
      %p390 = scmp.eq.s32.totalorder %s34, 0
      %p391 = por %p389, %p390
      %p392 = scmp.le.s32.totalorder 1, %s28
      %p393 = scmp.lt.s32.totalorder %s28, 3
      %p394 = pnand %p392, %p393
      %p395 = pneg %p394
      // Predicated region
      $region9: #{tpu_custom_call.1} parent=5 // pred_check
        _
      $region10: #{tpu_custom_call.1} parent=5 // pred_check_branch
        %397 = sbr.rel (%p394) target = $region12
      $region11: #{tpu_custom_call.1} parent=5 // pred_region
        %s398 = ssub.s32 %s28, 1
        // Predicated region
        $region13: #{tpu_custom_call.1} parent=11 // pred_check
          %p399 = pneg %p101
        $region14: #{tpu_custom_call.1} parent=11 // pred_check_branch
          %401 = sbr.rel (%p399) target = $region16
        $region15: #{tpu_custom_call.1} parent=11 // pred_region
          _
        $region16: #{tpu_custom_call.1} parent=11 // pred_fallthru
          _
        // Predicated region
        $region17: #{tpu_custom_call.1} parent=11 // pred_check
          %p402 = pneg %p122
        $region18: #{tpu_custom_call.1} parent=11 // pred_check_branch
          %404 = sbr.rel (%p402) target = $region20
        $region19: #{tpu_custom_call.1} parent=11 // pred_region
          %s406 = ssub.s32 64, 64
          %407 = vsyncadd [#allocation3], %s406
          %s409 = sshll.u32 [#allocation2], 4
          %s410 = int_to_ptr.vmem [resolvable:$true] %s409
          %412 = dma.hbm_to_vmem [thread:$0]  %s3, 64, %s410, [#allocation3]
        $region20: #{tpu_custom_call.1} parent=11 // pred_fallthru
          _
        // Predicated region
        $region21: #{tpu_custom_call.1} parent=11 // pred_check
          %p413 = pneg %p143
        $region22: #{tpu_custom_call.1} parent=11 // pred_check_branch
          %415 = sbr.rel (%p413) target = $region24
        $region23: #{tpu_custom_call.1} parent=11 // pred_region
          %s417 = ssub.s32 8192, 8192
          %418 = vsyncadd [#allocation6], %s417
          %s419 = sshll.u32 [#allocation5], 4
          %s420 = int_to_ptr.vmem [resolvable:$true] %s419
          %425 = dma.hbm_to_vmem [thread:$0]  %s4, 8192, %s420, [#allocation6], 128, 128, 8
        $region24: #{tpu_custom_call.1} parent=11 // pred_fallthru
          _
        // Predicated region
        $region25: #{tpu_custom_call.1} parent=11 // pred_check
          %p426 = pneg %p164
        $region26: #{tpu_custom_call.1} parent=11 // pred_check_branch
          %428 = sbr.rel (%p426) target = $region28
        $region27: #{tpu_custom_call.1} parent=11 // pred_region
          _
        $region28: #{tpu_custom_call.1} parent=11 // pred_fallthru
          _
        // Predicated region
        $region29: #{tpu_custom_call.1} parent=11 // pred_check
          %p429 = pneg %p185
        $region30: #{tpu_custom_call.1} parent=11 // pred_check_branch
          %431 = sbr.rel (%p429) target = $region32
        $region31: #{tpu_custom_call.1} parent=11 // pred_region
          _
        $region32: #{tpu_custom_call.1} parent=11 // pred_fallthru
          _
        // Predicated region
        $region33: #{tpu_custom_call.1} parent=11 // pred_check
          %p432 = pneg %p206
        $region34: #{tpu_custom_call.1} parent=11 // pred_check_branch
          %434 = sbr.rel (%p432) target = $region36
        $region35: #{tpu_custom_call.1} parent=11 // pred_region
          _
        $region36: #{tpu_custom_call.1} parent=11 // pred_fallthru
          _
        // Predicated region
        $region37: #{tpu_custom_call.1} parent=11 // pred_check
          %p435 = pneg %p227
        $region38: #{tpu_custom_call.1} parent=11 // pred_check_branch
          %437 = sbr.rel (%p435) target = $region40
        $region39: #{tpu_custom_call.1} parent=11 // pred_region
          %s439 = ssub.s32 2048, 2048
          %440 = vsyncadd [#allocation6], %s439
          %s441 = sshll.u32 [#allocation7], 4
          %s442 = int_to_ptr.vmem [resolvable:$true] %s441
          %447 = dma.hbm_to_vmem [thread:$0]  %s8, 2048, %s442, [#allocation6], 128, 128, 8
        $region40: #{tpu_custom_call.1} parent=11 // pred_fallthru
          _
        // Predicated region
        $region41: #{tpu_custom_call.1} parent=11 // pred_check
          %p448 = pneg %p248
        $region42: #{tpu_custom_call.1} parent=11 // pred_check_branch
          %450 = sbr.rel (%p448) target = $region44
        $region43: #{tpu_custom_call.1} parent=11 // pred_region
          _
        $region44: #{tpu_custom_call.1} parent=11 // pred_fallthru
          _
        // Predicated region
        $region45: #{tpu_custom_call.1} parent=11 // pred_check
          %p451 = pneg %p269
        $region46: #{tpu_custom_call.1} parent=11 // pred_check_branch
          %453 = sbr.rel (%p451) target = $region48
        $region47: #{tpu_custom_call.1} parent=11 // pred_region
          %s455 = ssub.s32 8192, 8192
          %456 = vsyncadd [#allocation9], %s455
          %s457 = sshll.u32 [#allocation8], 4
          %s458 = int_to_ptr.vmem [resolvable:$true] %s457
          %463 = dma.hbm_to_vmem [thread:$0]  %s10, 8192, %s458, [#allocation9], 256, 256, 16
        $region48: #{tpu_custom_call.1} parent=11 // pred_fallthru
          _
        // Predicated region
        $region49: #{tpu_custom_call.1} parent=11 // pred_check
          %p464 = pneg %p290
        $region50: #{tpu_custom_call.1} parent=11 // pred_check_branch
          %466 = sbr.rel (%p464) target = $region52
        $region51: #{tpu_custom_call.1} parent=11 // pred_region
          _
        $region52: #{tpu_custom_call.1} parent=11 // pred_fallthru
          _
        // Predicated region
        $region53: #{tpu_custom_call.1} parent=11 // pred_check
          %p467 = pneg %p311
        $region54: #{tpu_custom_call.1} parent=11 // pred_check_branch
          %469 = sbr.rel (%p467) target = $region56
        $region55: #{tpu_custom_call.1} parent=11 // pred_region
          _
        $region56: #{tpu_custom_call.1} parent=11 // pred_fallthru
          _
        // Predicated region
        $region57: #{tpu_custom_call.1} parent=11 // pred_check
          %p470 = pneg %p332
        $region58: #{tpu_custom_call.1} parent=11 // pred_check_branch
          %472 = sbr.rel (%p470) target = $region60
        $region59: #{tpu_custom_call.1} parent=11 // pred_region
          _
        $region60: #{tpu_custom_call.1} parent=11 // pred_fallthru
          _
      $region12: #{tpu_custom_call.1} parent=5 // pred_fallthru
        _
      %p473 = scmp.lt.s32.totalorder %s28, 2
      // Predicated region
      $region61: #{tpu_custom_call.1} parent=5 // pred_check
        %p474 = pneg %p473
      $region62: #{tpu_custom_call.1} parent=5 // pred_check_branch
        %476 = sbr.rel (%p474) target = $region64
      $region63: #{tpu_custom_call.1} parent=5 // pred_region
        // Predicated region
        $region65: #{tpu_custom_call.1} parent=63 // pred_check
          %p477 = pneg %p48
        $region66: #{tpu_custom_call.1} parent=63 // pred_check_branch
          %479 = sbr.rel (%p477) target = $region68
        $region67: #{tpu_custom_call.1} parent=63 // pred_region
          %s480 = smul.u32 32, %s28
          %p481 = scmp.lt.s32.totalorder %s480, 63
          %s482 = scalar_select %p481, %s480, 63
          %s483 = smul.addr %s482, 8
          %s484 = scalar_lea.vmem %s0, %s483
          %s485 = smul.u32 32, %s28
        $region68: #{tpu_custom_call.1} parent=63 // pred_fallthru
          _
        // Predicated region
        $region69: #{tpu_custom_call.1} parent=63 // pred_check
          %p486 = pneg %p74
        $region70: #{tpu_custom_call.1} parent=63 // pred_check_branch
          %488 = sbr.rel (%p486) target = $region72
        $region71: #{tpu_custom_call.1} parent=63 // pred_region
          %s489 = smul.u32 32, %s28
          %p490 = scmp.lt.s32.totalorder %s489, 63
          %s491 = scalar_select %p490, %s489, 63
          %s492 = smul.addr %s491, 8
          %s493 = scalar_lea.vmem %s1, %s492
          %s494 = smul.u32 32, %s28
        $region72: #{tpu_custom_call.1} parent=63 // pred_fallthru
          _
      $region64: #{tpu_custom_call.1} parent=5 // pred_fallthru
        _
      %p495 = scmp.le.s32.totalorder 1, %s28
      %p496 = scmp.lt.s32.totalorder %s28, 3
      %p497 = pnand %p495, %p496
      %p498 = pneg %p497
      // Predicated region
      $region73: #{tpu_custom_call.1} parent=5 // pred_check
        _
      $region74: #{tpu_custom_call.1} parent=5 // pred_check_branch
        %500 = sbr.rel (%p497) target = $region76
      $region75: #{tpu_custom_call.1} parent=5 // pred_region
        %s501 = ssub.s32 %s28, 1
        // Predicated region
        $region77: #{tpu_custom_call.1} parent=75 // pred_check
          %p502 = pneg %p122
        $region78: #{tpu_custom_call.1} parent=75 // pred_check_branch
          %504 = sbr.rel (%p502) target = $region80
        $region79: #{tpu_custom_call.1} parent=75 // pred_region
          %505 = dma.done [#allocation3], 64
        $region80: #{tpu_custom_call.1} parent=75 // pred_fallthru
          _
        // Predicated region
        $region81: #{tpu_custom_call.1} parent=75 // pred_check
          %p506 = pneg %p143
        $region82: #{tpu_custom_call.1} parent=75 // pred_check_branch
          %508 = sbr.rel (%p506) target = $region84
        $region83: #{tpu_custom_call.1} parent=75 // pred_region
          %509 = dma.done [#allocation6], 8192
        $region84: #{tpu_custom_call.1} parent=75 // pred_fallthru
          _
        // Predicated region
        $region85: #{tpu_custom_call.1} parent=75 // pred_check
          %p510 = pneg %p227
        $region86: #{tpu_custom_call.1} parent=75 // pred_check_branch
          %512 = sbr.rel (%p510) target = $region88
        $region87: #{tpu_custom_call.1} parent=75 // pred_region
          %513 = dma.done [#allocation6], 2048
        $region88: #{tpu_custom_call.1} parent=75 // pred_fallthru
          _
        // Predicated region
        $region89: #{tpu_custom_call.1} parent=75 // pred_check
          %p514 = pneg %p269
        $region90: #{tpu_custom_call.1} parent=75 // pred_check_branch
          %516 = sbr.rel (%p514) target = $region92
        $region91: #{tpu_custom_call.1} parent=75 // pred_region
          %517 = dma.done [#allocation9], 8192
        $region92: #{tpu_custom_call.1} parent=75 // pred_fallthru
          _
        %s518 = smul.u32 32, %s33
        %p519 = scmp.lt.s32.totalorder %s518, 63
        %s520 = scalar_select %p519, %s518, 63
        %s521 = smul.addr %s520, 8
        %s522 = scalar_lea.vmem %s0, %s521
        %p523 = pneg %p54
        %p524 = pneg %p51
        %s525 = smul.u32 32, %s33
        %p526 = scmp.lt.s32.totalorder %s525, 63
        %s527 = scalar_select %p526, %s525, 63
        %s528 = smul.addr %s527, 8
        %s529 = scalar_lea.vmem %s1, %s528
        %p530 = pneg %p80
        %p531 = pneg %p77
        %p532 = pneg %p101
        %p533 = pneg %p98
        %p534 = pneg %p122
        %p535 = pneg %p119
        %p536 = pneg %p143
        %p537 = pneg %p140
        %p538 = pneg %p164
        %p539 = pneg %p161
        %p540 = pneg %p185
        %p541 = pneg %p182
        %p542 = pneg %p206
        %p543 = pneg %p203
        %p544 = pneg %p227
        %p545 = pneg %p224
        %p546 = pneg %p248
        %p547 = pneg %p245
        %p548 = pneg %p269
        %p549 = pneg %p266
        %p550 = pneg %p290
        %p551 = pneg %p287
        %p552 = pneg %p311
        %p553 = pneg %p308
        %p554 = pneg %p332
        %p555 = pneg %p329
        %p556 = pneg %p358
        %p557 = pneg %p355
        %s558 = smul.u32 32, %s33
        %p559 = scmp.lt.s32.totalorder %s558, 63
        %s560 = scalar_select %p559, %s558, 63
        %s561 = smul.addr %s560, 8
        %s562 = scalar_lea.vmem %s14, %s561
        %p563 = pneg %p384
        %p564 = pneg %p381
        %s565 = sand.u32 %s371, 1
        %s566 = scalar_lea.sflag [#allocation4], %s565
        %s567 = sand.u32 %s371, 1
        %s568 = smul.addr %s567, 512
        %s569 = scalar_lea.vmem [#allocation10], %s568
        %s570 = smul.u32 32, %s33
        %p571 = scmp.lt.s32.totalorder %s570, 63
        %s572 = scalar_select %p571, %s570, 63
        %s573 = smul.addr %s572, 8
        %s574 = scalar_lea.vmem %s0, %s573
        %s575 = smul.u32 32, %s33
        %s576 = smul.u32 32, %s33
        %p577 = scmp.lt.s32.totalorder %s576, 63
        %s578 = scalar_select %p577, %s576, 63
        %s579 = smul.addr %s578, 8
        %s580 = scalar_lea.vmem %s1, %s579
        %s581 = smul.u32 32, %s33
        %s582 = smul.u32 32, %s33
        %p583 = scmp.lt.s32.totalorder %s582, 63
        %s584 = scalar_select %p583, %s582, 63
        %s585 = smul.addr %s584, 8
        %s586 = scalar_lea.vmem %s14, %s585
        %s587 = smul.u32 32, %s33
        %s588 = smul.u32 32, %s33
        %v590 = vld [vmem:[%s574] sm:$0xff]
        %v591 = vld [vmem:[%s574 + $0x8] sm:$0xff]
        %v592 = vld [vmem:[%s574 + $0x10] sm:$0xff]
        %v593 = vld [vmem:[%s574 + $0x18] sm:$0xff]
        %v594 = vld [vmem:[%s574 + $0x20] sm:$0xff]
        %v595 = vld [vmem:[%s574 + $0x28] sm:$0xff]
        %v596 = vld [vmem:[%s574 + $0x30] sm:$0xff]
        %v597 = vld [vmem:[%s574 + $0x38] sm:$0xff]
        %v598 = vld [vmem:[%s574 + $0x40] sm:$0xff]
        %v599 = vld [vmem:[%s574 + $0x48] sm:$0xff]
        %v600 = vld [vmem:[%s574 + $0x50] sm:$0xff]
        %v601 = vld [vmem:[%s574 + $0x58] sm:$0xff]
        %v602 = vld [vmem:[%s574 + $0x60] sm:$0xff]
        %v603 = vld [vmem:[%s574 + $0x68] sm:$0xff]
        %v604 = vld [vmem:[%s574 + $0x70] sm:$0xff]
        %v605 = vld [vmem:[%s574 + $0x78] sm:$0xff]
        %v606 = vld [vmem:[%s574 + $0x80] sm:$0xff]
        %v607 = vld [vmem:[%s574 + $0x88] sm:$0xff]
        %v608 = vld [vmem:[%s574 + $0x90] sm:$0xff]
        %v609 = vld [vmem:[%s574 + $0x98] sm:$0xff]
        %v610 = vld [vmem:[%s574 + $0xa0] sm:$0xff]
        %v611 = vld [vmem:[%s574 + $0xa8] sm:$0xff]
        %v612 = vld [vmem:[%s574 + $0xb0] sm:$0xff]
        %v613 = vld [vmem:[%s574 + $0xb8] sm:$0xff]
        %v614 = vld [vmem:[%s574 + $0xc0] sm:$0xff]
        %v615 = vld [vmem:[%s574 + $0xc8] sm:$0xff]
        %v616 = vld [vmem:[%s574 + $0xd0] sm:$0xff]
        %v617 = vld [vmem:[%s574 + $0xd8] sm:$0xff]
        %v618 = vld [vmem:[%s574 + $0xe0] sm:$0xff]
        %v619 = vld [vmem:[%s574 + $0xe8] sm:$0xff]
        %v620 = vld [vmem:[%s574 + $0xf0] sm:$0xff]
        %v621 = vld [vmem:[%s574 + $0xf8] sm:$0xff]
        %v622 = vpack.c.bf16 %v591, %v590
        %v623 = vpack.c.bf16 %v593, %v592
        %v624 = vpack.c.bf16 %v595, %v594
        %v625 = vpack.c.bf16 %v597, %v596
        %v626 = vpack.c.bf16 %v599, %v598
        %v627 = vpack.c.bf16 %v601, %v600
        %v628 = vpack.c.bf16 %v603, %v602
        %v629 = vpack.c.bf16 %v605, %v604
        %v630 = vpack.c.bf16 %v607, %v606
        %v631 = vpack.c.bf16 %v609, %v608
        %v632 = vpack.c.bf16 %v611, %v610
        %v633 = vpack.c.bf16 %v613, %v612
        %v634 = vpack.c.bf16 %v615, %v614
        %v635 = vpack.c.bf16 %v617, %v616
        %v636 = vpack.c.bf16 %v619, %v618
        %v637 = vpack.c.bf16 %v621, %v620
        %v638 = vld [vmem:[%s2] sm:$0xff]
        %v639 = vld [vmem:[%s2 + $0x8] sm:$0xff]
        %v640 = vld [vmem:[%s2 + $0x10] sm:$0xff]
        %v641 = vld [vmem:[%s2 + $0x18] sm:$0xff]
        %v642 = vld [vmem:[%s2 + $0x20] sm:$0xff]
        %v643 = vld [vmem:[%s2 + $0x28] sm:$0xff]
        %v644 = vld [vmem:[%s2 + $0x30] sm:$0xff]
        %v645 = vld [vmem:[%s2 + $0x38] sm:$0xff]
        %v646 = vld [vmem:[%s2 + $0x40] sm:$0xff]
        %v647 = vld [vmem:[%s2 + $0x48] sm:$0xff]
        %v648 = vld [vmem:[%s2 + $0x50] sm:$0xff]
        %v649 = vld [vmem:[%s2 + $0x58] sm:$0xff]
        %v650 = vld [vmem:[%s2 + $0x60] sm:$0xff]
        %v651 = vld [vmem:[%s2 + $0x68] sm:$0xff]
        %v652 = vld [vmem:[%s2 + $0x70] sm:$0xff]
        %v653 = vld [vmem:[%s2 + $0x78] sm:$0xff]
        %v654 = vld [vmem:[#allocation2] sm:$0xf]
        %v656 = vlaneseq
        %v657 = vshrl.u32 %v656, 7
        %v658 = vsub.s32 0, %v657
        %v659 = vrot.slane %v654, %v658
        %v660 = vlaneseq
        %v661 = vshrl.u32 %v660, 7
        %v662 = vsub.s32 1, %v661
        %v663 = vrot.slane %v654, %v662
        %v664 = vlaneseq
        %v665 = vshrl.u32 %v664, 7
        %v666 = vsub.s32 2, %v665
        %v667 = vrot.slane %v654, %v666
        %v668 = vlaneseq
        %v669 = vshrl.u32 %v668, 7
        %v670 = vsub.s32 3, %v669
        %v671 = vrot.slane %v654, %v670
        %v692 = vunpack.c.l.b16 %v638
        %v693 = vunpack.c.h.b16 %v638
        %v694 = vunpack.c.l.b16 %v639
        %v695 = vunpack.c.h.b16 %v639
        %v696 = vunpack.c.l.b16 %v640
        %v697 = vunpack.c.h.b16 %v640
        %v698 = vunpack.c.l.b16 %v641
        %v699 = vunpack.c.h.b16 %v641
        %v700 = vunpack.c.l.b16 %v642
        %v701 = vunpack.c.h.b16 %v642
        %v702 = vunpack.c.l.b16 %v643
        %v703 = vunpack.c.h.b16 %v643
        %v704 = vunpack.c.l.b16 %v644
        %v705 = vunpack.c.h.b16 %v644
        %v706 = vunpack.c.l.b16 %v645
        %v707 = vunpack.c.h.b16 %v645
        %v708 = vunpack.c.l.b16 %v646
        %v709 = vunpack.c.h.b16 %v646
        %v710 = vunpack.c.l.b16 %v647
        %v711 = vunpack.c.h.b16 %v647
        %v712 = vunpack.c.l.b16 %v648
        %v713 = vunpack.c.h.b16 %v648
        %v714 = vunpack.c.l.b16 %v649
        %v715 = vunpack.c.h.b16 %v649
        %v716 = vunpack.c.l.b16 %v650
        %v717 = vunpack.c.h.b16 %v650
        %v718 = vunpack.c.l.b16 %v651
        %v719 = vunpack.c.h.b16 %v651
        %v720 = vunpack.c.l.b16 %v652
        %v721 = vunpack.c.h.b16 %v652
        %v722 = vunpack.c.l.b16 %v653
        %v723 = vunpack.c.h.b16 %v653
        %v724 = vpack.c.b16 %v696, %v692
        %v725 = vpack.c.b16 %v697, %v693
        %v726 = vpack.c.b16 %v698, %v694
        %v727 = vpack.c.b16 %v699, %v695
        %v728 = vpack.c.b16 %v704, %v700
        %v729 = vpack.c.b16 %v705, %v701
        %v730 = vpack.c.b16 %v706, %v702
        %v731 = vpack.c.b16 %v707, %v703
        %v732 = vpack.c.b16 %v712, %v708
        %v733 = vpack.c.b16 %v713, %v709
        %v734 = vpack.c.b16 %v714, %v710
        %v735 = vpack.c.b16 %v715, %v711
        %v736 = vpack.c.b16 %v720, %v716
        %v737 = vpack.c.b16 %v721, %v717
        %v738 = vpack.c.b16 %v722, %v718
        %v739 = vpack.c.b16 %v723, %v719
        %vm756 = vcmask 523264
        %v758 = vsel %vm756, %v622, 0
        %v761 = vsel %vm756, %v623, 0
        %v764 = vsel %vm756, %v624, 0
        %v767 = vsel %vm756, %v625, 0
        %v770 = vsel %vm756, %v626, 0
        %v773 = vsel %vm756, %v627, 0
        %v776 = vsel %vm756, %v628, 0
        %v779 = vsel %vm756, %v629, 0
        %v782 = vsel %vm756, %v630, 0
        %v785 = vsel %vm756, %v631, 0
        %v788 = vsel %vm756, %v632, 0
        %v791 = vsel %vm756, %v633, 0
        %v794 = vsel %vm756, %v634, 0
        %v797 = vsel %vm756, %v635, 0
        %v800 = vsel %vm756, %v636, 0
        %v803 = vsel %vm756, %v637, 0
        %805 = vmatprep.subr.bf16.mxu0 %v725
        %806 = vmatpush1.bf16.msra.mxu0 %v724
        %807 = vmatprep.subr.bf16.mxu0 %v729
        %808 = vmatpush1.bf16.msra.mxu0 %v728
        %809 = vmatprep.subr.bf16.mxu0 %v733
        %810 = vmatpush1.bf16.msra.mxu0 %v732
        %811 = vmatprep.subr.bf16.mxu0 %v737
        %812 = vmatpush1.bf16.msra.mxu0 %v736
        %813 = vmatprep.subr.bf16.mxu0 0
        %814 = vmatpush1.bf16.msra.mxu0 0
        %815 = vmatprep.subr.bf16.mxu0 0
        %816 = vmatpush1.bf16.msra.mxu0 0
        %817 = vmatprep.subr.bf16.mxu0 0
        %818 = vmatpush1.bf16.msra.mxu0 0
        %819 = vmatprep.subr.bf16.mxu0 0
        %820 = vmatpush1.bf16.msra.mxu0 0
        %821 = vmatprep.subr.bf16.mxu0 0
        %822 = vmatpush1.bf16.msra.mxu0 0
        %823 = vmatprep.subr.bf16.mxu0 0
        %824 = vmatpush1.bf16.msra.mxu0 0
        %825 = vmatprep.subr.bf16.mxu0 0
        %826 = vmatpush1.bf16.msra.mxu0 0
        %827 = vmatprep.subr.bf16.mxu0 0
        %828 = vmatpush1.bf16.msra.mxu0 0
        %829 = vmatprep.subr.bf16.mxu0 0
        %830 = vmatpush1.bf16.msra.mxu0 0
        %831 = vmatprep.subr.bf16.mxu0 0
        %832 = vmatpush1.bf16.msra.mxu0 0
        %833 = vmatprep.subr.bf16.mxu0 0
        %834 = vmatpush1.bf16.msra.mxu0 0
        %835 = vmatprep.subr.bf16.mxu0 0
        %836 = vmatpush1.bf16.msra.mxu0 0
        %837 = vmatprep.mubr.bf16.mxu0 0
        %838 = vmatmul.mubr.bf16.gmra.mrb[0].mxu0 %v758
        %v839 = vpop.f32.mrb[0].mxu0
        %v840 = vadd.f32 %v659, %v839
        %v841 = vpop.f32.mrb[0].mxu0
        %v842 = vadd.f32 %v663, %v841
        %v843 = vpop.f32.mrb[0].mxu0
        %v844 = vadd.f32 %v659, %v843
        %v845 = vpop.f32.mrb[0].mxu0
        %v846 = vadd.f32 %v663, %v845
        %847 = vmatprep.mubr.bf16.mxu0 0
        %848 = vmatmul.mubr.bf16.gmra.mrb[0].mxu0 %v761
        %v849 = vpop.f32.mrb[0].mxu0
        %v850 = vadd.f32 %v659, %v849
        %v851 = vpop.f32.mrb[0].mxu0
        %v852 = vadd.f32 %v663, %v851
        %v853 = vpop.f32.mrb[0].mxu0
        %v854 = vadd.f32 %v659, %v853
        %v855 = vpop.f32.mrb[0].mxu0
        %v856 = vadd.f32 %v663, %v855
        %857 = vmatprep.mubr.bf16.mxu0 0
        %858 = vmatmul.mubr.bf16.gmra.mrb[0].mxu0 %v764
        %v859 = vpop.f32.mrb[0].mxu0
        %v860 = vadd.f32 %v659, %v859
        %v861 = vpop.f32.mrb[0].mxu0
        %v862 = vadd.f32 %v663, %v861
        %v863 = vpop.f32.mrb[0].mxu0
        %v864 = vadd.f32 %v659, %v863
        %v865 = vpop.f32.mrb[0].mxu0
        %v866 = vadd.f32 %v663, %v865
        %867 = vmatprep.mubr.bf16.mxu0 0
        %868 = vmatmul.mubr.bf16.gmra.mrb[0].mxu0 %v767
        %v869 = vpop.f32.mrb[0].mxu0
        %v870 = vadd.f32 %v659, %v869
        %v871 = vpop.f32.mrb[0].mxu0
        %v872 = vadd.f32 %v663, %v871
        %v873 = vpop.f32.mrb[0].mxu0
        %v874 = vadd.f32 %v659, %v873
        %v875 = vpop.f32.mrb[0].mxu0
        %v876 = vadd.f32 %v663, %v875
        %877 = vmatprep.mubr.bf16.mxu0 0
        %878 = vmatmul.mubr.bf16.gmra.mrb[0].mxu0 %v770
        %v879 = vpop.f32.mrb[0].mxu0
        %v880 = vadd.f32 %v659, %v879
        %v881 = vpop.f32.mrb[0].mxu0
        %v882 = vadd.f32 %v663, %v881
        %v883 = vpop.f32.mrb[0].mxu0
        %v884 = vadd.f32 %v659, %v883
        %v885 = vpop.f32.mrb[0].mxu0
        %v886 = vadd.f32 %v663, %v885
        %887 = vmatprep.mubr.bf16.mxu0 0
        %888 = vmatmul.mubr.bf16.gmra.mrb[0].mxu0 %v773
        %v889 = vpop.f32.mrb[0].mxu0
        %v890 = vadd.f32 %v659, %v889
        %v891 = vpop.f32.mrb[0].mxu0
        %v892 = vadd.f32 %v663, %v891
        %v893 = vpop.f32.mrb[0].mxu0
        %v894 = vadd.f32 %v659, %v893
        %v895 = vpop.f32.mrb[0].mxu0
        %v896 = vadd.f32 %v663, %v895
        %897 = vmatprep.mubr.bf16.mxu0 0
        %898 = vmatmul.mubr.bf16.gmra.mrb[0].mxu0 %v776
        %v899 = vpop.f32.mrb[0].mxu0
        %v900 = vadd.f32 %v659, %v899
        %v901 = vpop.f32.mrb[0].mxu0
        %v902 = vadd.f32 %v663, %v901
        %v903 = vpop.f32.mrb[0].mxu0
        %v904 = vadd.f32 %v659, %v903
        %v905 = vpop.f32.mrb[0].mxu0
        %v906 = vadd.f32 %v663, %v905
        %907 = vmatprep.mubr.bf16.mxu0 0
        %908 = vmatmul.mubr.bf16.gmra.mrb[0].mxu0 %v779
        %v909 = vpop.f32.mrb[0].mxu0
        %v910 = vadd.f32 %v659, %v909
        %v911 = vpop.f32.mrb[0].mxu0
        %v912 = vadd.f32 %v663, %v911
        %v913 = vpop.f32.mrb[0].mxu0
        %v914 = vadd.f32 %v659, %v913
        %v915 = vpop.f32.mrb[0].mxu0
        %v916 = vadd.f32 %v663, %v915
        %917 = vmatprep.mubr.bf16.mxu0 0
        %918 = vmatmul.mubr.bf16.gmra.mrb[0].mxu0 %v782
        %v919 = vpop.f32.mrb[0].mxu0
        %v920 = vadd.f32 %v659, %v919
        %v921 = vpop.f32.mrb[0].mxu0
        %v922 = vadd.f32 %v663, %v921
        %v923 = vpop.f32.mrb[0].mxu0
        %v924 = vadd.f32 %v659, %v923
        %v925 = vpop.f32.mrb[0].mxu0
        %v926 = vadd.f32 %v663, %v925
        %927 = vmatprep.mubr.bf16.mxu0 0
        %928 = vmatmul.mubr.bf16.gmra.mrb[0].mxu0 %v785
        %v929 = vpop.f32.mrb[0].mxu0
        %v930 = vadd.f32 %v659, %v929
        %v931 = vpop.f32.mrb[0].mxu0
        %v932 = vadd.f32 %v663, %v931
        %v933 = vpop.f32.mrb[0].mxu0
        %v934 = vadd.f32 %v659, %v933
        %v935 = vpop.f32.mrb[0].mxu0
        %v936 = vadd.f32 %v663, %v935
        %937 = vmatprep.mubr.bf16.mxu0 0
        %938 = vmatmul.mubr.bf16.gmra.mrb[0].mxu0 %v788
        %v939 = vpop.f32.mrb[0].mxu0
        %v940 = vadd.f32 %v659, %v939
        %v941 = vpop.f32.mrb[0].mxu0
        %v942 = vadd.f32 %v663, %v941
        %v943 = vpop.f32.mrb[0].mxu0
        %v944 = vadd.f32 %v659, %v943
        %v945 = vpop.f32.mrb[0].mxu0
        %v946 = vadd.f32 %v663, %v945
        %947 = vmatprep.mubr.bf16.mxu0 0
        %948 = vmatmul.mubr.bf16.gmra.mrb[0].mxu0 %v791
        %v949 = vpop.f32.mrb[0].mxu0
        %v950 = vadd.f32 %v659, %v949
        %v951 = vpop.f32.mrb[0].mxu0
        %v952 = vadd.f32 %v663, %v951
        %v953 = vpop.f32.mrb[0].mxu0
        %v954 = vadd.f32 %v659, %v953
        %v955 = vpop.f32.mrb[0].mxu0
        %v956 = vadd.f32 %v663, %v955
        %957 = vmatprep.mubr.bf16.mxu0 0
        %958 = vmatmul.mubr.bf16.gmra.mrb[0].mxu0 %v794
        %v959 = vpop.f32.mrb[0].mxu0
        %v960 = vadd.f32 %v659, %v959
        %v961 = vpop.f32.mrb[0].mxu0
        %v962 = vadd.f32 %v663, %v961
        %v963 = vpop.f32.mrb[0].mxu0
        %v964 = vadd.f32 %v659, %v963
        %v965 = vpop.f32.mrb[0].mxu0
        %v966 = vadd.f32 %v663, %v965
        %967 = vmatprep.mubr.bf16.mxu0 0
        %968 = vmatmul.mubr.bf16.gmra.mrb[0].mxu0 %v797
        %v969 = vpop.f32.mrb[0].mxu0
        %v970 = vadd.f32 %v659, %v969
        %v971 = vpop.f32.mrb[0].mxu0
        %v972 = vadd.f32 %v663, %v971
        %v973 = vpop.f32.mrb[0].mxu0
        %v974 = vadd.f32 %v659, %v973
        %v975 = vpop.f32.mrb[0].mxu0
        %v976 = vadd.f32 %v663, %v975
        %977 = vmatprep.mubr.bf16.mxu0 0
        %978 = vmatmul.mubr.bf16.gmra.mrb[0].mxu0 %v800
        %v979 = vpop.f32.mrb[0].mxu0
        %v980 = vadd.f32 %v659, %v979
        %v981 = vpop.f32.mrb[0].mxu0
        %v982 = vadd.f32 %v663, %v981
        %v983 = vpop.f32.mrb[0].mxu0
        %v984 = vadd.f32 %v659, %v983
        %v985 = vpop.f32.mrb[0].mxu0
        %v986 = vadd.f32 %v663, %v985
        %987 = vmatprep.mubr.bf16.mxu0 0
        %988 = vmatmul.mubr.bf16.gmra.mrb[0].mxu0 %v803
        %v989 = vpop.f32.mrb[0].mxu0
        %v990 = vadd.f32 %v659, %v989
        %v991 = vpop.f32.mrb[0].mxu0
        %v992 = vadd.f32 %v663, %v991
        %v993 = vpop.f32.mrb[0].mxu0
        %v994 = vadd.f32 %v659, %v993
        %v995 = vpop.f32.mrb[0].mxu0
        %v996 = vadd.f32 %v663, %v995
        %997 = vdwg.mxu0
        %998 = vmatprep.subr.bf16.mxu0 %v727
        %999 = vmatpush1.bf16.msra.mxu0 %v726
        %1000 = vmatprep.subr.bf16.mxu0 %v731
        %1001 = vmatpush1.bf16.msra.mxu0 %v730
        %1002 = vmatprep.subr.bf16.mxu0 %v735
        %1003 = vmatpush1.bf16.msra.mxu0 %v734
        %1004 = vmatprep.subr.bf16.mxu0 %v739
        %1005 = vmatpush1.bf16.msra.mxu0 %v738
        %1006 = vmatprep.subr.bf16.mxu0 0
        %1007 = vmatpush1.bf16.msra.mxu0 0
        %1008 = vmatprep.subr.bf16.mxu0 0
        %1009 = vmatpush1.bf16.msra.mxu0 0
        %1010 = vmatprep.subr.bf16.mxu0 0
        %1011 = vmatpush1.bf16.msra.mxu0 0
        %1012 = vmatprep.subr.bf16.mxu0 0
        %1013 = vmatpush1.bf16.msra.mxu0 0
        %1014 = vmatprep.subr.bf16.mxu0 0
        %1015 = vmatpush1.bf16.msra.mxu0 0
        %1016 = vmatprep.subr.bf16.mxu0 0
        %1017 = vmatpush1.bf16.msra.mxu0 0
        %1018 = vmatprep.subr.bf16.mxu0 0
        %1019 = vmatpush1.bf16.msra.mxu0 0
        %1020 = vmatprep.subr.bf16.mxu0 0
        %1021 = vmatpush1.bf16.msra.mxu0 0
        %1022 = vmatprep.subr.bf16.mxu0 0
        %1023 = vmatpush1.bf16.msra.mxu0 0
        %1024 = vmatprep.subr.bf16.mxu0 0
        %1025 = vmatpush1.bf16.msra.mxu0 0
        %1026 = vmatprep.subr.bf16.mxu0 0
        %1027 = vmatpush1.bf16.msra.mxu0 0
        %1028 = vmatprep.subr.bf16.mxu0 0
        %1029 = vmatpush1.bf16.msra.mxu0 0
        %1030 = vmatprep.mubr.bf16.mxu0 0
        %1031 = vmatmul.mubr.bf16.gmra.mrb[0].mxu0 %v758
        %v1032 = vpop.f32.mrb[0].mxu0
        %v1033 = vadd.f32 %v667, %v1032
        %v1034 = vpop.f32.mrb[0].mxu0
        %v1035 = vadd.f32 %v671, %v1034
        %v1036 = vpop.f32.mrb[0].mxu0
        %v1037 = vadd.f32 %v667, %v1036
        %v1038 = vpop.f32.mrb[0].mxu0
        %v1039 = vadd.f32 %v671, %v1038
        %1040 = vmatprep.mubr.bf16.mxu0 0
        %1041 = vmatmul.mubr.bf16.gmra.mrb[0].mxu0 %v761
        %v1042 = vpop.f32.mrb[0].mxu0
        %v1043 = vadd.f32 %v667, %v1042
        %v1044 = vpop.f32.mrb[0].mxu0
        %v1045 = vadd.f32 %v671, %v1044
        %v1046 = vpop.f32.mrb[0].mxu0
        %v1047 = vadd.f32 %v667, %v1046
        %v1048 = vpop.f32.mrb[0].mxu0
        %v1049 = vadd.f32 %v671, %v1048
        %1050 = vmatprep.mubr.bf16.mxu0 0
        %1051 = vmatmul.mubr.bf16.gmra.mrb[0].mxu0 %v764
        %v1052 = vpop.f32.mrb[0].mxu0
        %v1053 = vadd.f32 %v667, %v1052
        %v1054 = vpop.f32.mrb[0].mxu0
        %v1055 = vadd.f32 %v671, %v1054
        %v1056 = vpop.f32.mrb[0].mxu0
        %v1057 = vadd.f32 %v667, %v1056
        %v1058 = vpop.f32.mrb[0].mxu0
        %v1059 = vadd.f32 %v671, %v1058
        %1060 = vmatprep.mubr.bf16.mxu0 0
        %1061 = vmatmul.mubr.bf16.gmra.mrb[0].mxu0 %v767
        %v1062 = vpop.f32.mrb[0].mxu0
        %v1063 = vadd.f32 %v667, %v1062
        %v1064 = vpop.f32.mrb[0].mxu0
        %v1065 = vadd.f32 %v671, %v1064
        %v1066 = vpop.f32.mrb[0].mxu0
        %v1067 = vadd.f32 %v667, %v1066
        %v1068 = vpop.f32.mrb[0].mxu0
        %v1069 = vadd.f32 %v671, %v1068
        %1070 = vmatprep.mubr.bf16.mxu0 0
        %1071 = vmatmul.mubr.bf16.gmra.mrb[0].mxu0 %v770
        %v1072 = vpop.f32.mrb[0].mxu0
        %v1073 = vadd.f32 %v667, %v1072
        %v1074 = vpop.f32.mrb[0].mxu0
        %v1075 = vadd.f32 %v671, %v1074
        %v1076 = vpop.f32.mrb[0].mxu0
        %v1077 = vadd.f32 %v667, %v1076
        %v1078 = vpop.f32.mrb[0].mxu0
        %v1079 = vadd.f32 %v671, %v1078
        %1080 = vmatprep.mubr.bf16.mxu0 0
        %1081 = vmatmul.mubr.bf16.gmra.mrb[0].mxu0 %v773
        %v1082 = vpop.f32.mrb[0].mxu0
        %v1083 = vadd.f32 %v667, %v1082
        %v1084 = vpop.f32.mrb[0].mxu0
        %v1085 = vadd.f32 %v671, %v1084
        %v1086 = vpop.f32.mrb[0].mxu0
        %v1087 = vadd.f32 %v667, %v1086
        %v1088 = vpop.f32.mrb[0].mxu0
        %v1089 = vadd.f32 %v671, %v1088
        %1090 = vmatprep.mubr.bf16.mxu0 0
        %1091 = vmatmul.mubr.bf16.gmra.mrb[0].mxu0 %v776
        %v1092 = vpop.f32.mrb[0].mxu0
        %v1093 = vadd.f32 %v667, %v1092
        %v1094 = vpop.f32.mrb[0].mxu0
        %v1095 = vadd.f32 %v671, %v1094
        %v1096 = vpop.f32.mrb[0].mxu0
        %v1097 = vadd.f32 %v667, %v1096
        %v1098 = vpop.f32.mrb[0].mxu0
        %v1099 = vadd.f32 %v671, %v1098
        %1100 = vmatprep.mubr.bf16.mxu0 0
        %1101 = vmatmul.mubr.bf16.gmra.mrb[0].mxu0 %v779
        %v1102 = vpop.f32.mrb[0].mxu0
        %v1103 = vadd.f32 %v667, %v1102
        %v1104 = vpop.f32.mrb[0].mxu0
        %v1105 = vadd.f32 %v671, %v1104
        %v1106 = vpop.f32.mrb[0].mxu0
        %v1107 = vadd.f32 %v667, %v1106
        %v1108 = vpop.f32.mrb[0].mxu0
        %v1109 = vadd.f32 %v671, %v1108
        %1110 = vmatprep.mubr.bf16.mxu0 0
        %1111 = vmatmul.mubr.bf16.gmra.mrb[0].mxu0 %v782
        %v1112 = vpop.f32.mrb[0].mxu0
        %v1113 = vadd.f32 %v667, %v1112
        %v1114 = vpop.f32.mrb[0].mxu0
        %v1115 = vadd.f32 %v671, %v1114
        %v1116 = vpop.f32.mrb[0].mxu0
        %v1117 = vadd.f32 %v667, %v1116
        %v1118 = vpop.f32.mrb[0].mxu0
        %v1119 = vadd.f32 %v671, %v1118
        %1120 = vmatprep.mubr.bf16.mxu0 0
        %1121 = vmatmul.mubr.bf16.gmra.mrb[0].mxu0 %v785
        %v1122 = vpop.f32.mrb[0].mxu0
        %v1123 = vadd.f32 %v667, %v1122
        %v1124 = vpop.f32.mrb[0].mxu0
        %v1125 = vadd.f32 %v671, %v1124
        %v1126 = vpop.f32.mrb[0].mxu0
        %v1127 = vadd.f32 %v667, %v1126
        %v1128 = vpop.f32.mrb[0].mxu0
        %v1129 = vadd.f32 %v671, %v1128
        %1130 = vmatprep.mubr.bf16.mxu0 0
        %1131 = vmatmul.mubr.bf16.gmra.mrb[0].mxu0 %v788
        %v1132 = vpop.f32.mrb[0].mxu0
        %v1133 = vadd.f32 %v667, %v1132
        %v1134 = vpop.f32.mrb[0].mxu0
        %v1135 = vadd.f32 %v671, %v1134
        %v1136 = vpop.f32.mrb[0].mxu0
        %v1137 = vadd.f32 %v667, %v1136
        %v1138 = vpop.f32.mrb[0].mxu0
        %v1139 = vadd.f32 %v671, %v1138
        %1140 = vmatprep.mubr.bf16.mxu0 0
        %1141 = vmatmul.mubr.bf16.gmra.mrb[0].mxu0 %v791
        %v1142 = vpop.f32.mrb[0].mxu0
        %v1143 = vadd.f32 %v667, %v1142
        %v1144 = vpop.f32.mrb[0].mxu0
        %v1145 = vadd.f32 %v671, %v1144
        %v1146 = vpop.f32.mrb[0].mxu0
        %v1147 = vadd.f32 %v667, %v1146
        %v1148 = vpop.f32.mrb[0].mxu0
        %v1149 = vadd.f32 %v671, %v1148
        %1150 = vmatprep.mubr.bf16.mxu0 0
        %1151 = vmatmul.mubr.bf16.gmra.mrb[0].mxu0 %v794
        %v1152 = vpop.f32.mrb[0].mxu0
        %v1153 = vadd.f32 %v667, %v1152
        %v1154 = vpop.f32.mrb[0].mxu0
        %v1155 = vadd.f32 %v671, %v1154
        %v1156 = vpop.f32.mrb[0].mxu0
        %v1157 = vadd.f32 %v667, %v1156
        %v1158 = vpop.f32.mrb[0].mxu0
        %v1159 = vadd.f32 %v671, %v1158
        %1160 = vmatprep.mubr.bf16.mxu0 0
        %1161 = vmatmul.mubr.bf16.gmra.mrb[0].mxu0 %v797
        %v1162 = vpop.f32.mrb[0].mxu0
        %v1163 = vadd.f32 %v667, %v1162
        %v1164 = vpop.f32.mrb[0].mxu0
        %v1165 = vadd.f32 %v671, %v1164
        %v1166 = vpop.f32.mrb[0].mxu0
        %v1167 = vadd.f32 %v667, %v1166
        %v1168 = vpop.f32.mrb[0].mxu0
        %v1169 = vadd.f32 %v671, %v1168
        %1170 = vmatprep.mubr.bf16.mxu0 0
        %1171 = vmatmul.mubr.bf16.gmra.mrb[0].mxu0 %v800
        %v1172 = vpop.f32.mrb[0].mxu0
        %v1173 = vadd.f32 %v667, %v1172
        %v1174 = vpop.f32.mrb[0].mxu0
        %v1175 = vadd.f32 %v671, %v1174
        %v1176 = vpop.f32.mrb[0].mxu0
        %v1177 = vadd.f32 %v667, %v1176
        %v1178 = vpop.f32.mrb[0].mxu0
        %v1179 = vadd.f32 %v671, %v1178
        %1180 = vmatprep.mubr.bf16.mxu0 0
        %1181 = vmatmul.mubr.bf16.gmra.mrb[0].mxu0 %v803
        %v1182 = vpop.f32.mrb[0].mxu0
        %v1183 = vadd.f32 %v667, %v1182
        %v1184 = vpop.f32.mrb[0].mxu0
        %v1185 = vadd.f32 %v671, %v1184
        %v1186 = vpop.f32.mrb[0].mxu0
        %v1187 = vadd.f32 %v667, %v1186
        %v1188 = vpop.f32.mrb[0].mxu0
        %v1189 = vadd.f32 %v671, %v1188
        %1190 = vdwg.mxu0
        %v1191 = vmax.f32 %v840, 0.0
        %v1192 = vmax.f32 %v842, 0.0
        %v1193 = vmax.f32 %v1033, 0.0
        %v1194 = vmax.f32 %v1035, 0.0
        %v1195 = vmax.f32 %v844, 0.0
        %v1196 = vmax.f32 %v846, 0.0
        %v1197 = vmax.f32 %v1037, 0.0
        %v1198 = vmax.f32 %v1039, 0.0
        %v1199 = vmax.f32 %v850, 0.0
        %v1200 = vmax.f32 %v852, 0.0
        %v1201 = vmax.f32 %v1043, 0.0
        %v1202 = vmax.f32 %v1045, 0.0
        %v1203 = vmax.f32 %v854, 0.0
        %v1204 = vmax.f32 %v856, 0.0
        %v1205 = vmax.f32 %v1047, 0.0
        %v1206 = vmax.f32 %v1049, 0.0
        %v1207 = vmax.f32 %v860, 0.0
        %v1208 = vmax.f32 %v862, 0.0
        %v1209 = vmax.f32 %v1053, 0.0
        %v1210 = vmax.f32 %v1055, 0.0
        %v1211 = vmax.f32 %v864, 0.0
        %v1212 = vmax.f32 %v866, 0.0
        %v1213 = vmax.f32 %v1057, 0.0
        %v1214 = vmax.f32 %v1059, 0.0
        %v1215 = vmax.f32 %v870, 0.0
        %v1216 = vmax.f32 %v872, 0.0
        %v1217 = vmax.f32 %v1063, 0.0
        %v1218 = vmax.f32 %v1065, 0.0
        %v1219 = vmax.f32 %v874, 0.0
        %v1220 = vmax.f32 %v876, 0.0
        %v1221 = vmax.f32 %v1067, 0.0
        %v1222 = vmax.f32 %v1069, 0.0
        %v1223 = vmax.f32 %v880, 0.0
        %v1224 = vmax.f32 %v882, 0.0
        %v1225 = vmax.f32 %v1073, 0.0
        %v1226 = vmax.f32 %v1075, 0.0
        %v1227 = vmax.f32 %v884, 0.0
        %v1228 = vmax.f32 %v886, 0.0
        %v1229 = vmax.f32 %v1077, 0.0
        %v1230 = vmax.f32 %v1079, 0.0
        %v1231 = vmax.f32 %v890, 0.0
        %v1232 = vmax.f32 %v892, 0.0
        %v1233 = vmax.f32 %v1083, 0.0
        %v1234 = vmax.f32 %v1085, 0.0
        %v1235 = vmax.f32 %v894, 0.0
        %v1236 = vmax.f32 %v896, 0.0
        %v1237 = vmax.f32 %v1087, 0.0
        %v1238 = vmax.f32 %v1089, 0.0
        %v1239 = vmax.f32 %v900, 0.0
        %v1240 = vmax.f32 %v902, 0.0
        %v1241 = vmax.f32 %v1093, 0.0
        %v1242 = vmax.f32 %v1095, 0.0
        %v1243 = vmax.f32 %v904, 0.0
        %v1244 = vmax.f32 %v906, 0.0
        %v1245 = vmax.f32 %v1097, 0.0
        %v1246 = vmax.f32 %v1099, 0.0
        %v1247 = vmax.f32 %v910, 0.0
        %v1248 = vmax.f32 %v912, 0.0
        %v1249 = vmax.f32 %v1103, 0.0
        %v1250 = vmax.f32 %v1105, 0.0
        %v1251 = vmax.f32 %v914, 0.0
        %v1252 = vmax.f32 %v916, 0.0
        %v1253 = vmax.f32 %v1107, 0.0
        %v1254 = vmax.f32 %v1109, 0.0
        %v1255 = vmax.f32 %v920, 0.0
        %v1256 = vmax.f32 %v922, 0.0
        %v1257 = vmax.f32 %v1113, 0.0
        %v1258 = vmax.f32 %v1115, 0.0
        %v1259 = vmax.f32 %v924, 0.0
        %v1260 = vmax.f32 %v926, 0.0
        %v1261 = vmax.f32 %v1117, 0.0
        %v1262 = vmax.f32 %v1119, 0.0
        %v1263 = vmax.f32 %v930, 0.0
        %v1264 = vmax.f32 %v932, 0.0
        %v1265 = vmax.f32 %v1123, 0.0
        %v1266 = vmax.f32 %v1125, 0.0
        %v1267 = vmax.f32 %v934, 0.0
        %v1268 = vmax.f32 %v936, 0.0
        %v1269 = vmax.f32 %v1127, 0.0
        %v1270 = vmax.f32 %v1129, 0.0
        %v1271 = vmax.f32 %v940, 0.0
        %v1272 = vmax.f32 %v942, 0.0
        %v1273 = vmax.f32 %v1133, 0.0
        %v1274 = vmax.f32 %v1135, 0.0
        %v1275 = vmax.f32 %v944, 0.0
        %v1276 = vmax.f32 %v946, 0.0
        %v1277 = vmax.f32 %v1137, 0.0
        %v1278 = vmax.f32 %v1139, 0.0
        %v1279 = vmax.f32 %v950, 0.0
        %v1280 = vmax.f32 %v952, 0.0
        %v1281 = vmax.f32 %v1143, 0.0
        %v1282 = vmax.f32 %v1145, 0.0
        %v1283 = vmax.f32 %v954, 0.0
        %v1284 = vmax.f32 %v956, 0.0
        %v1285 = vmax.f32 %v1147, 0.0
        %v1286 = vmax.f32 %v1149, 0.0
        %v1287 = vmax.f32 %v960, 0.0
        %v1288 = vmax.f32 %v962, 0.0
        %v1289 = vmax.f32 %v1153, 0.0
        %v1290 = vmax.f32 %v1155, 0.0
        %v1291 = vmax.f32 %v964, 0.0
        %v1292 = vmax.f32 %v966, 0.0
        %v1293 = vmax.f32 %v1157, 0.0
        %v1294 = vmax.f32 %v1159, 0.0
        %v1295 = vmax.f32 %v970, 0.0
        %v1296 = vmax.f32 %v972, 0.0
        %v1297 = vmax.f32 %v1163, 0.0
        %v1298 = vmax.f32 %v1165, 0.0
        %v1299 = vmax.f32 %v974, 0.0
        %v1300 = vmax.f32 %v976, 0.0
        %v1301 = vmax.f32 %v1167, 0.0
        %v1302 = vmax.f32 %v1169, 0.0
        %v1303 = vmax.f32 %v980, 0.0
        %v1304 = vmax.f32 %v982, 0.0
        %v1305 = vmax.f32 %v1173, 0.0
        %v1306 = vmax.f32 %v1175, 0.0
        %v1307 = vmax.f32 %v984, 0.0
        %v1308 = vmax.f32 %v986, 0.0
        %v1309 = vmax.f32 %v1177, 0.0
        %v1310 = vmax.f32 %v1179, 0.0
        %v1311 = vmax.f32 %v990, 0.0
        %v1312 = vmax.f32 %v992, 0.0
        %v1313 = vmax.f32 %v1183, 0.0
        %v1314 = vmax.f32 %v1185, 0.0
        %v1315 = vmax.f32 %v994, 0.0
        %v1316 = vmax.f32 %v996, 0.0
        %v1317 = vmax.f32 %v1187, 0.0
        %v1318 = vmax.f32 %v1189, 0.0
        %v1319 = vpack.c.bf16 %v1195, %v1191
        %v1320 = vpack.c.bf16 %v1196, %v1192
        %v1321 = vpack.c.bf16 %v1197, %v1193
        %v1322 = vpack.c.bf16 %v1198, %v1194
        %v1323 = vpack.c.bf16 %v1203, %v1199
        %v1324 = vpack.c.bf16 %v1204, %v1200
        %v1325 = vpack.c.bf16 %v1205, %v1201
        %v1326 = vpack.c.bf16 %v1206, %v1202
        %v1327 = vpack.c.bf16 %v1211, %v1207
        %v1328 = vpack.c.bf16 %v1212, %v1208
        %v1329 = vpack.c.bf16 %v1213, %v1209
        %v1330 = vpack.c.bf16 %v1214, %v1210
        %v1331 = vpack.c.bf16 %v1219, %v1215
        %v1332 = vpack.c.bf16 %v1220, %v1216
        %v1333 = vpack.c.bf16 %v1221, %v1217
        %v1334 = vpack.c.bf16 %v1222, %v1218
        %v1335 = vpack.c.bf16 %v1227, %v1223
        %v1336 = vpack.c.bf16 %v1228, %v1224
        %v1337 = vpack.c.bf16 %v1229, %v1225
        %v1338 = vpack.c.bf16 %v1230, %v1226
        %v1339 = vpack.c.bf16 %v1235, %v1231
        %v1340 = vpack.c.bf16 %v1236, %v1232
        %v1341 = vpack.c.bf16 %v1237, %v1233
        %v1342 = vpack.c.bf16 %v1238, %v1234
        %v1343 = vpack.c.bf16 %v1243, %v1239
        %v1344 = vpack.c.bf16 %v1244, %v1240
        %v1345 = vpack.c.bf16 %v1245, %v1241
        %v1346 = vpack.c.bf16 %v1246, %v1242
        %v1347 = vpack.c.bf16 %v1251, %v1247
        %v1348 = vpack.c.bf16 %v1252, %v1248
        %v1349 = vpack.c.bf16 %v1253, %v1249
        %v1350 = vpack.c.bf16 %v1254, %v1250
        %v1351 = vpack.c.bf16 %v1259, %v1255
        %v1352 = vpack.c.bf16 %v1260, %v1256
        %v1353 = vpack.c.bf16 %v1261, %v1257
        %v1354 = vpack.c.bf16 %v1262, %v1258
        %v1355 = vpack.c.bf16 %v1267, %v1263
        %v1356 = vpack.c.bf16 %v1268, %v1264
        %v1357 = vpack.c.bf16 %v1269, %v1265
        %v1358 = vpack.c.bf16 %v1270, %v1266
        %v1359 = vpack.c.bf16 %v1275, %v1271
        %v1360 = vpack.c.bf16 %v1276, %v1272
        %v1361 = vpack.c.bf16 %v1277, %v1273
        %v1362 = vpack.c.bf16 %v1278, %v1274
        %v1363 = vpack.c.bf16 %v1283, %v1279
        %v1364 = vpack.c.bf16 %v1284, %v1280
        %v1365 = vpack.c.bf16 %v1285, %v1281
        %v1366 = vpack.c.bf16 %v1286, %v1282
        %v1367 = vpack.c.bf16 %v1291, %v1287
        %v1368 = vpack.c.bf16 %v1292, %v1288
        %v1369 = vpack.c.bf16 %v1293, %v1289
        %v1370 = vpack.c.bf16 %v1294, %v1290
        %v1371 = vpack.c.bf16 %v1299, %v1295
        %v1372 = vpack.c.bf16 %v1300, %v1296
        %v1373 = vpack.c.bf16 %v1301, %v1297
        %v1374 = vpack.c.bf16 %v1302, %v1298
        %v1375 = vpack.c.bf16 %v1307, %v1303
        %v1376 = vpack.c.bf16 %v1308, %v1304
        %v1377 = vpack.c.bf16 %v1309, %v1305
        %v1378 = vpack.c.bf16 %v1310, %v1306
        %v1379 = vpack.c.bf16 %v1315, %v1311
        %v1380 = vpack.c.bf16 %v1316, %v1312
        %v1381 = vpack.c.bf16 %v1317, %v1313
        %v1382 = vpack.c.bf16 %v1318, %v1314
        %v1383 = vld [vmem:[#allocation5] sm:$0xff]
        %v1384 = vld [vmem:[#allocation5 + $0x8] sm:$0xff]
        %v1385 = vld [vmem:[#allocation5 + $0x10] sm:$0xff]
        %v1386 = vld [vmem:[#allocation5 + $0x18] sm:$0xff]
        %v1387 = vld [vmem:[#allocation5 + $0x20] sm:$0xff]
        %v1388 = vld [vmem:[#allocation5 + $0x28] sm:$0xff]
        %v1389 = vld [vmem:[#allocation5 + $0x30] sm:$0xff]
        %v1390 = vld [vmem:[#allocation5 + $0x38] sm:$0xff]
        %v1391 = vld [vmem:[#allocation5 + $0x40] sm:$0xff]
        %v1392 = vld [vmem:[#allocation5 + $0x48] sm:$0xff]
        %v1393 = vld [vmem:[#allocation5 + $0x50] sm:$0xff]
        %v1394 = vld [vmem:[#allocation5 + $0x58] sm:$0xff]
        %v1395 = vld [vmem:[#allocation5 + $0x60] sm:$0xff]
        %v1396 = vld [vmem:[#allocation5 + $0x68] sm:$0xff]
        %v1397 = vld [vmem:[#allocation5 + $0x70] sm:$0xff]
        %v1398 = vld [vmem:[#allocation5 + $0x78] sm:$0xff]
        %v1399 = vld [vmem:[#allocation5 + $0x80] sm:$0xff]
        %v1400 = vld [vmem:[#allocation5 + $0x88] sm:$0xff]
        %v1401 = vld [vmem:[#allocation5 + $0x90] sm:$0xff]
        %v1402 = vld [vmem:[#allocation5 + $0x98] sm:$0xff]
        %v1403 = vld [vmem:[#allocation5 + $0xa0] sm:$0xff]
        %v1404 = vld [vmem:[#allocation5 + $0xa8] sm:$0xff]
        %v1405 = vld [vmem:[#allocation5 + $0xb0] sm:$0xff]
        %v1406 = vld [vmem:[#allocation5 + $0xb8] sm:$0xff]
        %v1407 = vld [vmem:[#allocation5 + $0xc0] sm:$0xff]
        %v1408 = vld [vmem:[#allocation5 + $0xc8] sm:$0xff]
        %v1409 = vld [vmem:[#allocation5 + $0xd0] sm:$0xff]
        %v1410 = vld [vmem:[#allocation5 + $0xd8] sm:$0xff]
        %v1411 = vld [vmem:[#allocation5 + $0xe0] sm:$0xff]
        %v1412 = vld [vmem:[#allocation5 + $0xe8] sm:$0xff]
        %v1413 = vld [vmem:[#allocation5 + $0xf0] sm:$0xff]
        %v1414 = vld [vmem:[#allocation5 + $0xf8] sm:$0xff]
        %v1415 = vld [vmem:[#allocation5 + $0x100] sm:$0xff]
        %v1416 = vld [vmem:[#allocation5 + $0x108] sm:$0xff]
        %v1417 = vld [vmem:[#allocation5 + $0x110] sm:$0xff]
        %v1418 = vld [vmem:[#allocation5 + $0x118] sm:$0xff]
        %v1419 = vld [vmem:[#allocation5 + $0x120] sm:$0xff]
        %v1420 = vld [vmem:[#allocation5 + $0x128] sm:$0xff]
        %v1421 = vld [vmem:[#allocation5 + $0x130] sm:$0xff]
        %v1422 = vld [vmem:[#allocation5 + $0x138] sm:$0xff]
        %v1423 = vld [vmem:[#allocation5 + $0x140] sm:$0xff]
        %v1424 = vld [vmem:[#allocation5 + $0x148] sm:$0xff]
        %v1425 = vld [vmem:[#allocation5 + $0x150] sm:$0xff]
        %v1426 = vld [vmem:[#allocation5 + $0x158] sm:$0xff]
        %v1427 = vld [vmem:[#allocation5 + $0x160] sm:$0xff]
        %v1428 = vld [vmem:[#allocation5 + $0x168] sm:$0xff]
        %v1429 = vld [vmem:[#allocation5 + $0x170] sm:$0xff]
        %v1430 = vld [vmem:[#allocation5 + $0x178] sm:$0xff]
        %v1431 = vld [vmem:[#allocation5 + $0x180] sm:$0xff]
        %v1432 = vld [vmem:[#allocation5 + $0x188] sm:$0xff]
        %v1433 = vld [vmem:[#allocation5 + $0x190] sm:$0xff]
        %v1434 = vld [vmem:[#allocation5 + $0x198] sm:$0xff]
        %v1435 = vld [vmem:[#allocation5 + $0x1a0] sm:$0xff]
        %v1436 = vld [vmem:[#allocation5 + $0x1a8] sm:$0xff]
        %v1437 = vld [vmem:[#allocation5 + $0x1b0] sm:$0xff]
        %v1438 = vld [vmem:[#allocation5 + $0x1b8] sm:$0xff]
        %v1439 = vld [vmem:[#allocation5 + $0x1c0] sm:$0xff]
        %v1440 = vld [vmem:[#allocation5 + $0x1c8] sm:$0xff]
        %v1441 = vld [vmem:[#allocation5 + $0x1d0] sm:$0xff]
        %v1442 = vld [vmem:[#allocation5 + $0x1d8] sm:$0xff]
        %v1443 = vld [vmem:[#allocation5 + $0x1e0] sm:$0xff]
        %v1444 = vld [vmem:[#allocation5 + $0x1e8] sm:$0xff]
        %v1445 = vld [vmem:[#allocation5 + $0x1f0] sm:$0xff]
        %v1446 = vld [vmem:[#allocation5 + $0x1f8] sm:$0xff]
        %v1447 = vld [vmem:[%s5] sm:$0x3]
        %v1449 = vlaneseq
        %v1450 = vshrl.u32 %v1449, 7
        %v1451 = vsub.s32 0, %v1450
        %v1452 = vrot.slane %v1447, %v1451
        %v1453 = vlaneseq
        %v1454 = vshrl.u32 %v1453, 7
        %v1455 = vsub.s32 1, %v1454
        %v1456 = vrot.slane %v1447, %v1455
        %v1523 = vunpack.c.l.b16 %v1383
        %v1524 = vunpack.c.h.b16 %v1383
        %v1525 = vunpack.c.l.b16 %v1384
        %v1526 = vunpack.c.h.b16 %v1384
        %v1527 = vunpack.c.l.b16 %v1385
        %v1528 = vunpack.c.h.b16 %v1385
        %v1529 = vunpack.c.l.b16 %v1386
        %v1530 = vunpack.c.h.b16 %v1386
        %v1531 = vunpack.c.l.b16 %v1387
        %v1532 = vunpack.c.h.b16 %v1387
        %v1533 = vunpack.c.l.b16 %v1388
        %v1534 = vunpack.c.h.b16 %v1388
        %v1535 = vunpack.c.l.b16 %v1389
        %v1536 = vunpack.c.h.b16 %v1389
        %v1537 = vunpack.c.l.b16 %v1390
        %v1538 = vunpack.c.h.b16 %v1390
        %v1539 = vunpack.c.l.b16 %v1391
        %v1540 = vunpack.c.h.b16 %v1391
        %v1541 = vunpack.c.l.b16 %v1392
        %v1542 = vunpack.c.h.b16 %v1392
        %v1543 = vunpack.c.l.b16 %v1393
        %v1544 = vunpack.c.h.b16 %v1393
        %v1545 = vunpack.c.l.b16 %v1394
        %v1546 = vunpack.c.h.b16 %v1394
        %v1547 = vunpack.c.l.b16 %v1395
        %v1548 = vunpack.c.h.b16 %v1395
        %v1549 = vunpack.c.l.b16 %v1396
        %v1550 = vunpack.c.h.b16 %v1396
        %v1551 = vunpack.c.l.b16 %v1397
        %v1552 = vunpack.c.h.b16 %v1397
        %v1553 = vunpack.c.l.b16 %v1398
        %v1554 = vunpack.c.h.b16 %v1398
        %v1555 = vunpack.c.l.b16 %v1399
        %v1556 = vunpack.c.h.b16 %v1399
        %v1557 = vunpack.c.l.b16 %v1400
        %v1558 = vunpack.c.h.b16 %v1400
        %v1559 = vunpack.c.l.b16 %v1401
        %v1560 = vunpack.c.h.b16 %v1401
        %v1561 = vunpack.c.l.b16 %v1402
        %v1562 = vunpack.c.h.b16 %v1402
        %v1563 = vunpack.c.l.b16 %v1403
        %v1564 = vunpack.c.h.b16 %v1403
        %v1565 = vunpack.c.l.b16 %v1404
        %v1566 = vunpack.c.h.b16 %v1404
        %v1567 = vunpack.c.l.b16 %v1405
        %v1568 = vunpack.c.h.b16 %v1405
        %v1569 = vunpack.c.l.b16 %v1406
        %v1570 = vunpack.c.h.b16 %v1406
        %v1571 = vunpack.c.l.b16 %v1407
        %v1572 = vunpack.c.h.b16 %v1407
        %v1573 = vunpack.c.l.b16 %v1408
        %v1574 = vunpack.c.h.b16 %v1408
        %v1575 = vunpack.c.l.b16 %v1409
        %v1576 = vunpack.c.h.b16 %v1409
        %v1577 = vunpack.c.l.b16 %v1410
        %v1578 = vunpack.c.h.b16 %v1410
        %v1579 = vunpack.c.l.b16 %v1411
        %v1580 = vunpack.c.h.b16 %v1411
        %v1581 = vunpack.c.l.b16 %v1412
        %v1582 = vunpack.c.h.b16 %v1412
        %v1583 = vunpack.c.l.b16 %v1413
        %v1584 = vunpack.c.h.b16 %v1413
        %v1585 = vunpack.c.l.b16 %v1414
        %v1586 = vunpack.c.h.b16 %v1414
        %v1587 = vunpack.c.l.b16 %v1415
        %v1588 = vunpack.c.h.b16 %v1415
        %v1589 = vunpack.c.l.b16 %v1416
        %v1590 = vunpack.c.h.b16 %v1416
        %v1591 = vunpack.c.l.b16 %v1417
        %v1592 = vunpack.c.h.b16 %v1417
        %v1593 = vunpack.c.l.b16 %v1418
        %v1594 = vunpack.c.h.b16 %v1418
        %v1595 = vunpack.c.l.b16 %v1419
        %v1596 = vunpack.c.h.b16 %v1419
        %v1597 = vunpack.c.l.b16 %v1420
        %v1598 = vunpack.c.h.b16 %v1420
        %v1599 = vunpack.c.l.b16 %v1421
        %v1600 = vunpack.c.h.b16 %v1421
        %v1601 = vunpack.c.l.b16 %v1422
        %v1602 = vunpack.c.h.b16 %v1422
        %v1603 = vunpack.c.l.b16 %v1423
        %v1604 = vunpack.c.h.b16 %v1423
        %v1605 = vunpack.c.l.b16 %v1424
        %v1606 = vunpack.c.h.b16 %v1424
        %v1607 = vunpack.c.l.b16 %v1425
        %v1608 = vunpack.c.h.b16 %v1425
        %v1609 = vunpack.c.l.b16 %v1426
        %v1610 = vunpack.c.h.b16 %v1426
        %v1611 = vunpack.c.l.b16 %v1427
        %v1612 = vunpack.c.h.b16 %v1427
        %v1613 = vunpack.c.l.b16 %v1428
        %v1614 = vunpack.c.h.b16 %v1428
        %v1615 = vunpack.c.l.b16 %v1429
        %v1616 = vunpack.c.h.b16 %v1429
        %v1617 = vunpack.c.l.b16 %v1430
        %v1618 = vunpack.c.h.b16 %v1430
        %v1619 = vunpack.c.l.b16 %v1431
        %v1620 = vunpack.c.h.b16 %v1431
        %v1621 = vunpack.c.l.b16 %v1432
        %v1622 = vunpack.c.h.b16 %v1432
        %v1623 = vunpack.c.l.b16 %v1433
        %v1624 = vunpack.c.h.b16 %v1433
        %v1625 = vunpack.c.l.b16 %v1434
        %v1626 = vunpack.c.h.b16 %v1434
        %v1627 = vunpack.c.l.b16 %v1435
        %v1628 = vunpack.c.h.b16 %v1435
        %v1629 = vunpack.c.l.b16 %v1436
        %v1630 = vunpack.c.h.b16 %v1436
        %v1631 = vunpack.c.l.b16 %v1437
        %v1632 = vunpack.c.h.b16 %v1437
        %v1633 = vunpack.c.l.b16 %v1438
        %v1634 = vunpack.c.h.b16 %v1438
        %v1635 = vunpack.c.l.b16 %v1439
        %v1636 = vunpack.c.h.b16 %v1439
        %v1637 = vunpack.c.l.b16 %v1440
        %v1638 = vunpack.c.h.b16 %v1440
        %v1639 = vunpack.c.l.b16 %v1441
        %v1640 = vunpack.c.h.b16 %v1441
        %v1641 = vunpack.c.l.b16 %v1442
        %v1642 = vunpack.c.h.b16 %v1442
        %v1643 = vunpack.c.l.b16 %v1443
        %v1644 = vunpack.c.h.b16 %v1443
        %v1645 = vunpack.c.l.b16 %v1444
        %v1646 = vunpack.c.h.b16 %v1444
        %v1647 = vunpack.c.l.b16 %v1445
        %v1648 = vunpack.c.h.b16 %v1445
        %v1649 = vunpack.c.l.b16 %v1446
        %v1650 = vunpack.c.h.b16 %v1446
        %v1651 = vpack.c.b16 %v1525, %v1523
        %v1652 = vpack.c.b16 %v1526, %v1524
        %v1653 = vpack.c.b16 %v1529, %v1527
        %v1654 = vpack.c.b16 %v1530, %v1528
        %v1655 = vpack.c.b16 %v1533, %v1531
        %v1656 = vpack.c.b16 %v1534, %v1532
        %v1657 = vpack.c.b16 %v1537, %v1535
        %v1658 = vpack.c.b16 %v1538, %v1536
        %v1659 = vpack.c.b16 %v1541, %v1539
        %v1660 = vpack.c.b16 %v1542, %v1540
        %v1661 = vpack.c.b16 %v1545, %v1543
        %v1662 = vpack.c.b16 %v1546, %v1544
        %v1663 = vpack.c.b16 %v1549, %v1547
        %v1664 = vpack.c.b16 %v1550, %v1548
        %v1665 = vpack.c.b16 %v1553, %v1551
        %v1666 = vpack.c.b16 %v1554, %v1552
        %v1667 = vpack.c.b16 %v1557, %v1555
        %v1668 = vpack.c.b16 %v1558, %v1556
        %v1669 = vpack.c.b16 %v1561, %v1559
        %v1670 = vpack.c.b16 %v1562, %v1560
        %v1671 = vpack.c.b16 %v1565, %v1563
        %v1672 = vpack.c.b16 %v1566, %v1564
        %v1673 = vpack.c.b16 %v1569, %v1567
        %v1674 = vpack.c.b16 %v1570, %v1568
        %v1675 = vpack.c.b16 %v1573, %v1571
        %v1676 = vpack.c.b16 %v1574, %v1572
        %v1677 = vpack.c.b16 %v1577, %v1575
        %v1678 = vpack.c.b16 %v1578, %v1576
        %v1679 = vpack.c.b16 %v1581, %v1579
        %v1680 = vpack.c.b16 %v1582, %v1580
        %v1681 = vpack.c.b16 %v1585, %v1583
        %v1682 = vpack.c.b16 %v1586, %v1584
        %v1683 = vpack.c.b16 %v1589, %v1587
        %v1684 = vpack.c.b16 %v1590, %v1588
        %v1685 = vpack.c.b16 %v1593, %v1591
        %v1686 = vpack.c.b16 %v1594, %v1592
        %v1687 = vpack.c.b16 %v1597, %v1595
        %v1688 = vpack.c.b16 %v1598, %v1596
        %v1689 = vpack.c.b16 %v1601, %v1599
        %v1690 = vpack.c.b16 %v1602, %v1600
        %v1691 = vpack.c.b16 %v1605, %v1603
        %v1692 = vpack.c.b16 %v1606, %v1604
        %v1693 = vpack.c.b16 %v1609, %v1607
        %v1694 = vpack.c.b16 %v1610, %v1608
        %v1695 = vpack.c.b16 %v1613, %v1611
        %v1696 = vpack.c.b16 %v1614, %v1612
        %v1697 = vpack.c.b16 %v1617, %v1615
        %v1698 = vpack.c.b16 %v1618, %v1616
        %v1699 = vpack.c.b16 %v1621, %v1619
        %v1700 = vpack.c.b16 %v1622, %v1620
        %v1701 = vpack.c.b16 %v1625, %v1623
        %v1702 = vpack.c.b16 %v1626, %v1624
        %v1703 = vpack.c.b16 %v1629, %v1627
        %v1704 = vpack.c.b16 %v1630, %v1628
        %v1705 = vpack.c.b16 %v1633, %v1631
        %v1706 = vpack.c.b16 %v1634, %v1632
        %v1707 = vpack.c.b16 %v1637, %v1635
        %v1708 = vpack.c.b16 %v1638, %v1636
        %v1709 = vpack.c.b16 %v1641, %v1639
        %v1710 = vpack.c.b16 %v1642, %v1640
        %v1711 = vpack.c.b16 %v1645, %v1643
        %v1712 = vpack.c.b16 %v1646, %v1644
        %v1713 = vpack.c.b16 %v1649, %v1647
        %v1714 = vpack.c.b16 %v1650, %v1648
        %1779 = vmatprep.subr.bf16.mxu0 %v1652
        %1780 = vmatpush1.bf16.msra.mxu0 %v1651
        %1781 = vmatprep.subr.bf16.mxu0 %v1654
        %1782 = vmatpush1.bf16.msra.mxu0 %v1653
        %1783 = vmatprep.subr.bf16.mxu0 %v1656
        %1784 = vmatpush1.bf16.msra.mxu0 %v1655
        %1785 = vmatprep.subr.bf16.mxu0 %v1658
        %1786 = vmatpush1.bf16.msra.mxu0 %v1657
        %1787 = vmatprep.subr.bf16.mxu0 %v1660
        %1788 = vmatpush1.bf16.msra.mxu0 %v1659
        %1789 = vmatprep.subr.bf16.mxu0 %v1662
        %1790 = vmatpush1.bf16.msra.mxu0 %v1661
        %1791 = vmatprep.subr.bf16.mxu0 %v1664
        %1792 = vmatpush1.bf16.msra.mxu0 %v1663
        %1793 = vmatprep.subr.bf16.mxu0 %v1666
        %1794 = vmatpush1.bf16.msra.mxu0 %v1665
        %1795 = vmatprep.subr.bf16.mxu0 %v1668
        %1796 = vmatpush1.bf16.msra.mxu0 %v1667
        %1797 = vmatprep.subr.bf16.mxu0 %v1670
        %1798 = vmatpush1.bf16.msra.mxu0 %v1669
        %1799 = vmatprep.subr.bf16.mxu0 %v1672
        %1800 = vmatpush1.bf16.msra.mxu0 %v1671
        %1801 = vmatprep.subr.bf16.mxu0 %v1674
        %1802 = vmatpush1.bf16.msra.mxu0 %v1673
        %1803 = vmatprep.subr.bf16.mxu0 %v1676
        %1804 = vmatpush1.bf16.msra.mxu0 %v1675
        %1805 = vmatprep.subr.bf16.mxu0 %v1678
        %1806 = vmatpush1.bf16.msra.mxu0 %v1677
        %1807 = vmatprep.subr.bf16.mxu0 %v1680
        %1808 = vmatpush1.bf16.msra.mxu0 %v1679
        %1809 = vmatprep.subr.bf16.mxu0 %v1682
        %1810 = vmatpush1.bf16.msra.mxu0 %v1681
        %1811 = vmatprep.mubr.bf16.mxu0 %v1320
        %1812 = vmatmul.mubr.bf16.gmra.mrb[0].mxu0 %v1319
        %v1813 = vpop.f32.mrb[0].mxu0
        %v1814 = vadd.f32 %v1452, %v1813
        %v1815 = vpop.f32.mrb[0].mxu0
        %v1816 = vadd.f32 %v1456, %v1815
        %v1817 = vpop.f32.mrb[0].mxu0
        %v1818 = vadd.f32 %v1452, %v1817
        %v1819 = vpop.f32.mrb[0].mxu0
        %v1820 = vadd.f32 %v1456, %v1819
        %1821 = vmatprep.mubr.bf16.mxu0 %v1324
        %1822 = vmatmul.mubr.bf16.gmra.mrb[0].mxu0 %v1323
        %v1823 = vpop.f32.mrb[0].mxu0
        %v1824 = vadd.f32 %v1452, %v1823
        %v1825 = vpop.f32.mrb[0].mxu0
        %v1826 = vadd.f32 %v1456, %v1825
        %v1827 = vpop.f32.mrb[0].mxu0
        %v1828 = vadd.f32 %v1452, %v1827
        %v1829 = vpop.f32.mrb[0].mxu0
        %v1830 = vadd.f32 %v1456, %v1829
        %1831 = vmatprep.mubr.bf16.mxu0 %v1328
        %1832 = vmatmul.mubr.bf16.gmra.mrb[0].mxu0 %v1327
        %v1833 = vpop.f32.mrb[0].mxu0
        %v1834 = vadd.f32 %v1452, %v1833
        %v1835 = vpop.f32.mrb[0].mxu0
        %v1836 = vadd.f32 %v1456, %v1835
        %v1837 = vpop.f32.mrb[0].mxu0
        %v1838 = vadd.f32 %v1452, %v1837
        %v1839 = vpop.f32.mrb[0].mxu0
        %v1840 = vadd.f32 %v1456, %v1839
        %1841 = vmatprep.mubr.bf16.mxu0 %v1332
        %1842 = vmatmul.mubr.bf16.gmra.mrb[0].mxu0 %v1331
        %v1843 = vpop.f32.mrb[0].mxu0
        %v1844 = vadd.f32 %v1452, %v1843
        %v1845 = vpop.f32.mrb[0].mxu0
        %v1846 = vadd.f32 %v1456, %v1845
        %v1847 = vpop.f32.mrb[0].mxu0
        %v1848 = vadd.f32 %v1452, %v1847
        %v1849 = vpop.f32.mrb[0].mxu0
        %v1850 = vadd.f32 %v1456, %v1849
        %1851 = vmatprep.mubr.bf16.mxu0 %v1336
        %1852 = vmatmul.mubr.bf16.gmra.mrb[0].mxu0 %v1335
        %v1853 = vpop.f32.mrb[0].mxu0
        %v1854 = vadd.f32 %v1452, %v1853
        %v1855 = vpop.f32.mrb[0].mxu0
        %v1856 = vadd.f32 %v1456, %v1855
        %v1857 = vpop.f32.mrb[0].mxu0
        %v1858 = vadd.f32 %v1452, %v1857
        %v1859 = vpop.f32.mrb[0].mxu0
        %v1860 = vadd.f32 %v1456, %v1859
        %1861 = vmatprep.mubr.bf16.mxu0 %v1340
        %1862 = vmatmul.mubr.bf16.gmra.mrb[0].mxu0 %v1339
        %v1863 = vpop.f32.mrb[0].mxu0
        %v1864 = vadd.f32 %v1452, %v1863
        %v1865 = vpop.f32.mrb[0].mxu0
        %v1866 = vadd.f32 %v1456, %v1865
        %v1867 = vpop.f32.mrb[0].mxu0
        %v1868 = vadd.f32 %v1452, %v1867
        %v1869 = vpop.f32.mrb[0].mxu0
        %v1870 = vadd.f32 %v1456, %v1869
        %1871 = vmatprep.mubr.bf16.mxu0 %v1344
        %1872 = vmatmul.mubr.bf16.gmra.mrb[0].mxu0 %v1343
        %v1873 = vpop.f32.mrb[0].mxu0
        %v1874 = vadd.f32 %v1452, %v1873
        %v1875 = vpop.f32.mrb[0].mxu0
        %v1876 = vadd.f32 %v1456, %v1875
        %v1877 = vpop.f32.mrb[0].mxu0
        %v1878 = vadd.f32 %v1452, %v1877
        %v1879 = vpop.f32.mrb[0].mxu0
        %v1880 = vadd.f32 %v1456, %v1879
        %1881 = vmatprep.mubr.bf16.mxu0 %v1348
        %1882 = vmatmul.mubr.bf16.gmra.mrb[0].mxu0 %v1347
        %v1883 = vpop.f32.mrb[0].mxu0
        %v1884 = vadd.f32 %v1452, %v1883
        %v1885 = vpop.f32.mrb[0].mxu0
        %v1886 = vadd.f32 %v1456, %v1885
        %v1887 = vpop.f32.mrb[0].mxu0
        %v1888 = vadd.f32 %v1452, %v1887
        %v1889 = vpop.f32.mrb[0].mxu0
        %v1890 = vadd.f32 %v1456, %v1889
        %1891 = vmatprep.mubr.bf16.mxu0 %v1352
        %1892 = vmatmul.mubr.bf16.gmra.mrb[0].mxu0 %v1351
        %v1893 = vpop.f32.mrb[0].mxu0
        %v1894 = vadd.f32 %v1452, %v1893
        %v1895 = vpop.f32.mrb[0].mxu0
        %v1896 = vadd.f32 %v1456, %v1895
        %v1897 = vpop.f32.mrb[0].mxu0
        %v1898 = vadd.f32 %v1452, %v1897
        %v1899 = vpop.f32.mrb[0].mxu0
        %v1900 = vadd.f32 %v1456, %v1899
        %1901 = vmatprep.mubr.bf16.mxu0 %v1356
        %1902 = vmatmul.mubr.bf16.gmra.mrb[0].mxu0 %v1355
        %v1903 = vpop.f32.mrb[0].mxu0
        %v1904 = vadd.f32 %v1452, %v1903
        %v1905 = vpop.f32.mrb[0].mxu0
        %v1906 = vadd.f32 %v1456, %v1905
        %v1907 = vpop.f32.mrb[0].mxu0
        %v1908 = vadd.f32 %v1452, %v1907
        %v1909 = vpop.f32.mrb[0].mxu0
        %v1910 = vadd.f32 %v1456, %v1909
        %1911 = vmatprep.mubr.bf16.mxu0 %v1360
        %1912 = vmatmul.mubr.bf16.gmra.mrb[0].mxu0 %v1359
        %v1913 = vpop.f32.mrb[0].mxu0
        %v1914 = vadd.f32 %v1452, %v1913
        %v1915 = vpop.f32.mrb[0].mxu0
        %v1916 = vadd.f32 %v1456, %v1915
        %v1917 = vpop.f32.mrb[0].mxu0
        %v1918 = vadd.f32 %v1452, %v1917
        %v1919 = vpop.f32.mrb[0].mxu0
        %v1920 = vadd.f32 %v1456, %v1919
        %1921 = vmatprep.mubr.bf16.mxu0 %v1364
        %1922 = vmatmul.mubr.bf16.gmra.mrb[0].mxu0 %v1363
        %v1923 = vpop.f32.mrb[0].mxu0
        %v1924 = vadd.f32 %v1452, %v1923
        %v1925 = vpop.f32.mrb[0].mxu0
        %v1926 = vadd.f32 %v1456, %v1925
        %v1927 = vpop.f32.mrb[0].mxu0
        %v1928 = vadd.f32 %v1452, %v1927
        %v1929 = vpop.f32.mrb[0].mxu0
        %v1930 = vadd.f32 %v1456, %v1929
        %1931 = vmatprep.mubr.bf16.mxu0 %v1368
        %1932 = vmatmul.mubr.bf16.gmra.mrb[0].mxu0 %v1367
        %v1933 = vpop.f32.mrb[0].mxu0
        %v1934 = vadd.f32 %v1452, %v1933
        %v1935 = vpop.f32.mrb[0].mxu0
        %v1936 = vadd.f32 %v1456, %v1935
        %v1937 = vpop.f32.mrb[0].mxu0
        %v1938 = vadd.f32 %v1452, %v1937
        %v1939 = vpop.f32.mrb[0].mxu0
        %v1940 = vadd.f32 %v1456, %v1939
        %1941 = vmatprep.mubr.bf16.mxu0 %v1372
        %1942 = vmatmul.mubr.bf16.gmra.mrb[0].mxu0 %v1371
        %v1943 = vpop.f32.mrb[0].mxu0
        %v1944 = vadd.f32 %v1452, %v1943
        %v1945 = vpop.f32.mrb[0].mxu0
        %v1946 = vadd.f32 %v1456, %v1945
        %v1947 = vpop.f32.mrb[0].mxu0
        %v1948 = vadd.f32 %v1452, %v1947
        %v1949 = vpop.f32.mrb[0].mxu0
        %v1950 = vadd.f32 %v1456, %v1949
        %1951 = vmatprep.mubr.bf16.mxu0 %v1376
        %1952 = vmatmul.mubr.bf16.gmra.mrb[0].mxu0 %v1375
        %v1953 = vpop.f32.mrb[0].mxu0
        %v1954 = vadd.f32 %v1452, %v1953
        %v1955 = vpop.f32.mrb[0].mxu0
        %v1956 = vadd.f32 %v1456, %v1955
        %v1957 = vpop.f32.mrb[0].mxu0
        %v1958 = vadd.f32 %v1452, %v1957
        %v1959 = vpop.f32.mrb[0].mxu0
        %v1960 = vadd.f32 %v1456, %v1959
        %1961 = vmatprep.mubr.bf16.mxu0 %v1380
        %1962 = vmatmul.mubr.bf16.gmra.mrb[0].mxu0 %v1379
        %v1963 = vpop.f32.mrb[0].mxu0
        %v1964 = vadd.f32 %v1452, %v1963
        %v1965 = vpop.f32.mrb[0].mxu0
        %v1966 = vadd.f32 %v1456, %v1965
        %v1967 = vpop.f32.mrb[0].mxu0
        %v1968 = vadd.f32 %v1452, %v1967
        %v1969 = vpop.f32.mrb[0].mxu0
        %v1970 = vadd.f32 %v1456, %v1969
        %1971 = vdwg.mxu0
        %1972 = vmatprep.subr.bf16.mxu0 %v1684
        %1973 = vmatpush1.bf16.msra.mxu0 %v1683
        %1974 = vmatprep.subr.bf16.mxu0 %v1686
        %1975 = vmatpush1.bf16.msra.mxu0 %v1685
        %1976 = vmatprep.subr.bf16.mxu0 %v1688
        %1977 = vmatpush1.bf16.msra.mxu0 %v1687
        %1978 = vmatprep.subr.bf16.mxu0 %v1690
        %1979 = vmatpush1.bf16.msra.mxu0 %v1689
        %1980 = vmatprep.subr.bf16.mxu0 %v1692
        %1981 = vmatpush1.bf16.msra.mxu0 %v1691
        %1982 = vmatprep.subr.bf16.mxu0 %v1694
        %1983 = vmatpush1.bf16.msra.mxu0 %v1693
        %1984 = vmatprep.subr.bf16.mxu0 %v1696
        %1985 = vmatpush1.bf16.msra.mxu0 %v1695
        %1986 = vmatprep.subr.bf16.mxu0 %v1698
        %1987 = vmatpush1.bf16.msra.mxu0 %v1697
        %1988 = vmatprep.subr.bf16.mxu0 %v1700
        %1989 = vmatpush1.bf16.msra.mxu0 %v1699
        %1990 = vmatprep.subr.bf16.mxu0 %v1702
        %1991 = vmatpush1.bf16.msra.mxu0 %v1701
        %1992 = vmatprep.subr.bf16.mxu0 %v1704
        %1993 = vmatpush1.bf16.msra.mxu0 %v1703
        %1994 = vmatprep.subr.bf16.mxu0 %v1706
        %1995 = vmatpush1.bf16.msra.mxu0 %v1705
        %1996 = vmatprep.subr.bf16.mxu0 %v1708
        %1997 = vmatpush1.bf16.msra.mxu0 %v1707
        %1998 = vmatprep.subr.bf16.mxu0 %v1710
        %1999 = vmatpush1.bf16.msra.mxu0 %v1709
        %2000 = vmatprep.subr.bf16.mxu0 %v1712
        %2001 = vmatpush1.bf16.msra.mxu0 %v1711
        %2002 = vmatprep.subr.bf16.mxu0 %v1714
        %2003 = vmatpush1.bf16.msra.mxu0 %v1713
        %2004 = vmatprep.mubr.bf16.mxu0 %v1322
        %2005 = vmatmul.mubr.bf16.gmra.mrb[0].mxu0 %v1321
        %v2006 = vpop.f32.mrb[0].mxu0
        %v2007 = vadd.f32 %v1814, %v2006
        %v2008 = vpop.f32.mrb[0].mxu0
        %v2009 = vadd.f32 %v1816, %v2008
        %v2010 = vpop.f32.mrb[0].mxu0
        %v2011 = vadd.f32 %v1818, %v2010
        %v2012 = vpop.f32.mrb[0].mxu0
        %v2013 = vadd.f32 %v1820, %v2012
        %2014 = vmatprep.mubr.bf16.mxu0 %v1326
        %2015 = vmatmul.mubr.bf16.gmra.mrb[0].mxu0 %v1325
        %v2016 = vpop.f32.mrb[0].mxu0
        %v2017 = vadd.f32 %v1824, %v2016
        %v2018 = vpop.f32.mrb[0].mxu0
        %v2019 = vadd.f32 %v1826, %v2018
        %v2020 = vpop.f32.mrb[0].mxu0
        %v2021 = vadd.f32 %v1828, %v2020
        %v2022 = vpop.f32.mrb[0].mxu0
        %v2023 = vadd.f32 %v1830, %v2022
        %2024 = vmatprep.mubr.bf16.mxu0 %v1330
        %2025 = vmatmul.mubr.bf16.gmra.mrb[0].mxu0 %v1329
        %v2026 = vpop.f32.mrb[0].mxu0
        %v2027 = vadd.f32 %v1834, %v2026
        %v2028 = vpop.f32.mrb[0].mxu0
        %v2029 = vadd.f32 %v1836, %v2028
        %v2030 = vpop.f32.mrb[0].mxu0
        %v2031 = vadd.f32 %v1838, %v2030
        %v2032 = vpop.f32.mrb[0].mxu0
        %v2033 = vadd.f32 %v1840, %v2032
        %2034 = vmatprep.mubr.bf16.mxu0 %v1334
        %2035 = vmatmul.mubr.bf16.gmra.mrb[0].mxu0 %v1333
        %v2036 = vpop.f32.mrb[0].mxu0
        %v2037 = vadd.f32 %v1844, %v2036
        %v2038 = vpop.f32.mrb[0].mxu0
        %v2039 = vadd.f32 %v1846, %v2038
        %v2040 = vpop.f32.mrb[0].mxu0
        %v2041 = vadd.f32 %v1848, %v2040
        %v2042 = vpop.f32.mrb[0].mxu0
        %v2043 = vadd.f32 %v1850, %v2042
        %2044 = vmatprep.mubr.bf16.mxu0 %v1338
        %2045 = vmatmul.mubr.bf16.gmra.mrb[0].mxu0 %v1337
        %v2046 = vpop.f32.mrb[0].mxu0
        %v2047 = vadd.f32 %v1854, %v2046
        %v2048 = vpop.f32.mrb[0].mxu0
        %v2049 = vadd.f32 %v1856, %v2048
        %v2050 = vpop.f32.mrb[0].mxu0
        %v2051 = vadd.f32 %v1858, %v2050
        %v2052 = vpop.f32.mrb[0].mxu0
        %v2053 = vadd.f32 %v1860, %v2052
        %2054 = vmatprep.mubr.bf16.mxu0 %v1342
        %2055 = vmatmul.mubr.bf16.gmra.mrb[0].mxu0 %v1341
        %v2056 = vpop.f32.mrb[0].mxu0
        %v2057 = vadd.f32 %v1864, %v2056
        %v2058 = vpop.f32.mrb[0].mxu0
        %v2059 = vadd.f32 %v1866, %v2058
        %v2060 = vpop.f32.mrb[0].mxu0
        %v2061 = vadd.f32 %v1868, %v2060
        %v2062 = vpop.f32.mrb[0].mxu0
        %v2063 = vadd.f32 %v1870, %v2062
        %2064 = vmatprep.mubr.bf16.mxu0 %v1346
        %2065 = vmatmul.mubr.bf16.gmra.mrb[0].mxu0 %v1345
        %v2066 = vpop.f32.mrb[0].mxu0
        %v2067 = vadd.f32 %v1874, %v2066
        %v2068 = vpop.f32.mrb[0].mxu0
        %v2069 = vadd.f32 %v1876, %v2068
        %v2070 = vpop.f32.mrb[0].mxu0
        %v2071 = vadd.f32 %v1878, %v2070
        %v2072 = vpop.f32.mrb[0].mxu0
        %v2073 = vadd.f32 %v1880, %v2072
        %2074 = vmatprep.mubr.bf16.mxu0 %v1350
        %2075 = vmatmul.mubr.bf16.gmra.mrb[0].mxu0 %v1349
        %v2076 = vpop.f32.mrb[0].mxu0
        %v2077 = vadd.f32 %v1884, %v2076
        %v2078 = vpop.f32.mrb[0].mxu0
        %v2079 = vadd.f32 %v1886, %v2078
        %v2080 = vpop.f32.mrb[0].mxu0
        %v2081 = vadd.f32 %v1888, %v2080
        %v2082 = vpop.f32.mrb[0].mxu0
        %v2083 = vadd.f32 %v1890, %v2082
        %2084 = vmatprep.mubr.bf16.mxu0 %v1354
        %2085 = vmatmul.mubr.bf16.gmra.mrb[0].mxu0 %v1353
        %v2086 = vpop.f32.mrb[0].mxu0
        %v2087 = vadd.f32 %v1894, %v2086
        %v2088 = vpop.f32.mrb[0].mxu0
        %v2089 = vadd.f32 %v1896, %v2088
        %v2090 = vpop.f32.mrb[0].mxu0
        %v2091 = vadd.f32 %v1898, %v2090
        %v2092 = vpop.f32.mrb[0].mxu0
        %v2093 = vadd.f32 %v1900, %v2092
        %2094 = vmatprep.mubr.bf16.mxu0 %v1358
        %2095 = vmatmul.mubr.bf16.gmra.mrb[0].mxu0 %v1357
        %v2096 = vpop.f32.mrb[0].mxu0
        %v2097 = vadd.f32 %v1904, %v2096
        %v2098 = vpop.f32.mrb[0].mxu0
        %v2099 = vadd.f32 %v1906, %v2098
        %v2100 = vpop.f32.mrb[0].mxu0
        %v2101 = vadd.f32 %v1908, %v2100
        %v2102 = vpop.f32.mrb[0].mxu0
        %v2103 = vadd.f32 %v1910, %v2102
        %2104 = vmatprep.mubr.bf16.mxu0 %v1362
        %2105 = vmatmul.mubr.bf16.gmra.mrb[0].mxu0 %v1361
        %v2106 = vpop.f32.mrb[0].mxu0
        %v2107 = vadd.f32 %v1914, %v2106
        %v2108 = vpop.f32.mrb[0].mxu0
        %v2109 = vadd.f32 %v1916, %v2108
        %v2110 = vpop.f32.mrb[0].mxu0
        %v2111 = vadd.f32 %v1918, %v2110
        %v2112 = vpop.f32.mrb[0].mxu0
        %v2113 = vadd.f32 %v1920, %v2112
        %2114 = vmatprep.mubr.bf16.mxu0 %v1366
        %2115 = vmatmul.mubr.bf16.gmra.mrb[0].mxu0 %v1365
        %v2116 = vpop.f32.mrb[0].mxu0
        %v2117 = vadd.f32 %v1924, %v2116
        %v2118 = vpop.f32.mrb[0].mxu0
        %v2119 = vadd.f32 %v1926, %v2118
        %v2120 = vpop.f32.mrb[0].mxu0
        %v2121 = vadd.f32 %v1928, %v2120
        %v2122 = vpop.f32.mrb[0].mxu0
        %v2123 = vadd.f32 %v1930, %v2122
        %2124 = vmatprep.mubr.bf16.mxu0 %v1370
        %2125 = vmatmul.mubr.bf16.gmra.mrb[0].mxu0 %v1369
        %v2126 = vpop.f32.mrb[0].mxu0
        %v2127 = vadd.f32 %v1934, %v2126
        %v2128 = vpop.f32.mrb[0].mxu0
        %v2129 = vadd.f32 %v1936, %v2128
        %v2130 = vpop.f32.mrb[0].mxu0
        %v2131 = vadd.f32 %v1938, %v2130
        %v2132 = vpop.f32.mrb[0].mxu0
        %v2133 = vadd.f32 %v1940, %v2132
        %2134 = vmatprep.mubr.bf16.mxu0 %v1374
        %2135 = vmatmul.mubr.bf16.gmra.mrb[0].mxu0 %v1373
        %v2136 = vpop.f32.mrb[0].mxu0
        %v2137 = vadd.f32 %v1944, %v2136
        %v2138 = vpop.f32.mrb[0].mxu0
        %v2139 = vadd.f32 %v1946, %v2138
        %v2140 = vpop.f32.mrb[0].mxu0
        %v2141 = vadd.f32 %v1948, %v2140
        %v2142 = vpop.f32.mrb[0].mxu0
        %v2143 = vadd.f32 %v1950, %v2142
        %2144 = vmatprep.mubr.bf16.mxu0 %v1378
        %2145 = vmatmul.mubr.bf16.gmra.mrb[0].mxu0 %v1377
        %v2146 = vpop.f32.mrb[0].mxu0
        %v2147 = vadd.f32 %v1954, %v2146
        %v2148 = vpop.f32.mrb[0].mxu0
        %v2149 = vadd.f32 %v1956, %v2148
        %v2150 = vpop.f32.mrb[0].mxu0
        %v2151 = vadd.f32 %v1958, %v2150
        %v2152 = vpop.f32.mrb[0].mxu0
        %v2153 = vadd.f32 %v1960, %v2152
        %2154 = vmatprep.mubr.bf16.mxu0 %v1382
        %2155 = vmatmul.mubr.bf16.gmra.mrb[0].mxu0 %v1381
        %v2156 = vpop.f32.mrb[0].mxu0
        %v2157 = vadd.f32 %v1964, %v2156
        %v2158 = vpop.f32.mrb[0].mxu0
        %v2159 = vadd.f32 %v1966, %v2158
        %v2160 = vpop.f32.mrb[0].mxu0
        %v2161 = vadd.f32 %v1968, %v2160
        %v2162 = vpop.f32.mrb[0].mxu0
        %v2163 = vadd.f32 %v1970, %v2162
        %2164 = vdwg.mxu0
        %v2165 = vmax.f32 %v2007, 0.0
        %v2166 = vmax.f32 %v2009, 0.0
        %v2167 = vmax.f32 %v2011, 0.0
        %v2168 = vmax.f32 %v2013, 0.0
        %v2169 = vmax.f32 %v2017, 0.0
        %v2170 = vmax.f32 %v2019, 0.0
        %v2171 = vmax.f32 %v2021, 0.0
        %v2172 = vmax.f32 %v2023, 0.0
        %v2173 = vmax.f32 %v2027, 0.0
        %v2174 = vmax.f32 %v2029, 0.0
        %v2175 = vmax.f32 %v2031, 0.0
        %v2176 = vmax.f32 %v2033, 0.0
        %v2177 = vmax.f32 %v2037, 0.0
        %v2178 = vmax.f32 %v2039, 0.0
        %v2179 = vmax.f32 %v2041, 0.0
        %v2180 = vmax.f32 %v2043, 0.0
        %v2181 = vmax.f32 %v2047, 0.0
        %v2182 = vmax.f32 %v2049, 0.0
        %v2183 = vmax.f32 %v2051, 0.0
        %v2184 = vmax.f32 %v2053, 0.0
        %v2185 = vmax.f32 %v2057, 0.0
        %v2186 = vmax.f32 %v2059, 0.0
        %v2187 = vmax.f32 %v2061, 0.0
        %v2188 = vmax.f32 %v2063, 0.0
        %v2189 = vmax.f32 %v2067, 0.0
        %v2190 = vmax.f32 %v2069, 0.0
        %v2191 = vmax.f32 %v2071, 0.0
        %v2192 = vmax.f32 %v2073, 0.0
        %v2193 = vmax.f32 %v2077, 0.0
        %v2194 = vmax.f32 %v2079, 0.0
        %v2195 = vmax.f32 %v2081, 0.0
        %v2196 = vmax.f32 %v2083, 0.0
        %v2197 = vmax.f32 %v2087, 0.0
        %v2198 = vmax.f32 %v2089, 0.0
        %v2199 = vmax.f32 %v2091, 0.0
        %v2200 = vmax.f32 %v2093, 0.0
        %v2201 = vmax.f32 %v2097, 0.0
        %v2202 = vmax.f32 %v2099, 0.0
        %v2203 = vmax.f32 %v2101, 0.0
        %v2204 = vmax.f32 %v2103, 0.0
        %v2205 = vmax.f32 %v2107, 0.0
        %v2206 = vmax.f32 %v2109, 0.0
        %v2207 = vmax.f32 %v2111, 0.0
        %v2208 = vmax.f32 %v2113, 0.0
        %v2209 = vmax.f32 %v2117, 0.0
        %v2210 = vmax.f32 %v2119, 0.0
        %v2211 = vmax.f32 %v2121, 0.0
        %v2212 = vmax.f32 %v2123, 0.0
        %v2213 = vmax.f32 %v2127, 0.0
        %v2214 = vmax.f32 %v2129, 0.0
        %v2215 = vmax.f32 %v2131, 0.0
        %v2216 = vmax.f32 %v2133, 0.0
        %v2217 = vmax.f32 %v2137, 0.0
        %v2218 = vmax.f32 %v2139, 0.0
        %v2219 = vmax.f32 %v2141, 0.0
        %v2220 = vmax.f32 %v2143, 0.0
        %v2221 = vmax.f32 %v2147, 0.0
        %v2222 = vmax.f32 %v2149, 0.0
        %v2223 = vmax.f32 %v2151, 0.0
        %v2224 = vmax.f32 %v2153, 0.0
        %v2225 = vmax.f32 %v2157, 0.0
        %v2226 = vmax.f32 %v2159, 0.0
        %v2227 = vmax.f32 %v2161, 0.0
        %v2228 = vmax.f32 %v2163, 0.0
        %v2229 = vpack.c.bf16 %v2167, %v2165
        %v2230 = vpack.c.bf16 %v2168, %v2166
        %v2231 = vpack.c.bf16 %v2171, %v2169
        %v2232 = vpack.c.bf16 %v2172, %v2170
        %v2233 = vpack.c.bf16 %v2175, %v2173
        %v2234 = vpack.c.bf16 %v2176, %v2174
        %v2235 = vpack.c.bf16 %v2179, %v2177
        %v2236 = vpack.c.bf16 %v2180, %v2178
        %v2237 = vpack.c.bf16 %v2183, %v2181
        %v2238 = vpack.c.bf16 %v2184, %v2182
        %v2239 = vpack.c.bf16 %v2187, %v2185
        %v2240 = vpack.c.bf16 %v2188, %v2186
        %v2241 = vpack.c.bf16 %v2191, %v2189
        %v2242 = vpack.c.bf16 %v2192, %v2190
        %v2243 = vpack.c.bf16 %v2195, %v2193
        %v2244 = vpack.c.bf16 %v2196, %v2194
        %v2245 = vpack.c.bf16 %v2199, %v2197
        %v2246 = vpack.c.bf16 %v2200, %v2198
        %v2247 = vpack.c.bf16 %v2203, %v2201
        %v2248 = vpack.c.bf16 %v2204, %v2202
        %v2249 = vpack.c.bf16 %v2207, %v2205
        %v2250 = vpack.c.bf16 %v2208, %v2206
        %v2251 = vpack.c.bf16 %v2211, %v2209
        %v2252 = vpack.c.bf16 %v2212, %v2210
        %v2253 = vpack.c.bf16 %v2215, %v2213
        %v2254 = vpack.c.bf16 %v2216, %v2214
        %v2255 = vpack.c.bf16 %v2219, %v2217
        %v2256 = vpack.c.bf16 %v2220, %v2218
        %v2257 = vpack.c.bf16 %v2223, %v2221
        %v2258 = vpack.c.bf16 %v2224, %v2222
        %v2259 = vpack.c.bf16 %v2227, %v2225
        %v2260 = vpack.c.bf16 %v2228, %v2226
        %v2261 = vld [vmem:[%s6] sm:$0xff]
        %v2262 = vld [vmem:[%s6 + $0x8] sm:$0xff]
        %v2263 = vld [vmem:[%s6 + $0x10] sm:$0xff]
        %v2264 = vld [vmem:[%s6 + $0x18] sm:$0xff]
        %v2265 = vld [vmem:[%s6 + $0x20] sm:$0xff]
        %v2266 = vld [vmem:[%s6 + $0x28] sm:$0xff]
        %v2267 = vld [vmem:[%s6 + $0x30] sm:$0xff]
        %v2268 = vld [vmem:[%s6 + $0x38] sm:$0xff]
        %v2269 = vld [vmem:[%s6 + $0x40] sm:$0xff]
        %v2270 = vld [vmem:[%s6 + $0x48] sm:$0xff]
        %v2271 = vld [vmem:[%s6 + $0x50] sm:$0xff]
        %v2272 = vld [vmem:[%s6 + $0x58] sm:$0xff]
        %v2273 = vld [vmem:[%s6 + $0x60] sm:$0xff]
        %v2274 = vld [vmem:[%s6 + $0x68] sm:$0xff]
        %v2275 = vld [vmem:[%s6 + $0x70] sm:$0xff]
        %v2276 = vld [vmem:[%s6 + $0x78] sm:$0xff]
        %v2277 = vld [vmem:[%s6 + $0x80] sm:$0xff]
        %v2278 = vld [vmem:[%s6 + $0x88] sm:$0xff]
        %v2279 = vld [vmem:[%s6 + $0x90] sm:$0xff]
        %v2280 = vld [vmem:[%s6 + $0x98] sm:$0xff]
        %v2281 = vld [vmem:[%s6 + $0xa0] sm:$0xff]
        %v2282 = vld [vmem:[%s6 + $0xa8] sm:$0xff]
        %v2283 = vld [vmem:[%s6 + $0xb0] sm:$0xff]
        %v2284 = vld [vmem:[%s6 + $0xb8] sm:$0xff]
        %v2285 = vld [vmem:[%s6 + $0xc0] sm:$0xff]
        %v2286 = vld [vmem:[%s6 + $0xc8] sm:$0xff]
        %v2287 = vld [vmem:[%s6 + $0xd0] sm:$0xff]
        %v2288 = vld [vmem:[%s6 + $0xd8] sm:$0xff]
        %v2289 = vld [vmem:[%s6 + $0xe0] sm:$0xff]
        %v2290 = vld [vmem:[%s6 + $0xe8] sm:$0xff]
        %v2291 = vld [vmem:[%s6 + $0xf0] sm:$0xff]
        %v2292 = vld [vmem:[%s6 + $0xf8] sm:$0xff]
        %v2293 = vld [vmem:[%s7] sm:$0x3]
        %v2295 = vlaneseq
        %v2296 = vshrl.u32 %v2295, 7
        %v2297 = vsub.s32 0, %v2296
        %v2298 = vrot.slane %v2293, %v2297
        %v2299 = vlaneseq
        %v2300 = vshrl.u32 %v2299, 7
        %v2301 = vsub.s32 1, %v2300
        %v2302 = vrot.slane %v2293, %v2301
        %v2337 = vunpack.c.l.b16 %v2261
        %v2338 = vunpack.c.h.b16 %v2261
        %v2339 = vunpack.c.l.b16 %v2262
        %v2340 = vunpack.c.h.b16 %v2262
        %v2341 = vunpack.c.l.b16 %v2263
        %v2342 = vunpack.c.h.b16 %v2263
        %v2343 = vunpack.c.l.b16 %v2264
        %v2344 = vunpack.c.h.b16 %v2264
        %v2345 = vunpack.c.l.b16 %v2265
        %v2346 = vunpack.c.h.b16 %v2265
        %v2347 = vunpack.c.l.b16 %v2266
        %v2348 = vunpack.c.h.b16 %v2266
        %v2349 = vunpack.c.l.b16 %v2267
        %v2350 = vunpack.c.h.b16 %v2267
        %v2351 = vunpack.c.l.b16 %v2268
        %v2352 = vunpack.c.h.b16 %v2268
        %v2353 = vunpack.c.l.b16 %v2269
        %v2354 = vunpack.c.h.b16 %v2269
        %v2355 = vunpack.c.l.b16 %v2270
        %v2356 = vunpack.c.h.b16 %v2270
        %v2357 = vunpack.c.l.b16 %v2271
        %v2358 = vunpack.c.h.b16 %v2271
        %v2359 = vunpack.c.l.b16 %v2272
        %v2360 = vunpack.c.h.b16 %v2272
        %v2361 = vunpack.c.l.b16 %v2273
        %v2362 = vunpack.c.h.b16 %v2273
        %v2363 = vunpack.c.l.b16 %v2274
        %v2364 = vunpack.c.h.b16 %v2274
        %v2365 = vunpack.c.l.b16 %v2275
        %v2366 = vunpack.c.h.b16 %v2275
        %v2367 = vunpack.c.l.b16 %v2276
        %v2368 = vunpack.c.h.b16 %v2276
        %v2369 = vunpack.c.l.b16 %v2277
        %v2370 = vunpack.c.h.b16 %v2277
        %v2371 = vunpack.c.l.b16 %v2278
        %v2372 = vunpack.c.h.b16 %v2278
        %v2373 = vunpack.c.l.b16 %v2279
        %v2374 = vunpack.c.h.b16 %v2279
        %v2375 = vunpack.c.l.b16 %v2280
        %v2376 = vunpack.c.h.b16 %v2280
        %v2377 = vunpack.c.l.b16 %v2281
        %v2378 = vunpack.c.h.b16 %v2281
        %v2379 = vunpack.c.l.b16 %v2282
        %v2380 = vunpack.c.h.b16 %v2282
        %v2381 = vunpack.c.l.b16 %v2283
        %v2382 = vunpack.c.h.b16 %v2283
        %v2383 = vunpack.c.l.b16 %v2284
        %v2384 = vunpack.c.h.b16 %v2284
        %v2385 = vunpack.c.l.b16 %v2285
        %v2386 = vunpack.c.h.b16 %v2285
        %v2387 = vunpack.c.l.b16 %v2286
        %v2388 = vunpack.c.h.b16 %v2286
        %v2389 = vunpack.c.l.b16 %v2287
        %v2390 = vunpack.c.h.b16 %v2287
        %v2391 = vunpack.c.l.b16 %v2288
        %v2392 = vunpack.c.h.b16 %v2288
        %v2393 = vunpack.c.l.b16 %v2289
        %v2394 = vunpack.c.h.b16 %v2289
        %v2395 = vunpack.c.l.b16 %v2290
        %v2396 = vunpack.c.h.b16 %v2290
        %v2397 = vunpack.c.l.b16 %v2291
        %v2398 = vunpack.c.h.b16 %v2291
        %v2399 = vunpack.c.l.b16 %v2292
        %v2400 = vunpack.c.h.b16 %v2292
        %v2401 = vpack.c.b16 %v2339, %v2337
        %v2402 = vpack.c.b16 %v2340, %v2338
        %v2403 = vpack.c.b16 %v2343, %v2341
        %v2404 = vpack.c.b16 %v2344, %v2342
        %v2405 = vpack.c.b16 %v2347, %v2345
        %v2406 = vpack.c.b16 %v2348, %v2346
        %v2407 = vpack.c.b16 %v2351, %v2349
        %v2408 = vpack.c.b16 %v2352, %v2350
        %v2409 = vpack.c.b16 %v2355, %v2353
        %v2410 = vpack.c.b16 %v2356, %v2354
        %v2411 = vpack.c.b16 %v2359, %v2357
        %v2412 = vpack.c.b16 %v2360, %v2358
        %v2413 = vpack.c.b16 %v2363, %v2361
        %v2414 = vpack.c.b16 %v2364, %v2362
        %v2415 = vpack.c.b16 %v2367, %v2365
        %v2416 = vpack.c.b16 %v2368, %v2366
        %v2417 = vpack.c.b16 %v2371, %v2369
        %v2418 = vpack.c.b16 %v2372, %v2370
        %v2419 = vpack.c.b16 %v2375, %v2373
        %v2420 = vpack.c.b16 %v2376, %v2374
        %v2421 = vpack.c.b16 %v2379, %v2377
        %v2422 = vpack.c.b16 %v2380, %v2378
        %v2423 = vpack.c.b16 %v2383, %v2381
        %v2424 = vpack.c.b16 %v2384, %v2382
        %v2425 = vpack.c.b16 %v2387, %v2385
        %v2426 = vpack.c.b16 %v2388, %v2386
        %v2427 = vpack.c.b16 %v2391, %v2389
        %v2428 = vpack.c.b16 %v2392, %v2390
        %v2429 = vpack.c.b16 %v2395, %v2393
        %v2430 = vpack.c.b16 %v2396, %v2394
        %v2431 = vpack.c.b16 %v2399, %v2397
        %v2432 = vpack.c.b16 %v2400, %v2398
        %2465 = vmatprep.subr.bf16.mxu0 %v2402
        %2466 = vmatpush1.bf16.msra.mxu0 %v2401
        %2467 = vmatprep.subr.bf16.mxu0 %v2404
        %2468 = vmatpush1.bf16.msra.mxu0 %v2403
        %2469 = vmatprep.subr.bf16.mxu0 %v2406
        %2470 = vmatpush1.bf16.msra.mxu0 %v2405
        %2471 = vmatprep.subr.bf16.mxu0 %v2408
        %2472 = vmatpush1.bf16.msra.mxu0 %v2407
        %2473 = vmatprep.subr.bf16.mxu0 %v2410
        %2474 = vmatpush1.bf16.msra.mxu0 %v2409
        %2475 = vmatprep.subr.bf16.mxu0 %v2412
        %2476 = vmatpush1.bf16.msra.mxu0 %v2411
        %2477 = vmatprep.subr.bf16.mxu0 %v2414
        %2478 = vmatpush1.bf16.msra.mxu0 %v2413
        %2479 = vmatprep.subr.bf16.mxu0 %v2416
        %2480 = vmatpush1.bf16.msra.mxu0 %v2415
        %2481 = vmatprep.subr.bf16.mxu0 %v2418
        %2482 = vmatpush1.bf16.msra.mxu0 %v2417
        %2483 = vmatprep.subr.bf16.mxu0 %v2420
        %2484 = vmatpush1.bf16.msra.mxu0 %v2419
        %2485 = vmatprep.subr.bf16.mxu0 %v2422
        %2486 = vmatpush1.bf16.msra.mxu0 %v2421
        %2487 = vmatprep.subr.bf16.mxu0 %v2424
        %2488 = vmatpush1.bf16.msra.mxu0 %v2423
        %2489 = vmatprep.subr.bf16.mxu0 %v2426
        %2490 = vmatpush1.bf16.msra.mxu0 %v2425
        %2491 = vmatprep.subr.bf16.mxu0 %v2428
        %2492 = vmatpush1.bf16.msra.mxu0 %v2427
        %2493 = vmatprep.subr.bf16.mxu0 %v2430
        %2494 = vmatpush1.bf16.msra.mxu0 %v2429
        %2495 = vmatprep.subr.bf16.mxu0 %v2432
        %2496 = vmatpush1.bf16.msra.mxu0 %v2431
        %2497 = vmatprep.mubr.bf16.mxu0 %v2230
        %2498 = vmatmul.mubr.bf16.gmra.mrb[0].mxu0 %v2229
        %v2499 = vpop.f32.mrb[0].mxu0
        %v2500 = vadd.f32 %v2298, %v2499
        %v2501 = vpop.f32.mrb[0].mxu0
        %v2502 = vadd.f32 %v2302, %v2501
        %v2503 = vpop.f32.mrb[0].mxu0
        %v2504 = vadd.f32 %v2298, %v2503
        %v2505 = vpop.f32.mrb[0].mxu0
        %v2506 = vadd.f32 %v2302, %v2505
        %2507 = vmatprep.mubr.bf16.mxu0 %v2232
        %2508 = vmatmul.mubr.bf16.gmra.mrb[0].mxu0 %v2231
        %v2509 = vpop.f32.mrb[0].mxu0
        %v2510 = vadd.f32 %v2298, %v2509
        %v2511 = vpop.f32.mrb[0].mxu0
        %v2512 = vadd.f32 %v2302, %v2511
        %v2513 = vpop.f32.mrb[0].mxu0
        %v2514 = vadd.f32 %v2298, %v2513
        %v2515 = vpop.f32.mrb[0].mxu0
        %v2516 = vadd.f32 %v2302, %v2515
        %2517 = vmatprep.mubr.bf16.mxu0 %v2234
        %2518 = vmatmul.mubr.bf16.gmra.mrb[0].mxu0 %v2233
        %v2519 = vpop.f32.mrb[0].mxu0
        %v2520 = vadd.f32 %v2298, %v2519
        %v2521 = vpop.f32.mrb[0].mxu0
        %v2522 = vadd.f32 %v2302, %v2521
        %v2523 = vpop.f32.mrb[0].mxu0
        %v2524 = vadd.f32 %v2298, %v2523
        %v2525 = vpop.f32.mrb[0].mxu0
        %v2526 = vadd.f32 %v2302, %v2525
        %2527 = vmatprep.mubr.bf16.mxu0 %v2236
        %2528 = vmatmul.mubr.bf16.gmra.mrb[0].mxu0 %v2235
        %v2529 = vpop.f32.mrb[0].mxu0
        %v2530 = vadd.f32 %v2298, %v2529
        %v2531 = vpop.f32.mrb[0].mxu0
        %v2532 = vadd.f32 %v2302, %v2531
        %v2533 = vpop.f32.mrb[0].mxu0
        %v2534 = vadd.f32 %v2298, %v2533
        %v2535 = vpop.f32.mrb[0].mxu0
        %v2536 = vadd.f32 %v2302, %v2535
        %2537 = vmatprep.mubr.bf16.mxu0 %v2238
        %2538 = vmatmul.mubr.bf16.gmra.mrb[0].mxu0 %v2237
        %v2539 = vpop.f32.mrb[0].mxu0
        %v2540 = vadd.f32 %v2298, %v2539
        %v2541 = vpop.f32.mrb[0].mxu0
        %v2542 = vadd.f32 %v2302, %v2541
        %v2543 = vpop.f32.mrb[0].mxu0
        %v2544 = vadd.f32 %v2298, %v2543
        %v2545 = vpop.f32.mrb[0].mxu0
        %v2546 = vadd.f32 %v2302, %v2545
        %2547 = vmatprep.mubr.bf16.mxu0 %v2240
        %2548 = vmatmul.mubr.bf16.gmra.mrb[0].mxu0 %v2239
        %v2549 = vpop.f32.mrb[0].mxu0
        %v2550 = vadd.f32 %v2298, %v2549
        %v2551 = vpop.f32.mrb[0].mxu0
        %v2552 = vadd.f32 %v2302, %v2551
        %v2553 = vpop.f32.mrb[0].mxu0
        %v2554 = vadd.f32 %v2298, %v2553
        %v2555 = vpop.f32.mrb[0].mxu0
        %v2556 = vadd.f32 %v2302, %v2555
        %2557 = vmatprep.mubr.bf16.mxu0 %v2242
        %2558 = vmatmul.mubr.bf16.gmra.mrb[0].mxu0 %v2241
        %v2559 = vpop.f32.mrb[0].mxu0
        %v2560 = vadd.f32 %v2298, %v2559
        %v2561 = vpop.f32.mrb[0].mxu0
        %v2562 = vadd.f32 %v2302, %v2561
        %v2563 = vpop.f32.mrb[0].mxu0
        %v2564 = vadd.f32 %v2298, %v2563
        %v2565 = vpop.f32.mrb[0].mxu0
        %v2566 = vadd.f32 %v2302, %v2565
        %2567 = vmatprep.mubr.bf16.mxu0 %v2244
        %2568 = vmatmul.mubr.bf16.gmra.mrb[0].mxu0 %v2243
        %v2569 = vpop.f32.mrb[0].mxu0
        %v2570 = vadd.f32 %v2298, %v2569
        %v2571 = vpop.f32.mrb[0].mxu0
        %v2572 = vadd.f32 %v2302, %v2571
        %v2573 = vpop.f32.mrb[0].mxu0
        %v2574 = vadd.f32 %v2298, %v2573
        %v2575 = vpop.f32.mrb[0].mxu0
        %v2576 = vadd.f32 %v2302, %v2575
        %2577 = vmatprep.mubr.bf16.mxu0 %v2246
        %2578 = vmatmul.mubr.bf16.gmra.mrb[0].mxu0 %v2245
        %v2579 = vpop.f32.mrb[0].mxu0
        %v2580 = vadd.f32 %v2298, %v2579
        %v2581 = vpop.f32.mrb[0].mxu0
        %v2582 = vadd.f32 %v2302, %v2581
        %v2583 = vpop.f32.mrb[0].mxu0
        %v2584 = vadd.f32 %v2298, %v2583
        %v2585 = vpop.f32.mrb[0].mxu0
        %v2586 = vadd.f32 %v2302, %v2585
        %2587 = vmatprep.mubr.bf16.mxu0 %v2248
        %2588 = vmatmul.mubr.bf16.gmra.mrb[0].mxu0 %v2247
        %v2589 = vpop.f32.mrb[0].mxu0
        %v2590 = vadd.f32 %v2298, %v2589
        %v2591 = vpop.f32.mrb[0].mxu0
        %v2592 = vadd.f32 %v2302, %v2591
        %v2593 = vpop.f32.mrb[0].mxu0
        %v2594 = vadd.f32 %v2298, %v2593
        %v2595 = vpop.f32.mrb[0].mxu0
        %v2596 = vadd.f32 %v2302, %v2595
        %2597 = vmatprep.mubr.bf16.mxu0 %v2250
        %2598 = vmatmul.mubr.bf16.gmra.mrb[0].mxu0 %v2249
        %v2599 = vpop.f32.mrb[0].mxu0
        %v2600 = vadd.f32 %v2298, %v2599
        %v2601 = vpop.f32.mrb[0].mxu0
        %v2602 = vadd.f32 %v2302, %v2601
        %v2603 = vpop.f32.mrb[0].mxu0
        %v2604 = vadd.f32 %v2298, %v2603
        %v2605 = vpop.f32.mrb[0].mxu0
        %v2606 = vadd.f32 %v2302, %v2605
        %2607 = vmatprep.mubr.bf16.mxu0 %v2252
        %2608 = vmatmul.mubr.bf16.gmra.mrb[0].mxu0 %v2251
        %v2609 = vpop.f32.mrb[0].mxu0
        %v2610 = vadd.f32 %v2298, %v2609
        %v2611 = vpop.f32.mrb[0].mxu0
        %v2612 = vadd.f32 %v2302, %v2611
        %v2613 = vpop.f32.mrb[0].mxu0
        %v2614 = vadd.f32 %v2298, %v2613
        %v2615 = vpop.f32.mrb[0].mxu0
        %v2616 = vadd.f32 %v2302, %v2615
        %2617 = vmatprep.mubr.bf16.mxu0 %v2254
        %2618 = vmatmul.mubr.bf16.gmra.mrb[0].mxu0 %v2253
        %v2619 = vpop.f32.mrb[0].mxu0
        %v2620 = vadd.f32 %v2298, %v2619
        %v2621 = vpop.f32.mrb[0].mxu0
        %v2622 = vadd.f32 %v2302, %v2621
        %v2623 = vpop.f32.mrb[0].mxu0
        %v2624 = vadd.f32 %v2298, %v2623
        %v2625 = vpop.f32.mrb[0].mxu0
        %v2626 = vadd.f32 %v2302, %v2625
        %2627 = vmatprep.mubr.bf16.mxu0 %v2256
        %2628 = vmatmul.mubr.bf16.gmra.mrb[0].mxu0 %v2255
        %v2629 = vpop.f32.mrb[0].mxu0
        %v2630 = vadd.f32 %v2298, %v2629
        %v2631 = vpop.f32.mrb[0].mxu0
        %v2632 = vadd.f32 %v2302, %v2631
        %v2633 = vpop.f32.mrb[0].mxu0
        %v2634 = vadd.f32 %v2298, %v2633
        %v2635 = vpop.f32.mrb[0].mxu0
        %v2636 = vadd.f32 %v2302, %v2635
        %2637 = vmatprep.mubr.bf16.mxu0 %v2258
        %2638 = vmatmul.mubr.bf16.gmra.mrb[0].mxu0 %v2257
        %v2639 = vpop.f32.mrb[0].mxu0
        %v2640 = vadd.f32 %v2298, %v2639
        %v2641 = vpop.f32.mrb[0].mxu0
        %v2642 = vadd.f32 %v2302, %v2641
        %v2643 = vpop.f32.mrb[0].mxu0
        %v2644 = vadd.f32 %v2298, %v2643
        %v2645 = vpop.f32.mrb[0].mxu0
        %v2646 = vadd.f32 %v2302, %v2645
        %2647 = vmatprep.mubr.bf16.mxu0 %v2260
        %2648 = vmatmul.mubr.bf16.gmra.mrb[0].mxu0 %v2259
        %v2649 = vpop.f32.mrb[0].mxu0
        %v2650 = vadd.f32 %v2298, %v2649
        %v2651 = vpop.f32.mrb[0].mxu0
        %v2652 = vadd.f32 %v2302, %v2651
        %v2653 = vpop.f32.mrb[0].mxu0
        %v2654 = vadd.f32 %v2298, %v2653
        %v2655 = vpop.f32.mrb[0].mxu0
        %v2656 = vadd.f32 %v2302, %v2655
        %2657 = vdwg.mxu0
        %2658 = vst [vmem:[%s569] sm:$0xff] %v2500
        %2659 = vst [vmem:[%s569 + $0x8] sm:$0xff] %v2502
        %2660 = vst [vmem:[%s569 + $0x10] sm:$0xff] %v2504
        %2661 = vst [vmem:[%s569 + $0x18] sm:$0xff] %v2506
        %2662 = vst [vmem:[%s569 + $0x20] sm:$0xff] %v2510
        %2663 = vst [vmem:[%s569 + $0x28] sm:$0xff] %v2512
        %2664 = vst [vmem:[%s569 + $0x30] sm:$0xff] %v2514
        %2665 = vst [vmem:[%s569 + $0x38] sm:$0xff] %v2516
        %2666 = vst [vmem:[%s569 + $0x40] sm:$0xff] %v2520
        %2667 = vst [vmem:[%s569 + $0x48] sm:$0xff] %v2522
        %2668 = vst [vmem:[%s569 + $0x50] sm:$0xff] %v2524
        %2669 = vst [vmem:[%s569 + $0x58] sm:$0xff] %v2526
        %2670 = vst [vmem:[%s569 + $0x60] sm:$0xff] %v2530
        %2671 = vst [vmem:[%s569 + $0x68] sm:$0xff] %v2532
        %2672 = vst [vmem:[%s569 + $0x70] sm:$0xff] %v2534
        %2673 = vst [vmem:[%s569 + $0x78] sm:$0xff] %v2536
        %2674 = vst [vmem:[%s569 + $0x80] sm:$0xff] %v2540
        %2675 = vst [vmem:[%s569 + $0x88] sm:$0xff] %v2542
        %2676 = vst [vmem:[%s569 + $0x90] sm:$0xff] %v2544
        %2677 = vst [vmem:[%s569 + $0x98] sm:$0xff] %v2546
        %2678 = vst [vmem:[%s569 + $0xa0] sm:$0xff] %v2550
        %2679 = vst [vmem:[%s569 + $0xa8] sm:$0xff] %v2552
        %2680 = vst [vmem:[%s569 + $0xb0] sm:$0xff] %v2554
        %2681 = vst [vmem:[%s569 + $0xb8] sm:$0xff] %v2556
        %2682 = vst [vmem:[%s569 + $0xc0] sm:$0xff] %v2560
        %2683 = vst [vmem:[%s569 + $0xc8] sm:$0xff] %v2562
        %2684 = vst [vmem:[%s569 + $0xd0] sm:$0xff] %v2564
        %2685 = vst [vmem:[%s569 + $0xd8] sm:$0xff] %v2566
        %2686 = vst [vmem:[%s569 + $0xe0] sm:$0xff] %v2570
        %2687 = vst [vmem:[%s569 + $0xe8] sm:$0xff] %v2572
        %2688 = vst [vmem:[%s569 + $0xf0] sm:$0xff] %v2574
        %2689 = vst [vmem:[%s569 + $0xf8] sm:$0xff] %v2576
        %2690 = vst [vmem:[%s569 + $0x100] sm:$0xff] %v2580
        %2691 = vst [vmem:[%s569 + $0x108] sm:$0xff] %v2582
        %2692 = vst [vmem:[%s569 + $0x110] sm:$0xff] %v2584
        %2693 = vst [vmem:[%s569 + $0x118] sm:$0xff] %v2586
        %2694 = vst [vmem:[%s569 + $0x120] sm:$0xff] %v2590
        %2695 = vst [vmem:[%s569 + $0x128] sm:$0xff] %v2592
        %2696 = vst [vmem:[%s569 + $0x130] sm:$0xff] %v2594
        %2697 = vst [vmem:[%s569 + $0x138] sm:$0xff] %v2596
        %2698 = vst [vmem:[%s569 + $0x140] sm:$0xff] %v2600
        %2699 = vst [vmem:[%s569 + $0x148] sm:$0xff] %v2602
        %2700 = vst [vmem:[%s569 + $0x150] sm:$0xff] %v2604
        %2701 = vst [vmem:[%s569 + $0x158] sm:$0xff] %v2606
        %2702 = vst [vmem:[%s569 + $0x160] sm:$0xff] %v2610
        %2703 = vst [vmem:[%s569 + $0x168] sm:$0xff] %v2612
        %2704 = vst [vmem:[%s569 + $0x170] sm:$0xff] %v2614
        %2705 = vst [vmem:[%s569 + $0x178] sm:$0xff] %v2616
        %2706 = vst [vmem:[%s569 + $0x180] sm:$0xff] %v2620
        %2707 = vst [vmem:[%s569 + $0x188] sm:$0xff] %v2622
        %2708 = vst [vmem:[%s569 + $0x190] sm:$0xff] %v2624
        %2709 = vst [vmem:[%s569 + $0x198] sm:$0xff] %v2626
        %2710 = vst [vmem:[%s569 + $0x1a0] sm:$0xff] %v2630
        %2711 = vst [vmem:[%s569 + $0x1a8] sm:$0xff] %v2632
        %2712 = vst [vmem:[%s569 + $0x1b0] sm:$0xff] %v2634
        %2713 = vst [vmem:[%s569 + $0x1b8] sm:$0xff] %v2636
        %2714 = vst [vmem:[%s569 + $0x1c0] sm:$0xff] %v2640
        %2715 = vst [vmem:[%s569 + $0x1c8] sm:$0xff] %v2642
        %2716 = vst [vmem:[%s569 + $0x1d0] sm:$0xff] %v2644
        %2717 = vst [vmem:[%s569 + $0x1d8] sm:$0xff] %v2646
        %2718 = vst [vmem:[%s569 + $0x1e0] sm:$0xff] %v2650
        %2719 = vst [vmem:[%s569 + $0x1e8] sm:$0xff] %v2652
        %2720 = vst [vmem:[%s569 + $0x1f0] sm:$0xff] %v2654
        %2721 = vst [vmem:[%s569 + $0x1f8] sm:$0xff] %v2656
        %v2722 = vmul.f32 %v2502, 0.5
        %v2723 = vmul.f32 %v2506, 0.5
        %v2724 = vmul.f32 %v2512, 0.5
        %v2725 = vmul.f32 %v2516, 0.5
        %v2726 = vmul.f32 %v2522, 0.5
        %v2727 = vmul.f32 %v2526, 0.5
        %v2728 = vmul.f32 %v2532, 0.5
        %v2729 = vmul.f32 %v2536, 0.5
        %v2730 = vmul.f32 %v2542, 0.5
        %v2731 = vmul.f32 %v2546, 0.5
        %v2732 = vmul.f32 %v2552, 0.5
        %v2733 = vmul.f32 %v2556, 0.5
        %v2734 = vmul.f32 %v2562, 0.5
        %v2735 = vmul.f32 %v2566, 0.5
        %v2736 = vmul.f32 %v2572, 0.5
        %v2737 = vmul.f32 %v2576, 0.5
        %v2738 = vmul.f32 %v2582, 0.5
        %v2739 = vmul.f32 %v2586, 0.5
        %v2740 = vmul.f32 %v2592, 0.5
        %v2741 = vmul.f32 %v2596, 0.5
        %v2742 = vmul.f32 %v2602, 0.5
        %v2743 = vmul.f32 %v2606, 0.5
        %v2744 = vmul.f32 %v2612, 0.5
        %v2745 = vmul.f32 %v2616, 0.5
        %v2746 = vmul.f32 %v2622, 0.5
        %v2747 = vmul.f32 %v2626, 0.5
        %v2748 = vmul.f32 %v2632, 0.5
        %v2749 = vmul.f32 %v2636, 0.5
        %v2750 = vmul.f32 %v2642, 0.5
        %v2751 = vmul.f32 %v2646, 0.5
        %v2752 = vmul.f32 %v2652, 0.5
        %v2753 = vmul.f32 %v2656, 0.5
        %v2754 = vmul.f32 %v2722, 1.442695
        %v2755 = vpow.pop %v2754
        %v2756 = vmul.f32 %v2723, 1.442695
        %v2757 = vpow.pop %v2756
        %v2758 = vmul.f32 %v2724, 1.442695
        %v2759 = vpow.pop %v2758
        %v2760 = vmul.f32 %v2725, 1.442695
        %v2761 = vpow.pop %v2760
        %v2762 = vmul.f32 %v2726, 1.442695
        %v2763 = vpow.pop %v2762
        %v2764 = vmul.f32 %v2727, 1.442695
        %v2765 = vpow.pop %v2764
        %v2766 = vmul.f32 %v2728, 1.442695
        %v2767 = vpow.pop %v2766
        %v2768 = vmul.f32 %v2729, 1.442695
        %v2769 = vpow.pop %v2768
        %v2770 = vmul.f32 %v2730, 1.442695
        %v2771 = vpow.pop %v2770
        %v2772 = vmul.f32 %v2731, 1.442695
        %v2773 = vpow.pop %v2772
        %v2774 = vmul.f32 %v2732, 1.442695
        %v2775 = vpow.pop %v2774
        %v2776 = vmul.f32 %v2733, 1.442695
        %v2777 = vpow.pop %v2776
        %v2778 = vmul.f32 %v2734, 1.442695
        %v2779 = vpow.pop %v2778
        %v2780 = vmul.f32 %v2735, 1.442695
        %v2781 = vpow.pop %v2780
        %v2782 = vmul.f32 %v2736, 1.442695
        %v2783 = vpow.pop %v2782
        %v2784 = vmul.f32 %v2737, 1.442695
        %v2785 = vpow.pop %v2784
        %v2786 = vmul.f32 %v2738, 1.442695
        %v2787 = vpow.pop %v2786
        %v2788 = vmul.f32 %v2739, 1.442695
        %v2789 = vpow.pop %v2788
        %v2790 = vmul.f32 %v2740, 1.442695
        %v2791 = vpow.pop %v2790
        %v2792 = vmul.f32 %v2741, 1.442695
        %v2793 = vpow.pop %v2792
        %v2794 = vmul.f32 %v2742, 1.442695
        %v2795 = vpow.pop %v2794
        %v2796 = vmul.f32 %v2743, 1.442695
        %v2797 = vpow.pop %v2796
        %v2798 = vmul.f32 %v2744, 1.442695
        %v2799 = vpow.pop %v2798
        %v2800 = vmul.f32 %v2745, 1.442695
        %v2801 = vpow.pop %v2800
        %v2802 = vmul.f32 %v2746, 1.442695
        %v2803 = vpow.pop %v2802
        %v2804 = vmul.f32 %v2747, 1.442695
        %v2805 = vpow.pop %v2804
        %v2806 = vmul.f32 %v2748, 1.442695
        %v2807 = vpow.pop %v2806
        %v2808 = vmul.f32 %v2749, 1.442695
        %v2809 = vpow.pop %v2808
        %v2810 = vmul.f32 %v2750, 1.442695
        %v2811 = vpow.pop %v2810
        %v2812 = vmul.f32 %v2751, 1.442695
        %v2813 = vpow.pop %v2812
        %v2814 = vmul.f32 %v2752, 1.442695
        %v2815 = vpow.pop %v2814
        %v2816 = vmul.f32 %v2753, 1.442695
        %v2817 = vpow.pop %v2816
        %v2818 = vld [vmem:[%s580] sm:$0xff]
        %v2819 = vld [vmem:[%s580 + $0x8] sm:$0xff]
        %v2820 = vld [vmem:[%s580 + $0x10] sm:$0xff]
        %v2821 = vld [vmem:[%s580 + $0x18] sm:$0xff]
        %v2822 = vld [vmem:[%s580 + $0x20] sm:$0xff]
        %v2823 = vld [vmem:[%s580 + $0x28] sm:$0xff]
        %v2824 = vld [vmem:[%s580 + $0x30] sm:$0xff]
        %v2825 = vld [vmem:[%s580 + $0x38] sm:$0xff]
        %v2826 = vld [vmem:[%s580 + $0x40] sm:$0xff]
        %v2827 = vld [vmem:[%s580 + $0x48] sm:$0xff]
        %v2828 = vld [vmem:[%s580 + $0x50] sm:$0xff]
        %v2829 = vld [vmem:[%s580 + $0x58] sm:$0xff]
        %v2830 = vld [vmem:[%s580 + $0x60] sm:$0xff]
        %v2831 = vld [vmem:[%s580 + $0x68] sm:$0xff]
        %v2832 = vld [vmem:[%s580 + $0x70] sm:$0xff]
        %v2833 = vld [vmem:[%s580 + $0x78] sm:$0xff]
        %v2834 = vld [vmem:[%s580 + $0x80] sm:$0xff]
        %v2835 = vld [vmem:[%s580 + $0x88] sm:$0xff]
        %v2836 = vld [vmem:[%s580 + $0x90] sm:$0xff]
        %v2837 = vld [vmem:[%s580 + $0x98] sm:$0xff]
        %v2838 = vld [vmem:[%s580 + $0xa0] sm:$0xff]
        %v2839 = vld [vmem:[%s580 + $0xa8] sm:$0xff]
        %v2840 = vld [vmem:[%s580 + $0xb0] sm:$0xff]
        %v2841 = vld [vmem:[%s580 + $0xb8] sm:$0xff]
        %v2842 = vld [vmem:[%s580 + $0xc0] sm:$0xff]
        %v2843 = vld [vmem:[%s580 + $0xc8] sm:$0xff]
        %v2844 = vld [vmem:[%s580 + $0xd0] sm:$0xff]
        %v2845 = vld [vmem:[%s580 + $0xd8] sm:$0xff]
        %v2846 = vld [vmem:[%s580 + $0xe0] sm:$0xff]
        %v2847 = vld [vmem:[%s580 + $0xe8] sm:$0xff]
        %v2848 = vld [vmem:[%s580 + $0xf0] sm:$0xff]
        %v2849 = vld [vmem:[%s580 + $0xf8] sm:$0xff]
        %v2850 = vmul.f32 %v2818, %v2755
        %v2851 = vmul.f32 %v2819, %v2757
        %v2852 = vmul.f32 %v2820, %v2759
        %v2853 = vmul.f32 %v2821, %v2761
        %v2854 = vmul.f32 %v2822, %v2763
        %v2855 = vmul.f32 %v2823, %v2765
        %v2856 = vmul.f32 %v2824, %v2767
        %v2857 = vmul.f32 %v2825, %v2769
        %v2858 = vmul.f32 %v2826, %v2771
        %v2859 = vmul.f32 %v2827, %v2773
        %v2860 = vmul.f32 %v2828, %v2775
        %v2861 = vmul.f32 %v2829, %v2777
        %v2862 = vmul.f32 %v2830, %v2779
        %v2863 = vmul.f32 %v2831, %v2781
        %v2864 = vmul.f32 %v2832, %v2783
        %v2865 = vmul.f32 %v2833, %v2785
        %v2866 = vmul.f32 %v2834, %v2787
        %v2867 = vmul.f32 %v2835, %v2789
        %v2868 = vmul.f32 %v2836, %v2791
        %v2869 = vmul.f32 %v2837, %v2793
        %v2870 = vmul.f32 %v2838, %v2795
        %v2871 = vmul.f32 %v2839, %v2797
        %v2872 = vmul.f32 %v2840, %v2799
        %v2873 = vmul.f32 %v2841, %v2801
        %v2874 = vmul.f32 %v2842, %v2803
        %v2875 = vmul.f32 %v2843, %v2805
        %v2876 = vmul.f32 %v2844, %v2807
        %v2877 = vmul.f32 %v2845, %v2809
        %v2878 = vmul.f32 %v2846, %v2811
        %v2879 = vmul.f32 %v2847, %v2813
        %v2880 = vmul.f32 %v2848, %v2815
        %v2881 = vmul.f32 %v2849, %v2817
        %v2882 = vadd.f32 %v2500, %v2850
        %v2883 = vadd.f32 %v2504, %v2851
        %v2884 = vadd.f32 %v2510, %v2852
        %v2885 = vadd.f32 %v2514, %v2853
        %v2886 = vadd.f32 %v2520, %v2854
        %v2887 = vadd.f32 %v2524, %v2855
        %v2888 = vadd.f32 %v2530, %v2856
        %v2889 = vadd.f32 %v2534, %v2857
        %v2890 = vadd.f32 %v2540, %v2858
        %v2891 = vadd.f32 %v2544, %v2859
        %v2892 = vadd.f32 %v2550, %v2860
        %v2893 = vadd.f32 %v2554, %v2861
        %v2894 = vadd.f32 %v2560, %v2862
        %v2895 = vadd.f32 %v2564, %v2863
        %v2896 = vadd.f32 %v2570, %v2864
        %v2897 = vadd.f32 %v2574, %v2865
        %v2898 = vadd.f32 %v2580, %v2866
        %v2899 = vadd.f32 %v2584, %v2867
        %v2900 = vadd.f32 %v2590, %v2868
        %v2901 = vadd.f32 %v2594, %v2869
        %v2902 = vadd.f32 %v2600, %v2870
        %v2903 = vadd.f32 %v2604, %v2871
        %v2904 = vadd.f32 %v2610, %v2872
        %v2905 = vadd.f32 %v2614, %v2873
        %v2906 = vadd.f32 %v2620, %v2874
        %v2907 = vadd.f32 %v2624, %v2875
        %v2908 = vadd.f32 %v2630, %v2876
        %v2909 = vadd.f32 %v2634, %v2877
        %v2910 = vadd.f32 %v2640, %v2878
        %v2911 = vadd.f32 %v2644, %v2879
        %v2912 = vadd.f32 %v2650, %v2880
        %v2913 = vadd.f32 %v2654, %v2881
        %v2914 = vpack.c.bf16 %v2883, %v2882
        %v2915 = vpack.c.bf16 %v2885, %v2884
        %v2916 = vpack.c.bf16 %v2887, %v2886
        %v2917 = vpack.c.bf16 %v2889, %v2888
        %v2918 = vpack.c.bf16 %v2891, %v2890
        %v2919 = vpack.c.bf16 %v2893, %v2892
        %v2920 = vpack.c.bf16 %v2895, %v2894
        %v2921 = vpack.c.bf16 %v2897, %v2896
        %v2922 = vpack.c.bf16 %v2899, %v2898
        %v2923 = vpack.c.bf16 %v2901, %v2900
        %v2924 = vpack.c.bf16 %v2903, %v2902
        %v2925 = vpack.c.bf16 %v2905, %v2904
        %v2926 = vpack.c.bf16 %v2907, %v2906
        %v2927 = vpack.c.bf16 %v2909, %v2908
        %v2928 = vpack.c.bf16 %v2911, %v2910
        %v2929 = vpack.c.bf16 %v2913, %v2912
        %v2930 = vld [vmem:[#allocation7] sm:$0xff]
        %v2931 = vld [vmem:[#allocation7 + $0x8] sm:$0xff]
        %v2932 = vld [vmem:[#allocation7 + $0x10] sm:$0xff]
        %v2933 = vld [vmem:[#allocation7 + $0x18] sm:$0xff]
        %v2934 = vld [vmem:[#allocation7 + $0x20] sm:$0xff]
        %v2935 = vld [vmem:[#allocation7 + $0x28] sm:$0xff]
        %v2936 = vld [vmem:[#allocation7 + $0x30] sm:$0xff]
        %v2937 = vld [vmem:[#allocation7 + $0x38] sm:$0xff]
        %v2938 = vld [vmem:[#allocation7 + $0x40] sm:$0xff]
        %v2939 = vld [vmem:[#allocation7 + $0x48] sm:$0xff]
        %v2940 = vld [vmem:[#allocation7 + $0x50] sm:$0xff]
        %v2941 = vld [vmem:[#allocation7 + $0x58] sm:$0xff]
        %v2942 = vld [vmem:[#allocation7 + $0x60] sm:$0xff]
        %v2943 = vld [vmem:[#allocation7 + $0x68] sm:$0xff]
        %v2944 = vld [vmem:[#allocation7 + $0x70] sm:$0xff]
        %v2945 = vld [vmem:[#allocation7 + $0x78] sm:$0xff]
        %v2946 = vld [vmem:[%s9] sm:$0x3]
        %v2948 = vlaneseq
        %v2949 = vshrl.u32 %v2948, 7
        %v2950 = vsub.s32 0, %v2949
        %v2951 = vrot.slane %v2946, %v2950
        %v2952 = vlaneseq
        %v2953 = vshrl.u32 %v2952, 7
        %v2954 = vsub.s32 1, %v2953
        %v2955 = vrot.slane %v2946, %v2954
        %v2974 = vunpack.c.l.b16 %v2930
        %v2975 = vunpack.c.h.b16 %v2930
        %v2976 = vunpack.c.l.b16 %v2931
        %v2977 = vunpack.c.h.b16 %v2931
        %v2978 = vunpack.c.l.b16 %v2932
        %v2979 = vunpack.c.h.b16 %v2932
        %v2980 = vunpack.c.l.b16 %v2933
        %v2981 = vunpack.c.h.b16 %v2933
        %v2982 = vunpack.c.l.b16 %v2934
        %v2983 = vunpack.c.h.b16 %v2934
        %v2984 = vunpack.c.l.b16 %v2935
        %v2985 = vunpack.c.h.b16 %v2935
        %v2986 = vunpack.c.l.b16 %v2936
        %v2987 = vunpack.c.h.b16 %v2936
        %v2988 = vunpack.c.l.b16 %v2937
        %v2989 = vunpack.c.h.b16 %v2937
        %v2990 = vunpack.c.l.b16 %v2938
        %v2991 = vunpack.c.h.b16 %v2938
        %v2992 = vunpack.c.l.b16 %v2939
        %v2993 = vunpack.c.h.b16 %v2939
        %v2994 = vunpack.c.l.b16 %v2940
        %v2995 = vunpack.c.h.b16 %v2940
        %v2996 = vunpack.c.l.b16 %v2941
        %v2997 = vunpack.c.h.b16 %v2941
        %v2998 = vunpack.c.l.b16 %v2942
        %v2999 = vunpack.c.h.b16 %v2942
        %v3000 = vunpack.c.l.b16 %v2943
        %v3001 = vunpack.c.h.b16 %v2943
        %v3002 = vunpack.c.l.b16 %v2944
        %v3003 = vunpack.c.h.b16 %v2944
        %v3004 = vunpack.c.l.b16 %v2945
        %v3005 = vunpack.c.h.b16 %v2945
        %v3006 = vpack.c.b16 %v2976, %v2974
        %v3007 = vpack.c.b16 %v2977, %v2975
        %v3008 = vpack.c.b16 %v2980, %v2978
        %v3009 = vpack.c.b16 %v2981, %v2979
        %v3010 = vpack.c.b16 %v2984, %v2982
        %v3011 = vpack.c.b16 %v2985, %v2983
        %v3012 = vpack.c.b16 %v2988, %v2986
        %v3013 = vpack.c.b16 %v2989, %v2987
        %v3014 = vpack.c.b16 %v2992, %v2990
        %v3015 = vpack.c.b16 %v2993, %v2991
        %v3016 = vpack.c.b16 %v2996, %v2994
        %v3017 = vpack.c.b16 %v2997, %v2995
        %v3018 = vpack.c.b16 %v3000, %v2998
        %v3019 = vpack.c.b16 %v3001, %v2999
        %v3020 = vpack.c.b16 %v3004, %v3002
        %v3021 = vpack.c.b16 %v3005, %v3003
        %3038 = vmatprep.subr.bf16.mxu0 %v3007
        %3039 = vmatpush1.bf16.msra.mxu0 %v3006
        %3040 = vmatprep.subr.bf16.mxu0 %v3009
        %3041 = vmatpush1.bf16.msra.mxu0 %v3008
        %3042 = vmatprep.subr.bf16.mxu0 %v3011
        %3043 = vmatpush1.bf16.msra.mxu0 %v3010
        %3044 = vmatprep.subr.bf16.mxu0 %v3013
        %3045 = vmatpush1.bf16.msra.mxu0 %v3012
        %3046 = vmatprep.subr.bf16.mxu0 %v3015
        %3047 = vmatpush1.bf16.msra.mxu0 %v3014
        %3048 = vmatprep.subr.bf16.mxu0 %v3017
        %3049 = vmatpush1.bf16.msra.mxu0 %v3016
        %3050 = vmatprep.subr.bf16.mxu0 %v3019
        %3051 = vmatpush1.bf16.msra.mxu0 %v3018
        %3052 = vmatprep.subr.bf16.mxu0 %v3021
        %3053 = vmatpush1.bf16.msra.mxu0 %v3020
        %3054 = vmatprep.subr.bf16.mxu0 0
        %3055 = vmatpush1.bf16.msra.mxu0 0
        %3056 = vmatprep.subr.bf16.mxu0 0
        %3057 = vmatpush1.bf16.msra.mxu0 0
        %3058 = vmatprep.subr.bf16.mxu0 0
        %3059 = vmatpush1.bf16.msra.mxu0 0
        %3060 = vmatprep.subr.bf16.mxu0 0
        %3061 = vmatpush1.bf16.msra.mxu0 0
        %3062 = vmatprep.subr.bf16.mxu0 0
        %3063 = vmatpush1.bf16.msra.mxu0 0
        %3064 = vmatprep.subr.bf16.mxu0 0
        %3065 = vmatpush1.bf16.msra.mxu0 0
        %3066 = vmatprep.subr.bf16.mxu0 0
        %3067 = vmatpush1.bf16.msra.mxu0 0
        %3068 = vmatprep.subr.bf16.mxu0 0
        %3069 = vmatpush1.bf16.msra.mxu0 0
        %3070 = vmatprep.mubr.bf16.mxu0 0
        %3071 = vmatmul.mubr.bf16.gmra.mrb[0].mxu0 %v2914
        %v3072 = vpop.f32.mrb[0].mxu0
        %v3073 = vadd.f32 %v2951, %v3072
        %v3074 = vpop.f32.mrb[0].mxu0
        %v3075 = vadd.f32 %v2955, %v3074
        %v3076 = vpop.f32.mrb[0].mxu0
        %v3077 = vadd.f32 %v2951, %v3076
        %v3078 = vpop.f32.mrb[0].mxu0
        %v3079 = vadd.f32 %v2955, %v3078
        %3080 = vmatprep.mubr.bf16.mxu0 0
        %3081 = vmatmul.mubr.bf16.gmra.mrb[0].mxu0 %v2915
        %v3082 = vpop.f32.mrb[0].mxu0
        %v3083 = vadd.f32 %v2951, %v3082
        %v3084 = vpop.f32.mrb[0].mxu0
        %v3085 = vadd.f32 %v2955, %v3084
        %v3086 = vpop.f32.mrb[0].mxu0
        %v3087 = vadd.f32 %v2951, %v3086
        %v3088 = vpop.f32.mrb[0].mxu0
        %v3089 = vadd.f32 %v2955, %v3088
        %3090 = vmatprep.mubr.bf16.mxu0 0
        %3091 = vmatmul.mubr.bf16.gmra.mrb[0].mxu0 %v2916
        %v3092 = vpop.f32.mrb[0].mxu0
        %v3093 = vadd.f32 %v2951, %v3092
        %v3094 = vpop.f32.mrb[0].mxu0
        %v3095 = vadd.f32 %v2955, %v3094
        %v3096 = vpop.f32.mrb[0].mxu0
        %v3097 = vadd.f32 %v2951, %v3096
        %v3098 = vpop.f32.mrb[0].mxu0
        %v3099 = vadd.f32 %v2955, %v3098
        %3100 = vmatprep.mubr.bf16.mxu0 0
        %3101 = vmatmul.mubr.bf16.gmra.mrb[0].mxu0 %v2917
        %v3102 = vpop.f32.mrb[0].mxu0
        %v3103 = vadd.f32 %v2951, %v3102
        %v3104 = vpop.f32.mrb[0].mxu0
        %v3105 = vadd.f32 %v2955, %v3104
        %v3106 = vpop.f32.mrb[0].mxu0
        %v3107 = vadd.f32 %v2951, %v3106
        %v3108 = vpop.f32.mrb[0].mxu0
        %v3109 = vadd.f32 %v2955, %v3108
        %3110 = vmatprep.mubr.bf16.mxu0 0
        %3111 = vmatmul.mubr.bf16.gmra.mrb[0].mxu0 %v2918
        %v3112 = vpop.f32.mrb[0].mxu0
        %v3113 = vadd.f32 %v2951, %v3112
        %v3114 = vpop.f32.mrb[0].mxu0
        %v3115 = vadd.f32 %v2955, %v3114
        %v3116 = vpop.f32.mrb[0].mxu0
        %v3117 = vadd.f32 %v2951, %v3116
        %v3118 = vpop.f32.mrb[0].mxu0
        %v3119 = vadd.f32 %v2955, %v3118
        %3120 = vmatprep.mubr.bf16.mxu0 0
        %3121 = vmatmul.mubr.bf16.gmra.mrb[0].mxu0 %v2919
        %v3122 = vpop.f32.mrb[0].mxu0
        %v3123 = vadd.f32 %v2951, %v3122
        %v3124 = vpop.f32.mrb[0].mxu0
        %v3125 = vadd.f32 %v2955, %v3124
        %v3126 = vpop.f32.mrb[0].mxu0
        %v3127 = vadd.f32 %v2951, %v3126
        %v3128 = vpop.f32.mrb[0].mxu0
        %v3129 = vadd.f32 %v2955, %v3128
        %3130 = vmatprep.mubr.bf16.mxu0 0
        %3131 = vmatmul.mubr.bf16.gmra.mrb[0].mxu0 %v2920
        %v3132 = vpop.f32.mrb[0].mxu0
        %v3133 = vadd.f32 %v2951, %v3132
        %v3134 = vpop.f32.mrb[0].mxu0
        %v3135 = vadd.f32 %v2955, %v3134
        %v3136 = vpop.f32.mrb[0].mxu0
        %v3137 = vadd.f32 %v2951, %v3136
        %v3138 = vpop.f32.mrb[0].mxu0
        %v3139 = vadd.f32 %v2955, %v3138
        %3140 = vmatprep.mubr.bf16.mxu0 0
        %3141 = vmatmul.mubr.bf16.gmra.mrb[0].mxu0 %v2921
        %v3142 = vpop.f32.mrb[0].mxu0
        %v3143 = vadd.f32 %v2951, %v3142
        %v3144 = vpop.f32.mrb[0].mxu0
        %v3145 = vadd.f32 %v2955, %v3144
        %v3146 = vpop.f32.mrb[0].mxu0
        %v3147 = vadd.f32 %v2951, %v3146
        %v3148 = vpop.f32.mrb[0].mxu0
        %v3149 = vadd.f32 %v2955, %v3148
        %3150 = vmatprep.mubr.bf16.mxu0 0
        %3151 = vmatmul.mubr.bf16.gmra.mrb[0].mxu0 %v2922
        %v3152 = vpop.f32.mrb[0].mxu0
        %v3153 = vadd.f32 %v2951, %v3152
        %v3154 = vpop.f32.mrb[0].mxu0
        %v3155 = vadd.f32 %v2955, %v3154
        %v3156 = vpop.f32.mrb[0].mxu0
        %v3157 = vadd.f32 %v2951, %v3156
        %v3158 = vpop.f32.mrb[0].mxu0
        %v3159 = vadd.f32 %v2955, %v3158
        %3160 = vmatprep.mubr.bf16.mxu0 0
        %3161 = vmatmul.mubr.bf16.gmra.mrb[0].mxu0 %v2923
        %v3162 = vpop.f32.mrb[0].mxu0
        %v3163 = vadd.f32 %v2951, %v3162
        %v3164 = vpop.f32.mrb[0].mxu0
        %v3165 = vadd.f32 %v2955, %v3164
        %v3166 = vpop.f32.mrb[0].mxu0
        %v3167 = vadd.f32 %v2951, %v3166
        %v3168 = vpop.f32.mrb[0].mxu0
        %v3169 = vadd.f32 %v2955, %v3168
        %3170 = vmatprep.mubr.bf16.mxu0 0
        %3171 = vmatmul.mubr.bf16.gmra.mrb[0].mxu0 %v2924
        %v3172 = vpop.f32.mrb[0].mxu0
        %v3173 = vadd.f32 %v2951, %v3172
        %v3174 = vpop.f32.mrb[0].mxu0
        %v3175 = vadd.f32 %v2955, %v3174
        %v3176 = vpop.f32.mrb[0].mxu0
        %v3177 = vadd.f32 %v2951, %v3176
        %v3178 = vpop.f32.mrb[0].mxu0
        %v3179 = vadd.f32 %v2955, %v3178
        %3180 = vmatprep.mubr.bf16.mxu0 0
        %3181 = vmatmul.mubr.bf16.gmra.mrb[0].mxu0 %v2925
        %v3182 = vpop.f32.mrb[0].mxu0
        %v3183 = vadd.f32 %v2951, %v3182
        %v3184 = vpop.f32.mrb[0].mxu0
        %v3185 = vadd.f32 %v2955, %v3184
        %v3186 = vpop.f32.mrb[0].mxu0
        %v3187 = vadd.f32 %v2951, %v3186
        %v3188 = vpop.f32.mrb[0].mxu0
        %v3189 = vadd.f32 %v2955, %v3188
        %3190 = vmatprep.mubr.bf16.mxu0 0
        %3191 = vmatmul.mubr.bf16.gmra.mrb[0].mxu0 %v2926
        %v3192 = vpop.f32.mrb[0].mxu0
        %v3193 = vadd.f32 %v2951, %v3192
        %v3194 = vpop.f32.mrb[0].mxu0
        %v3195 = vadd.f32 %v2955, %v3194
        %v3196 = vpop.f32.mrb[0].mxu0
        %v3197 = vadd.f32 %v2951, %v3196
        %v3198 = vpop.f32.mrb[0].mxu0
        %v3199 = vadd.f32 %v2955, %v3198
        %3200 = vmatprep.mubr.bf16.mxu0 0
        %3201 = vmatmul.mubr.bf16.gmra.mrb[0].mxu0 %v2927
        %v3202 = vpop.f32.mrb[0].mxu0
        %v3203 = vadd.f32 %v2951, %v3202
        %v3204 = vpop.f32.mrb[0].mxu0
        %v3205 = vadd.f32 %v2955, %v3204
        %v3206 = vpop.f32.mrb[0].mxu0
        %v3207 = vadd.f32 %v2951, %v3206
        %v3208 = vpop.f32.mrb[0].mxu0
        %v3209 = vadd.f32 %v2955, %v3208
        %3210 = vmatprep.mubr.bf16.mxu0 0
        %3211 = vmatmul.mubr.bf16.gmra.mrb[0].mxu0 %v2928
        %v3212 = vpop.f32.mrb[0].mxu0
        %v3213 = vadd.f32 %v2951, %v3212
        %v3214 = vpop.f32.mrb[0].mxu0
        %v3215 = vadd.f32 %v2955, %v3214
        %v3216 = vpop.f32.mrb[0].mxu0
        %v3217 = vadd.f32 %v2951, %v3216
        %v3218 = vpop.f32.mrb[0].mxu0
        %v3219 = vadd.f32 %v2955, %v3218
        %3220 = vmatprep.mubr.bf16.mxu0 0
        %3221 = vmatmul.mubr.bf16.gmra.mrb[0].mxu0 %v2929
        %v3222 = vpop.f32.mrb[0].mxu0
        %v3223 = vadd.f32 %v2951, %v3222
        %v3224 = vpop.f32.mrb[0].mxu0
        %v3225 = vadd.f32 %v2955, %v3224
        %v3226 = vpop.f32.mrb[0].mxu0
        %v3227 = vadd.f32 %v2951, %v3226
        %v3228 = vpop.f32.mrb[0].mxu0
        %v3229 = vadd.f32 %v2955, %v3228
        %3230 = vdwg.mxu0
        %v3231 = vmax.f32 %v3073, 0.0
        %v3232 = vmax.f32 %v3075, 0.0
        %v3233 = vmax.f32 %v3077, 0.0
        %v3234 = vmax.f32 %v3079, 0.0
        %v3235 = vmax.f32 %v3083, 0.0
        %v3236 = vmax.f32 %v3085, 0.0
        %v3237 = vmax.f32 %v3087, 0.0
        %v3238 = vmax.f32 %v3089, 0.0
        %v3239 = vmax.f32 %v3093, 0.0
        %v3240 = vmax.f32 %v3095, 0.0
        %v3241 = vmax.f32 %v3097, 0.0
        %v3242 = vmax.f32 %v3099, 0.0
        %v3243 = vmax.f32 %v3103, 0.0
        %v3244 = vmax.f32 %v3105, 0.0
        %v3245 = vmax.f32 %v3107, 0.0
        %v3246 = vmax.f32 %v3109, 0.0
        %v3247 = vmax.f32 %v3113, 0.0
        %v3248 = vmax.f32 %v3115, 0.0
        %v3249 = vmax.f32 %v3117, 0.0
        %v3250 = vmax.f32 %v3119, 0.0
        %v3251 = vmax.f32 %v3123, 0.0
        %v3252 = vmax.f32 %v3125, 0.0
        %v3253 = vmax.f32 %v3127, 0.0
        %v3254 = vmax.f32 %v3129, 0.0
        %v3255 = vmax.f32 %v3133, 0.0
        %v3256 = vmax.f32 %v3135, 0.0
        %v3257 = vmax.f32 %v3137, 0.0
        %v3258 = vmax.f32 %v3139, 0.0
        %v3259 = vmax.f32 %v3143, 0.0
        %v3260 = vmax.f32 %v3145, 0.0
        %v3261 = vmax.f32 %v3147, 0.0
        %v3262 = vmax.f32 %v3149, 0.0
        %v3263 = vmax.f32 %v3153, 0.0
        %v3264 = vmax.f32 %v3155, 0.0
        %v3265 = vmax.f32 %v3157, 0.0
        %v3266 = vmax.f32 %v3159, 0.0
        %v3267 = vmax.f32 %v3163, 0.0
        %v3268 = vmax.f32 %v3165, 0.0
        %v3269 = vmax.f32 %v3167, 0.0
        %v3270 = vmax.f32 %v3169, 0.0
        %v3271 = vmax.f32 %v3173, 0.0
        %v3272 = vmax.f32 %v3175, 0.0
        %v3273 = vmax.f32 %v3177, 0.0
        %v3274 = vmax.f32 %v3179, 0.0
        %v3275 = vmax.f32 %v3183, 0.0
        %v3276 = vmax.f32 %v3185, 0.0
        %v3277 = vmax.f32 %v3187, 0.0
        %v3278 = vmax.f32 %v3189, 0.0
        %v3279 = vmax.f32 %v3193, 0.0
        %v3280 = vmax.f32 %v3195, 0.0
        %v3281 = vmax.f32 %v3197, 0.0
        %v3282 = vmax.f32 %v3199, 0.0
        %v3283 = vmax.f32 %v3203, 0.0
        %v3284 = vmax.f32 %v3205, 0.0
        %v3285 = vmax.f32 %v3207, 0.0
        %v3286 = vmax.f32 %v3209, 0.0
        %v3287 = vmax.f32 %v3213, 0.0
        %v3288 = vmax.f32 %v3215, 0.0
        %v3289 = vmax.f32 %v3217, 0.0
        %v3290 = vmax.f32 %v3219, 0.0
        %v3291 = vmax.f32 %v3223, 0.0
        %v3292 = vmax.f32 %v3225, 0.0
        %v3293 = vmax.f32 %v3227, 0.0
        %v3294 = vmax.f32 %v3229, 0.0
        %v3295 = vpack.c.bf16 %v3233, %v3231
        %v3296 = vpack.c.bf16 %v3234, %v3232
        %v3297 = vpack.c.bf16 %v3237, %v3235
        %v3298 = vpack.c.bf16 %v3238, %v3236
        %v3299 = vpack.c.bf16 %v3241, %v3239
        %v3300 = vpack.c.bf16 %v3242, %v3240
        %v3301 = vpack.c.bf16 %v3245, %v3243
        %v3302 = vpack.c.bf16 %v3246, %v3244
        %v3303 = vpack.c.bf16 %v3249, %v3247
        %v3304 = vpack.c.bf16 %v3250, %v3248
        %v3305 = vpack.c.bf16 %v3253, %v3251
        %v3306 = vpack.c.bf16 %v3254, %v3252
        %v3307 = vpack.c.bf16 %v3257, %v3255
        %v3308 = vpack.c.bf16 %v3258, %v3256
        %v3309 = vpack.c.bf16 %v3261, %v3259
        %v3310 = vpack.c.bf16 %v3262, %v3260
        %v3311 = vpack.c.bf16 %v3265, %v3263
        %v3312 = vpack.c.bf16 %v3266, %v3264
        %v3313 = vpack.c.bf16 %v3269, %v3267
        %v3314 = vpack.c.bf16 %v3270, %v3268
        %v3315 = vpack.c.bf16 %v3273, %v3271
        %v3316 = vpack.c.bf16 %v3274, %v3272
        %v3317 = vpack.c.bf16 %v3277, %v3275
        %v3318 = vpack.c.bf16 %v3278, %v3276
        %v3319 = vpack.c.bf16 %v3281, %v3279
        %v3320 = vpack.c.bf16 %v3282, %v3280
        %v3321 = vpack.c.bf16 %v3285, %v3283
        %v3322 = vpack.c.bf16 %v3286, %v3284
        %v3323 = vpack.c.bf16 %v3289, %v3287
        %v3324 = vpack.c.bf16 %v3290, %v3288
        %v3325 = vpack.c.bf16 %v3293, %v3291
        %v3326 = vpack.c.bf16 %v3294, %v3292
        %v3327 = vld [vmem:[#allocation8] sm:$0xff]
        %v3328 = vld [vmem:[#allocation8 + $0x8] sm:$0xff]
        %v3329 = vld [vmem:[#allocation8 + $0x10] sm:$0xff]
        %v3330 = vld [vmem:[#allocation8 + $0x18] sm:$0xff]
        %v3331 = vld [vmem:[#allocation8 + $0x20] sm:$0xff]
        %v3332 = vld [vmem:[#allocation8 + $0x28] sm:$0xff]
        %v3333 = vld [vmem:[#allocation8 + $0x30] sm:$0xff]
        %v3334 = vld [vmem:[#allocation8 + $0x38] sm:$0xff]
        %v3335 = vld [vmem:[#allocation8 + $0x40] sm:$0xff]
        %v3336 = vld [vmem:[#allocation8 + $0x48] sm:$0xff]
        %v3337 = vld [vmem:[#allocation8 + $0x50] sm:$0xff]
        %v3338 = vld [vmem:[#allocation8 + $0x58] sm:$0xff]
        %v3339 = vld [vmem:[#allocation8 + $0x60] sm:$0xff]
        %v3340 = vld [vmem:[#allocation8 + $0x68] sm:$0xff]
        %v3341 = vld [vmem:[#allocation8 + $0x70] sm:$0xff]
        %v3342 = vld [vmem:[#allocation8 + $0x78] sm:$0xff]
        %v3343 = vld [vmem:[#allocation8 + $0x80] sm:$0xff]
        %v3344 = vld [vmem:[#allocation8 + $0x88] sm:$0xff]
        %v3345 = vld [vmem:[#allocation8 + $0x90] sm:$0xff]
        %v3346 = vld [vmem:[#allocation8 + $0x98] sm:$0xff]
        %v3347 = vld [vmem:[#allocation8 + $0xa0] sm:$0xff]
        %v3348 = vld [vmem:[#allocation8 + $0xa8] sm:$0xff]
        %v3349 = vld [vmem:[#allocation8 + $0xb0] sm:$0xff]
        %v3350 = vld [vmem:[#allocation8 + $0xb8] sm:$0xff]
        %v3351 = vld [vmem:[#allocation8 + $0xc0] sm:$0xff]
        %v3352 = vld [vmem:[#allocation8 + $0xc8] sm:$0xff]
        %v3353 = vld [vmem:[#allocation8 + $0xd0] sm:$0xff]
        %v3354 = vld [vmem:[#allocation8 + $0xd8] sm:$0xff]
        %v3355 = vld [vmem:[#allocation8 + $0xe0] sm:$0xff]
        %v3356 = vld [vmem:[#allocation8 + $0xe8] sm:$0xff]
        %v3357 = vld [vmem:[#allocation8 + $0xf0] sm:$0xff]
        %v3358 = vld [vmem:[#allocation8 + $0xf8] sm:$0xff]
        %v3359 = vld [vmem:[#allocation8 + $0x100] sm:$0xff]
        %v3360 = vld [vmem:[#allocation8 + $0x108] sm:$0xff]
        %v3361 = vld [vmem:[#allocation8 + $0x110] sm:$0xff]
        %v3362 = vld [vmem:[#allocation8 + $0x118] sm:$0xff]
        %v3363 = vld [vmem:[#allocation8 + $0x120] sm:$0xff]
        %v3364 = vld [vmem:[#allocation8 + $0x128] sm:$0xff]
        %v3365 = vld [vmem:[#allocation8 + $0x130] sm:$0xff]
        %v3366 = vld [vmem:[#allocation8 + $0x138] sm:$0xff]
        %v3367 = vld [vmem:[#allocation8 + $0x140] sm:$0xff]
        %v3368 = vld [vmem:[#allocation8 + $0x148] sm:$0xff]
        %v3369 = vld [vmem:[#allocation8 + $0x150] sm:$0xff]
        %v3370 = vld [vmem:[#allocation8 + $0x158] sm:$0xff]
        %v3371 = vld [vmem:[#allocation8 + $0x160] sm:$0xff]
        %v3372 = vld [vmem:[#allocation8 + $0x168] sm:$0xff]
        %v3373 = vld [vmem:[#allocation8 + $0x170] sm:$0xff]
        %v3374 = vld [vmem:[#allocation8 + $0x178] sm:$0xff]
        %v3375 = vld [vmem:[#allocation8 + $0x180] sm:$0xff]
        %v3376 = vld [vmem:[#allocation8 + $0x188] sm:$0xff]
        %v3377 = vld [vmem:[#allocation8 + $0x190] sm:$0xff]
        %v3378 = vld [vmem:[#allocation8 + $0x198] sm:$0xff]
        %v3379 = vld [vmem:[#allocation8 + $0x1a0] sm:$0xff]
        %v3380 = vld [vmem:[#allocation8 + $0x1a8] sm:$0xff]
        %v3381 = vld [vmem:[#allocation8 + $0x1b0] sm:$0xff]
        %v3382 = vld [vmem:[#allocation8 + $0x1b8] sm:$0xff]
        %v3383 = vld [vmem:[#allocation8 + $0x1c0] sm:$0xff]
        %v3384 = vld [vmem:[#allocation8 + $0x1c8] sm:$0xff]
        %v3385 = vld [vmem:[#allocation8 + $0x1d0] sm:$0xff]
        %v3386 = vld [vmem:[#allocation8 + $0x1d8] sm:$0xff]
        %v3387 = vld [vmem:[#allocation8 + $0x1e0] sm:$0xff]
        %v3388 = vld [vmem:[#allocation8 + $0x1e8] sm:$0xff]
        %v3389 = vld [vmem:[#allocation8 + $0x1f0] sm:$0xff]
        %v3390 = vld [vmem:[#allocation8 + $0x1f8] sm:$0xff]
        %v3391 = vld [vmem:[%s11] sm:$0xf]
        %v3393 = vlaneseq
        %v3394 = vshrl.u32 %v3393, 7
        %v3395 = vsub.s32 0, %v3394
        %v3396 = vrot.slane %v3391, %v3395
        %v3397 = vlaneseq
        %v3398 = vshrl.u32 %v3397, 7
        %v3399 = vsub.s32 1, %v3398
        %v3400 = vrot.slane %v3391, %v3399
        %v3401 = vlaneseq
        %v3402 = vshrl.u32 %v3401, 7
        %v3403 = vsub.s32 2, %v3402
        %v3404 = vrot.slane %v3391, %v3403
        %v3405 = vlaneseq
        %v3406 = vshrl.u32 %v3405, 7
        %v3407 = vsub.s32 3, %v3406
        %v3408 = vrot.slane %v3391, %v3407
        %v3477 = vunpack.c.l.b16 %v3327
        %v3478 = vunpack.c.h.b16 %v3327
        %v3479 = vunpack.c.l.b16 %v3328
        %v3480 = vunpack.c.h.b16 %v3328
        %v3481 = vunpack.c.l.b16 %v3329
        %v3482 = vunpack.c.h.b16 %v3329
        %v3483 = vunpack.c.l.b16 %v3330
        %v3484 = vunpack.c.h.b16 %v3330
        %v3485 = vunpack.c.l.b16 %v3331
        %v3486 = vunpack.c.h.b16 %v3331
        %v3487 = vunpack.c.l.b16 %v3332
        %v3488 = vunpack.c.h.b16 %v3332
        %v3489 = vunpack.c.l.b16 %v3333
        %v3490 = vunpack.c.h.b16 %v3333
        %v3491 = vunpack.c.l.b16 %v3334
        %v3492 = vunpack.c.h.b16 %v3334
        %v3493 = vunpack.c.l.b16 %v3335
        %v3494 = vunpack.c.h.b16 %v3335
        %v3495 = vunpack.c.l.b16 %v3336
        %v3496 = vunpack.c.h.b16 %v3336
        %v3497 = vunpack.c.l.b16 %v3337
        %v3498 = vunpack.c.h.b16 %v3337
        %v3499 = vunpack.c.l.b16 %v3338
        %v3500 = vunpack.c.h.b16 %v3338
        %v3501 = vunpack.c.l.b16 %v3339
        %v3502 = vunpack.c.h.b16 %v3339
        %v3503 = vunpack.c.l.b16 %v3340
        %v3504 = vunpack.c.h.b16 %v3340
        %v3505 = vunpack.c.l.b16 %v3341
        %v3506 = vunpack.c.h.b16 %v3341
        %v3507 = vunpack.c.l.b16 %v3342
        %v3508 = vunpack.c.h.b16 %v3342
        %v3509 = vunpack.c.l.b16 %v3343
        %v3510 = vunpack.c.h.b16 %v3343
        %v3511 = vunpack.c.l.b16 %v3344
        %v3512 = vunpack.c.h.b16 %v3344
        %v3513 = vunpack.c.l.b16 %v3345
        %v3514 = vunpack.c.h.b16 %v3345
        %v3515 = vunpack.c.l.b16 %v3346
        %v3516 = vunpack.c.h.b16 %v3346
        %v3517 = vunpack.c.l.b16 %v3347
        %v3518 = vunpack.c.h.b16 %v3347
        %v3519 = vunpack.c.l.b16 %v3348
        %v3520 = vunpack.c.h.b16 %v3348
        %v3521 = vunpack.c.l.b16 %v3349
        %v3522 = vunpack.c.h.b16 %v3349
        %v3523 = vunpack.c.l.b16 %v3350
        %v3524 = vunpack.c.h.b16 %v3350
        %v3525 = vunpack.c.l.b16 %v3351
        %v3526 = vunpack.c.h.b16 %v3351
        %v3527 = vunpack.c.l.b16 %v3352
        %v3528 = vunpack.c.h.b16 %v3352
        %v3529 = vunpack.c.l.b16 %v3353
        %v3530 = vunpack.c.h.b16 %v3353
        %v3531 = vunpack.c.l.b16 %v3354
        %v3532 = vunpack.c.h.b16 %v3354
        %v3533 = vunpack.c.l.b16 %v3355
        %v3534 = vunpack.c.h.b16 %v3355
        %v3535 = vunpack.c.l.b16 %v3356
        %v3536 = vunpack.c.h.b16 %v3356
        %v3537 = vunpack.c.l.b16 %v3357
        %v3538 = vunpack.c.h.b16 %v3357
        %v3539 = vunpack.c.l.b16 %v3358
        %v3540 = vunpack.c.h.b16 %v3358
        %v3541 = vunpack.c.l.b16 %v3359
        %v3542 = vunpack.c.h.b16 %v3359
        %v3543 = vunpack.c.l.b16 %v3360
        %v3544 = vunpack.c.h.b16 %v3360
        %v3545 = vunpack.c.l.b16 %v3361
        %v3546 = vunpack.c.h.b16 %v3361
        %v3547 = vunpack.c.l.b16 %v3362
        %v3548 = vunpack.c.h.b16 %v3362
        %v3549 = vunpack.c.l.b16 %v3363
        %v3550 = vunpack.c.h.b16 %v3363
        %v3551 = vunpack.c.l.b16 %v3364
        %v3552 = vunpack.c.h.b16 %v3364
        %v3553 = vunpack.c.l.b16 %v3365
        %v3554 = vunpack.c.h.b16 %v3365
        %v3555 = vunpack.c.l.b16 %v3366
        %v3556 = vunpack.c.h.b16 %v3366
        %v3557 = vunpack.c.l.b16 %v3367
        %v3558 = vunpack.c.h.b16 %v3367
        %v3559 = vunpack.c.l.b16 %v3368
        %v3560 = vunpack.c.h.b16 %v3368
        %v3561 = vunpack.c.l.b16 %v3369
        %v3562 = vunpack.c.h.b16 %v3369
        %v3563 = vunpack.c.l.b16 %v3370
        %v3564 = vunpack.c.h.b16 %v3370
        %v3565 = vunpack.c.l.b16 %v3371
        %v3566 = vunpack.c.h.b16 %v3371
        %v3567 = vunpack.c.l.b16 %v3372
        %v3568 = vunpack.c.h.b16 %v3372
        %v3569 = vunpack.c.l.b16 %v3373
        %v3570 = vunpack.c.h.b16 %v3373
        %v3571 = vunpack.c.l.b16 %v3374
        %v3572 = vunpack.c.h.b16 %v3374
        %v3573 = vunpack.c.l.b16 %v3375
        %v3574 = vunpack.c.h.b16 %v3375
        %v3575 = vunpack.c.l.b16 %v3376
        %v3576 = vunpack.c.h.b16 %v3376
        %v3577 = vunpack.c.l.b16 %v3377
        %v3578 = vunpack.c.h.b16 %v3377
        %v3579 = vunpack.c.l.b16 %v3378
        %v3580 = vunpack.c.h.b16 %v3378
        %v3581 = vunpack.c.l.b16 %v3379
        %v3582 = vunpack.c.h.b16 %v3379
        %v3583 = vunpack.c.l.b16 %v3380
        %v3584 = vunpack.c.h.b16 %v3380
        %v3585 = vunpack.c.l.b16 %v3381
        %v3586 = vunpack.c.h.b16 %v3381
        %v3587 = vunpack.c.l.b16 %v3382
        %v3588 = vunpack.c.h.b16 %v3382
        %v3589 = vunpack.c.l.b16 %v3383
        %v3590 = vunpack.c.h.b16 %v3383
        %v3591 = vunpack.c.l.b16 %v3384
        %v3592 = vunpack.c.h.b16 %v3384
        %v3593 = vunpack.c.l.b16 %v3385
        %v3594 = vunpack.c.h.b16 %v3385
        %v3595 = vunpack.c.l.b16 %v3386
        %v3596 = vunpack.c.h.b16 %v3386
        %v3597 = vunpack.c.l.b16 %v3387
        %v3598 = vunpack.c.h.b16 %v3387
        %v3599 = vunpack.c.l.b16 %v3388
        %v3600 = vunpack.c.h.b16 %v3388
        %v3601 = vunpack.c.l.b16 %v3389
        %v3602 = vunpack.c.h.b16 %v3389
        %v3603 = vunpack.c.l.b16 %v3390
        %v3604 = vunpack.c.h.b16 %v3390
        %v3605 = vpack.c.b16 %v3481, %v3477
        %v3606 = vpack.c.b16 %v3482, %v3478
        %v3607 = vpack.c.b16 %v3483, %v3479
        %v3608 = vpack.c.b16 %v3484, %v3480
        %v3609 = vpack.c.b16 %v3489, %v3485
        %v3610 = vpack.c.b16 %v3490, %v3486
        %v3611 = vpack.c.b16 %v3491, %v3487
        %v3612 = vpack.c.b16 %v3492, %v3488
        %v3613 = vpack.c.b16 %v3497, %v3493
        %v3614 = vpack.c.b16 %v3498, %v3494
        %v3615 = vpack.c.b16 %v3499, %v3495
        %v3616 = vpack.c.b16 %v3500, %v3496
        %v3617 = vpack.c.b16 %v3505, %v3501
        %v3618 = vpack.c.b16 %v3506, %v3502
        %v3619 = vpack.c.b16 %v3507, %v3503
        %v3620 = vpack.c.b16 %v3508, %v3504
        %v3621 = vpack.c.b16 %v3513, %v3509
        %v3622 = vpack.c.b16 %v3514, %v3510
        %v3623 = vpack.c.b16 %v3515, %v3511
        %v3624 = vpack.c.b16 %v3516, %v3512
        %v3625 = vpack.c.b16 %v3521, %v3517
        %v3626 = vpack.c.b16 %v3522, %v3518
        %v3627 = vpack.c.b16 %v3523, %v3519
        %v3628 = vpack.c.b16 %v3524, %v3520
        %v3629 = vpack.c.b16 %v3529, %v3525
        %v3630 = vpack.c.b16 %v3530, %v3526
        %v3631 = vpack.c.b16 %v3531, %v3527
        %v3632 = vpack.c.b16 %v3532, %v3528
        %v3633 = vpack.c.b16 %v3537, %v3533
        %v3634 = vpack.c.b16 %v3538, %v3534
        %v3635 = vpack.c.b16 %v3539, %v3535
        %v3636 = vpack.c.b16 %v3540, %v3536
        %v3637 = vpack.c.b16 %v3545, %v3541
        %v3638 = vpack.c.b16 %v3546, %v3542
        %v3639 = vpack.c.b16 %v3547, %v3543
        %v3640 = vpack.c.b16 %v3548, %v3544
        %v3641 = vpack.c.b16 %v3553, %v3549
        %v3642 = vpack.c.b16 %v3554, %v3550
        %v3643 = vpack.c.b16 %v3555, %v3551
        %v3644 = vpack.c.b16 %v3556, %v3552
        %v3645 = vpack.c.b16 %v3561, %v3557
        %v3646 = vpack.c.b16 %v3562, %v3558
        %v3647 = vpack.c.b16 %v3563, %v3559
        %v3648 = vpack.c.b16 %v3564, %v3560
        %v3649 = vpack.c.b16 %v3569, %v3565
        %v3650 = vpack.c.b16 %v3570, %v3566
        %v3651 = vpack.c.b16 %v3571, %v3567
        %v3652 = vpack.c.b16 %v3572, %v3568
        %v3653 = vpack.c.b16 %v3577, %v3573
        %v3654 = vpack.c.b16 %v3578, %v3574
        %v3655 = vpack.c.b16 %v3579, %v3575
        %v3656 = vpack.c.b16 %v3580, %v3576
        %v3657 = vpack.c.b16 %v3585, %v3581
        %v3658 = vpack.c.b16 %v3586, %v3582
        %v3659 = vpack.c.b16 %v3587, %v3583
        %v3660 = vpack.c.b16 %v3588, %v3584
        %v3661 = vpack.c.b16 %v3593, %v3589
        %v3662 = vpack.c.b16 %v3594, %v3590
        %v3663 = vpack.c.b16 %v3595, %v3591
        %v3664 = vpack.c.b16 %v3596, %v3592
        %v3665 = vpack.c.b16 %v3601, %v3597
        %v3666 = vpack.c.b16 %v3602, %v3598
        %v3667 = vpack.c.b16 %v3603, %v3599
        %v3668 = vpack.c.b16 %v3604, %v3600
        %3733 = vmatprep.subr.bf16.mxu0 %v3606
        %3734 = vmatpush1.bf16.msra.mxu0 %v3605
        %3735 = vmatprep.subr.bf16.mxu0 %v3610
        %3736 = vmatpush1.bf16.msra.mxu0 %v3609
        %3737 = vmatprep.subr.bf16.mxu0 %v3614
        %3738 = vmatpush1.bf16.msra.mxu0 %v3613
        %3739 = vmatprep.subr.bf16.mxu0 %v3618
        %3740 = vmatpush1.bf16.msra.mxu0 %v3617
        %3741 = vmatprep.subr.bf16.mxu0 %v3622
        %3742 = vmatpush1.bf16.msra.mxu0 %v3621
        %3743 = vmatprep.subr.bf16.mxu0 %v3626
        %3744 = vmatpush1.bf16.msra.mxu0 %v3625
        %3745 = vmatprep.subr.bf16.mxu0 %v3630
        %3746 = vmatpush1.bf16.msra.mxu0 %v3629
        %3747 = vmatprep.subr.bf16.mxu0 %v3634
        %3748 = vmatpush1.bf16.msra.mxu0 %v3633
        %3749 = vmatprep.subr.bf16.mxu0 %v3638
        %3750 = vmatpush1.bf16.msra.mxu0 %v3637
        %3751 = vmatprep.subr.bf16.mxu0 %v3642
        %3752 = vmatpush1.bf16.msra.mxu0 %v3641
        %3753 = vmatprep.subr.bf16.mxu0 %v3646
        %3754 = vmatpush1.bf16.msra.mxu0 %v3645
        %3755 = vmatprep.subr.bf16.mxu0 %v3650
        %3756 = vmatpush1.bf16.msra.mxu0 %v3649
        %3757 = vmatprep.subr.bf16.mxu0 %v3654
        %3758 = vmatpush1.bf16.msra.mxu0 %v3653
        %3759 = vmatprep.subr.bf16.mxu0 %v3658
        %3760 = vmatpush1.bf16.msra.mxu0 %v3657
        %3761 = vmatprep.subr.bf16.mxu0 %v3662
        %3762 = vmatpush1.bf16.msra.mxu0 %v3661
        %3763 = vmatprep.subr.bf16.mxu0 %v3666
        %3764 = vmatpush1.bf16.msra.mxu0 %v3665
        %3765 = vmatprep.mubr.bf16.mxu0 %v3296
        %3766 = vmatmul.mubr.bf16.gmra.mrb[0].mxu0 %v3295
        %v3767 = vpop.f32.mrb[0].mxu0
        %v3768 = vadd.f32 %v3396, %v3767
        %v3769 = vpop.f32.mrb[0].mxu0
        %v3770 = vadd.f32 %v3400, %v3769
        %v3771 = vpop.f32.mrb[0].mxu0
        %v3772 = vadd.f32 %v3396, %v3771
        %v3773 = vpop.f32.mrb[0].mxu0
        %v3774 = vadd.f32 %v3400, %v3773
        %3775 = vmatprep.mubr.bf16.mxu0 %v3298
        %3776 = vmatmul.mubr.bf16.gmra.mrb[0].mxu0 %v3297
        %v3777 = vpop.f32.mrb[0].mxu0
        %v3778 = vadd.f32 %v3396, %v3777
        %v3779 = vpop.f32.mrb[0].mxu0
        %v3780 = vadd.f32 %v3400, %v3779
        %v3781 = vpop.f32.mrb[0].mxu0
        %v3782 = vadd.f32 %v3396, %v3781
        %v3783 = vpop.f32.mrb[0].mxu0
        %v3784 = vadd.f32 %v3400, %v3783
        %3785 = vmatprep.mubr.bf16.mxu0 %v3300
        %3786 = vmatmul.mubr.bf16.gmra.mrb[0].mxu0 %v3299
        %v3787 = vpop.f32.mrb[0].mxu0
        %v3788 = vadd.f32 %v3396, %v3787
        %v3789 = vpop.f32.mrb[0].mxu0
        %v3790 = vadd.f32 %v3400, %v3789
        %v3791 = vpop.f32.mrb[0].mxu0
        %v3792 = vadd.f32 %v3396, %v3791
        %v3793 = vpop.f32.mrb[0].mxu0
        %v3794 = vadd.f32 %v3400, %v3793
        %3795 = vmatprep.mubr.bf16.mxu0 %v3302
        %3796 = vmatmul.mubr.bf16.gmra.mrb[0].mxu0 %v3301
        %v3797 = vpop.f32.mrb[0].mxu0
        %v3798 = vadd.f32 %v3396, %v3797
        %v3799 = vpop.f32.mrb[0].mxu0
        %v3800 = vadd.f32 %v3400, %v3799
        %v3801 = vpop.f32.mrb[0].mxu0
        %v3802 = vadd.f32 %v3396, %v3801
        %v3803 = vpop.f32.mrb[0].mxu0
        %v3804 = vadd.f32 %v3400, %v3803
        %3805 = vmatprep.mubr.bf16.mxu0 %v3304
        %3806 = vmatmul.mubr.bf16.gmra.mrb[0].mxu0 %v3303
        %v3807 = vpop.f32.mrb[0].mxu0
        %v3808 = vadd.f32 %v3396, %v3807
        %v3809 = vpop.f32.mrb[0].mxu0
        %v3810 = vadd.f32 %v3400, %v3809
        %v3811 = vpop.f32.mrb[0].mxu0
        %v3812 = vadd.f32 %v3396, %v3811
        %v3813 = vpop.f32.mrb[0].mxu0
        %v3814 = vadd.f32 %v3400, %v3813
        %3815 = vmatprep.mubr.bf16.mxu0 %v3306
        %3816 = vmatmul.mubr.bf16.gmra.mrb[0].mxu0 %v3305
        %v3817 = vpop.f32.mrb[0].mxu0
        %v3818 = vadd.f32 %v3396, %v3817
        %v3819 = vpop.f32.mrb[0].mxu0
        %v3820 = vadd.f32 %v3400, %v3819
        %v3821 = vpop.f32.mrb[0].mxu0
        %v3822 = vadd.f32 %v3396, %v3821
        %v3823 = vpop.f32.mrb[0].mxu0
        %v3824 = vadd.f32 %v3400, %v3823
        %3825 = vmatprep.mubr.bf16.mxu0 %v3308
        %3826 = vmatmul.mubr.bf16.gmra.mrb[0].mxu0 %v3307
        %v3827 = vpop.f32.mrb[0].mxu0
        %v3828 = vadd.f32 %v3396, %v3827
        %v3829 = vpop.f32.mrb[0].mxu0
        %v3830 = vadd.f32 %v3400, %v3829
        %v3831 = vpop.f32.mrb[0].mxu0
        %v3832 = vadd.f32 %v3396, %v3831
        %v3833 = vpop.f32.mrb[0].mxu0
        %v3834 = vadd.f32 %v3400, %v3833
        %3835 = vmatprep.mubr.bf16.mxu0 %v3310
        %3836 = vmatmul.mubr.bf16.gmra.mrb[0].mxu0 %v3309
        %v3837 = vpop.f32.mrb[0].mxu0
        %v3838 = vadd.f32 %v3396, %v3837
        %v3839 = vpop.f32.mrb[0].mxu0
        %v3840 = vadd.f32 %v3400, %v3839
        %v3841 = vpop.f32.mrb[0].mxu0
        %v3842 = vadd.f32 %v3396, %v3841
        %v3843 = vpop.f32.mrb[0].mxu0
        %v3844 = vadd.f32 %v3400, %v3843
        %3845 = vmatprep.mubr.bf16.mxu0 %v3312
        %3846 = vmatmul.mubr.bf16.gmra.mrb[0].mxu0 %v3311
        %v3847 = vpop.f32.mrb[0].mxu0
        %v3848 = vadd.f32 %v3396, %v3847
        %v3849 = vpop.f32.mrb[0].mxu0
        %v3850 = vadd.f32 %v3400, %v3849
        %v3851 = vpop.f32.mrb[0].mxu0
        %v3852 = vadd.f32 %v3396, %v3851
        %v3853 = vpop.f32.mrb[0].mxu0
        %v3854 = vadd.f32 %v3400, %v3853
        %3855 = vmatprep.mubr.bf16.mxu0 %v3314
        %3856 = vmatmul.mubr.bf16.gmra.mrb[0].mxu0 %v3313
        %v3857 = vpop.f32.mrb[0].mxu0
        %v3858 = vadd.f32 %v3396, %v3857
        %v3859 = vpop.f32.mrb[0].mxu0
        %v3860 = vadd.f32 %v3400, %v3859
        %v3861 = vpop.f32.mrb[0].mxu0
        %v3862 = vadd.f32 %v3396, %v3861
        %v3863 = vpop.f32.mrb[0].mxu0
        %v3864 = vadd.f32 %v3400, %v3863
        %3865 = vmatprep.mubr.bf16.mxu0 %v3316
        %3866 = vmatmul.mubr.bf16.gmra.mrb[0].mxu0 %v3315
        %v3867 = vpop.f32.mrb[0].mxu0
        %v3868 = vadd.f32 %v3396, %v3867
        %v3869 = vpop.f32.mrb[0].mxu0
        %v3870 = vadd.f32 %v3400, %v3869
        %v3871 = vpop.f32.mrb[0].mxu0
        %v3872 = vadd.f32 %v3396, %v3871
        %v3873 = vpop.f32.mrb[0].mxu0
        %v3874 = vadd.f32 %v3400, %v3873
        %3875 = vmatprep.mubr.bf16.mxu0 %v3318
        %3876 = vmatmul.mubr.bf16.gmra.mrb[0].mxu0 %v3317
        %v3877 = vpop.f32.mrb[0].mxu0
        %v3878 = vadd.f32 %v3396, %v3877
        %v3879 = vpop.f32.mrb[0].mxu0
        %v3880 = vadd.f32 %v3400, %v3879
        %v3881 = vpop.f32.mrb[0].mxu0
        %v3882 = vadd.f32 %v3396, %v3881
        %v3883 = vpop.f32.mrb[0].mxu0
        %v3884 = vadd.f32 %v3400, %v3883
        %3885 = vmatprep.mubr.bf16.mxu0 %v3320
        %3886 = vmatmul.mubr.bf16.gmra.mrb[0].mxu0 %v3319
        %v3887 = vpop.f32.mrb[0].mxu0
        %v3888 = vadd.f32 %v3396, %v3887
        %v3889 = vpop.f32.mrb[0].mxu0
        %v3890 = vadd.f32 %v3400, %v3889
        %v3891 = vpop.f32.mrb[0].mxu0
        %v3892 = vadd.f32 %v3396, %v3891
        %v3893 = vpop.f32.mrb[0].mxu0
        %v3894 = vadd.f32 %v3400, %v3893
        %3895 = vmatprep.mubr.bf16.mxu0 %v3322
        %3896 = vmatmul.mubr.bf16.gmra.mrb[0].mxu0 %v3321
        %v3897 = vpop.f32.mrb[0].mxu0
        %v3898 = vadd.f32 %v3396, %v3897
        %v3899 = vpop.f32.mrb[0].mxu0
        %v3900 = vadd.f32 %v3400, %v3899
        %v3901 = vpop.f32.mrb[0].mxu0
        %v3902 = vadd.f32 %v3396, %v3901
        %v3903 = vpop.f32.mrb[0].mxu0
        %v3904 = vadd.f32 %v3400, %v3903
        %3905 = vmatprep.mubr.bf16.mxu0 %v3324
        %3906 = vmatmul.mubr.bf16.gmra.mrb[0].mxu0 %v3323
        %v3907 = vpop.f32.mrb[0].mxu0
        %v3908 = vadd.f32 %v3396, %v3907
        %v3909 = vpop.f32.mrb[0].mxu0
        %v3910 = vadd.f32 %v3400, %v3909
        %v3911 = vpop.f32.mrb[0].mxu0
        %v3912 = vadd.f32 %v3396, %v3911
        %v3913 = vpop.f32.mrb[0].mxu0
        %v3914 = vadd.f32 %v3400, %v3913
        %3915 = vmatprep.mubr.bf16.mxu0 %v3326
        %3916 = vmatmul.mubr.bf16.gmra.mrb[0].mxu0 %v3325
        %v3917 = vpop.f32.mrb[0].mxu0
        %v3918 = vadd.f32 %v3396, %v3917
        %v3919 = vpop.f32.mrb[0].mxu0
        %v3920 = vadd.f32 %v3400, %v3919
        %v3921 = vpop.f32.mrb[0].mxu0
        %v3922 = vadd.f32 %v3396, %v3921
        %v3923 = vpop.f32.mrb[0].mxu0
        %v3924 = vadd.f32 %v3400, %v3923
        %3925 = vdwg.mxu0
        %3926 = vmatprep.subr.bf16.mxu0 %v3608
        %3927 = vmatpush1.bf16.msra.mxu0 %v3607
        %3928 = vmatprep.subr.bf16.mxu0 %v3612
        %3929 = vmatpush1.bf16.msra.mxu0 %v3611
        %3930 = vmatprep.subr.bf16.mxu0 %v3616
        %3931 = vmatpush1.bf16.msra.mxu0 %v3615
        %3932 = vmatprep.subr.bf16.mxu0 %v3620
        %3933 = vmatpush1.bf16.msra.mxu0 %v3619
        %3934 = vmatprep.subr.bf16.mxu0 %v3624
        %3935 = vmatpush1.bf16.msra.mxu0 %v3623
        %3936 = vmatprep.subr.bf16.mxu0 %v3628
        %3937 = vmatpush1.bf16.msra.mxu0 %v3627
        %3938 = vmatprep.subr.bf16.mxu0 %v3632
        %3939 = vmatpush1.bf16.msra.mxu0 %v3631
        %3940 = vmatprep.subr.bf16.mxu0 %v3636
        %3941 = vmatpush1.bf16.msra.mxu0 %v3635
        %3942 = vmatprep.subr.bf16.mxu0 %v3640
        %3943 = vmatpush1.bf16.msra.mxu0 %v3639
        %3944 = vmatprep.subr.bf16.mxu0 %v3644
        %3945 = vmatpush1.bf16.msra.mxu0 %v3643
        %3946 = vmatprep.subr.bf16.mxu0 %v3648
        %3947 = vmatpush1.bf16.msra.mxu0 %v3647
        %3948 = vmatprep.subr.bf16.mxu0 %v3652
        %3949 = vmatpush1.bf16.msra.mxu0 %v3651
        %3950 = vmatprep.subr.bf16.mxu0 %v3656
        %3951 = vmatpush1.bf16.msra.mxu0 %v3655
        %3952 = vmatprep.subr.bf16.mxu0 %v3660
        %3953 = vmatpush1.bf16.msra.mxu0 %v3659
        %3954 = vmatprep.subr.bf16.mxu0 %v3664
        %3955 = vmatpush1.bf16.msra.mxu0 %v3663
        %3956 = vmatprep.subr.bf16.mxu0 %v3668
        %3957 = vmatpush1.bf16.msra.mxu0 %v3667
        %3958 = vmatprep.mubr.bf16.mxu0 %v3296
        %3959 = vmatmul.mubr.bf16.gmra.mrb[0].mxu0 %v3295
        %v3960 = vpop.f32.mrb[0].mxu0
        %v3961 = vadd.f32 %v3404, %v3960
        %v3962 = vpop.f32.mrb[0].mxu0
        %v3963 = vadd.f32 %v3408, %v3962
        %v3964 = vpop.f32.mrb[0].mxu0
        %v3965 = vadd.f32 %v3404, %v3964
        %v3966 = vpop.f32.mrb[0].mxu0
        %v3967 = vadd.f32 %v3408, %v3966
        %3968 = vmatprep.mubr.bf16.mxu0 %v3298
        %3969 = vmatmul.mubr.bf16.gmra.mrb[0].mxu0 %v3297
        %v3970 = vpop.f32.mrb[0].mxu0
        %v3971 = vadd.f32 %v3404, %v3970
        %v3972 = vpop.f32.mrb[0].mxu0
        %v3973 = vadd.f32 %v3408, %v3972
        %v3974 = vpop.f32.mrb[0].mxu0
        %v3975 = vadd.f32 %v3404, %v3974
        %v3976 = vpop.f32.mrb[0].mxu0
        %v3977 = vadd.f32 %v3408, %v3976
        %3978 = vmatprep.mubr.bf16.mxu0 %v3300
        %3979 = vmatmul.mubr.bf16.gmra.mrb[0].mxu0 %v3299
        %v3980 = vpop.f32.mrb[0].mxu0
        %v3981 = vadd.f32 %v3404, %v3980
        %v3982 = vpop.f32.mrb[0].mxu0
        %v3983 = vadd.f32 %v3408, %v3982
        %v3984 = vpop.f32.mrb[0].mxu0
        %v3985 = vadd.f32 %v3404, %v3984
        %v3986 = vpop.f32.mrb[0].mxu0
        %v3987 = vadd.f32 %v3408, %v3986
        %3988 = vmatprep.mubr.bf16.mxu0 %v3302
        %3989 = vmatmul.mubr.bf16.gmra.mrb[0].mxu0 %v3301
        %v3990 = vpop.f32.mrb[0].mxu0
        %v3991 = vadd.f32 %v3404, %v3990
        %v3992 = vpop.f32.mrb[0].mxu0
        %v3993 = vadd.f32 %v3408, %v3992
        %v3994 = vpop.f32.mrb[0].mxu0
        %v3995 = vadd.f32 %v3404, %v3994
        %v3996 = vpop.f32.mrb[0].mxu0
        %v3997 = vadd.f32 %v3408, %v3996
        %3998 = vmatprep.mubr.bf16.mxu0 %v3304
        %3999 = vmatmul.mubr.bf16.gmra.mrb[0].mxu0 %v3303
        %v4000 = vpop.f32.mrb[0].mxu0
        %v4001 = vadd.f32 %v3404, %v4000
        %v4002 = vpop.f32.mrb[0].mxu0
        %v4003 = vadd.f32 %v3408, %v4002
        %v4004 = vpop.f32.mrb[0].mxu0
        %v4005 = vadd.f32 %v3404, %v4004
        %v4006 = vpop.f32.mrb[0].mxu0
        %v4007 = vadd.f32 %v3408, %v4006
        %4008 = vmatprep.mubr.bf16.mxu0 %v3306
        %4009 = vmatmul.mubr.bf16.gmra.mrb[0].mxu0 %v3305
        %v4010 = vpop.f32.mrb[0].mxu0
        %v4011 = vadd.f32 %v3404, %v4010
        %v4012 = vpop.f32.mrb[0].mxu0
        %v4013 = vadd.f32 %v3408, %v4012
        %v4014 = vpop.f32.mrb[0].mxu0
        %v4015 = vadd.f32 %v3404, %v4014
        %v4016 = vpop.f32.mrb[0].mxu0
        %v4017 = vadd.f32 %v3408, %v4016
        %4018 = vmatprep.mubr.bf16.mxu0 %v3308
        %4019 = vmatmul.mubr.bf16.gmra.mrb[0].mxu0 %v3307
        %v4020 = vpop.f32.mrb[0].mxu0
        %v4021 = vadd.f32 %v3404, %v4020
        %v4022 = vpop.f32.mrb[0].mxu0
        %v4023 = vadd.f32 %v3408, %v4022
        %v4024 = vpop.f32.mrb[0].mxu0
        %v4025 = vadd.f32 %v3404, %v4024
        %v4026 = vpop.f32.mrb[0].mxu0
        %v4027 = vadd.f32 %v3408, %v4026
        %4028 = vmatprep.mubr.bf16.mxu0 %v3310
        %4029 = vmatmul.mubr.bf16.gmra.mrb[0].mxu0 %v3309
        %v4030 = vpop.f32.mrb[0].mxu0
        %v4031 = vadd.f32 %v3404, %v4030
        %v4032 = vpop.f32.mrb[0].mxu0
        %v4033 = vadd.f32 %v3408, %v4032
        %v4034 = vpop.f32.mrb[0].mxu0
        %v4035 = vadd.f32 %v3404, %v4034
        %v4036 = vpop.f32.mrb[0].mxu0
        %v4037 = vadd.f32 %v3408, %v4036
        %4038 = vmatprep.mubr.bf16.mxu0 %v3312
        %4039 = vmatmul.mubr.bf16.gmra.mrb[0].mxu0 %v3311
        %v4040 = vpop.f32.mrb[0].mxu0
        %v4041 = vadd.f32 %v3404, %v4040
        %v4042 = vpop.f32.mrb[0].mxu0
        %v4043 = vadd.f32 %v3408, %v4042
        %v4044 = vpop.f32.mrb[0].mxu0
        %v4045 = vadd.f32 %v3404, %v4044
        %v4046 = vpop.f32.mrb[0].mxu0
        %v4047 = vadd.f32 %v3408, %v4046
        %4048 = vmatprep.mubr.bf16.mxu0 %v3314
        %4049 = vmatmul.mubr.bf16.gmra.mrb[0].mxu0 %v3313
        %v4050 = vpop.f32.mrb[0].mxu0
        %v4051 = vadd.f32 %v3404, %v4050
        %v4052 = vpop.f32.mrb[0].mxu0
        %v4053 = vadd.f32 %v3408, %v4052
        %v4054 = vpop.f32.mrb[0].mxu0
        %v4055 = vadd.f32 %v3404, %v4054
        %v4056 = vpop.f32.mrb[0].mxu0
        %v4057 = vadd.f32 %v3408, %v4056
        %4058 = vmatprep.mubr.bf16.mxu0 %v3316
        %4059 = vmatmul.mubr.bf16.gmra.mrb[0].mxu0 %v3315
        %v4060 = vpop.f32.mrb[0].mxu0
        %v4061 = vadd.f32 %v3404, %v4060
        %v4062 = vpop.f32.mrb[0].mxu0
        %v4063 = vadd.f32 %v3408, %v4062
        %v4064 = vpop.f32.mrb[0].mxu0
        %v4065 = vadd.f32 %v3404, %v4064
        %v4066 = vpop.f32.mrb[0].mxu0
        %v4067 = vadd.f32 %v3408, %v4066
        %4068 = vmatprep.mubr.bf16.mxu0 %v3318
        %4069 = vmatmul.mubr.bf16.gmra.mrb[0].mxu0 %v3317
        %v4070 = vpop.f32.mrb[0].mxu0
        %v4071 = vadd.f32 %v3404, %v4070
        %v4072 = vpop.f32.mrb[0].mxu0
        %v4073 = vadd.f32 %v3408, %v4072
        %v4074 = vpop.f32.mrb[0].mxu0
        %v4075 = vadd.f32 %v3404, %v4074
        %v4076 = vpop.f32.mrb[0].mxu0
        %v4077 = vadd.f32 %v3408, %v4076
        %4078 = vmatprep.mubr.bf16.mxu0 %v3320
        %4079 = vmatmul.mubr.bf16.gmra.mrb[0].mxu0 %v3319
        %v4080 = vpop.f32.mrb[0].mxu0
        %v4081 = vadd.f32 %v3404, %v4080
        %v4082 = vpop.f32.mrb[0].mxu0
        %v4083 = vadd.f32 %v3408, %v4082
        %v4084 = vpop.f32.mrb[0].mxu0
        %v4085 = vadd.f32 %v3404, %v4084
        %v4086 = vpop.f32.mrb[0].mxu0
        %v4087 = vadd.f32 %v3408, %v4086
        %4088 = vmatprep.mubr.bf16.mxu0 %v3322
        %4089 = vmatmul.mubr.bf16.gmra.mrb[0].mxu0 %v3321
        %v4090 = vpop.f32.mrb[0].mxu0
        %v4091 = vadd.f32 %v3404, %v4090
        %v4092 = vpop.f32.mrb[0].mxu0
        %v4093 = vadd.f32 %v3408, %v4092
        %v4094 = vpop.f32.mrb[0].mxu0
        %v4095 = vadd.f32 %v3404, %v4094
        %v4096 = vpop.f32.mrb[0].mxu0
        %v4097 = vadd.f32 %v3408, %v4096
        %4098 = vmatprep.mubr.bf16.mxu0 %v3324
        %4099 = vmatmul.mubr.bf16.gmra.mrb[0].mxu0 %v3323
        %v4100 = vpop.f32.mrb[0].mxu0
        %v4101 = vadd.f32 %v3404, %v4100
        %v4102 = vpop.f32.mrb[0].mxu0
        %v4103 = vadd.f32 %v3408, %v4102
        %v4104 = vpop.f32.mrb[0].mxu0
        %v4105 = vadd.f32 %v3404, %v4104
        %v4106 = vpop.f32.mrb[0].mxu0
        %v4107 = vadd.f32 %v3408, %v4106
        %4108 = vmatprep.mubr.bf16.mxu0 %v3326
        %4109 = vmatmul.mubr.bf16.gmra.mrb[0].mxu0 %v3325
        %v4110 = vpop.f32.mrb[0].mxu0
        %v4111 = vadd.f32 %v3404, %v4110
        %v4112 = vpop.f32.mrb[0].mxu0
        %v4113 = vadd.f32 %v3408, %v4112
        %v4114 = vpop.f32.mrb[0].mxu0
        %v4115 = vadd.f32 %v3404, %v4114
        %v4116 = vpop.f32.mrb[0].mxu0
        %v4117 = vadd.f32 %v3408, %v4116
        %4118 = vdwg.mxu0
        %v4119 = vmax.f32 %v3768, 0.0
        %v4120 = vmax.f32 %v3770, 0.0
        %v4121 = vmax.f32 %v3961, 0.0
        %v4122 = vmax.f32 %v3963, 0.0
        %v4123 = vmax.f32 %v3772, 0.0
        %v4124 = vmax.f32 %v3774, 0.0
        %v4125 = vmax.f32 %v3965, 0.0
        %v4126 = vmax.f32 %v3967, 0.0
        %v4127 = vmax.f32 %v3778, 0.0
        %v4128 = vmax.f32 %v3780, 0.0
        %v4129 = vmax.f32 %v3971, 0.0
        %v4130 = vmax.f32 %v3973, 0.0
        %v4131 = vmax.f32 %v3782, 0.0
        %v4132 = vmax.f32 %v3784, 0.0
        %v4133 = vmax.f32 %v3975, 0.0
        %v4134 = vmax.f32 %v3977, 0.0
        %v4135 = vmax.f32 %v3788, 0.0
        %v4136 = vmax.f32 %v3790, 0.0
        %v4137 = vmax.f32 %v3981, 0.0
        %v4138 = vmax.f32 %v3983, 0.0
        %v4139 = vmax.f32 %v3792, 0.0
        %v4140 = vmax.f32 %v3794, 0.0
        %v4141 = vmax.f32 %v3985, 0.0
        %v4142 = vmax.f32 %v3987, 0.0
        %v4143 = vmax.f32 %v3798, 0.0
        %v4144 = vmax.f32 %v3800, 0.0
        %v4145 = vmax.f32 %v3991, 0.0
        %v4146 = vmax.f32 %v3993, 0.0
        %v4147 = vmax.f32 %v3802, 0.0
        %v4148 = vmax.f32 %v3804, 0.0
        %v4149 = vmax.f32 %v3995, 0.0
        %v4150 = vmax.f32 %v3997, 0.0
        %v4151 = vmax.f32 %v3808, 0.0
        %v4152 = vmax.f32 %v3810, 0.0
        %v4153 = vmax.f32 %v4001, 0.0
        %v4154 = vmax.f32 %v4003, 0.0
        %v4155 = vmax.f32 %v3812, 0.0
        %v4156 = vmax.f32 %v3814, 0.0
        %v4157 = vmax.f32 %v4005, 0.0
        %v4158 = vmax.f32 %v4007, 0.0
        %v4159 = vmax.f32 %v3818, 0.0
        %v4160 = vmax.f32 %v3820, 0.0
        %v4161 = vmax.f32 %v4011, 0.0
        %v4162 = vmax.f32 %v4013, 0.0
        %v4163 = vmax.f32 %v3822, 0.0
        %v4164 = vmax.f32 %v3824, 0.0
        %v4165 = vmax.f32 %v4015, 0.0
        %v4166 = vmax.f32 %v4017, 0.0
        %v4167 = vmax.f32 %v3828, 0.0
        %v4168 = vmax.f32 %v3830, 0.0
        %v4169 = vmax.f32 %v4021, 0.0
        %v4170 = vmax.f32 %v4023, 0.0
        %v4171 = vmax.f32 %v3832, 0.0
        %v4172 = vmax.f32 %v3834, 0.0
        %v4173 = vmax.f32 %v4025, 0.0
        %v4174 = vmax.f32 %v4027, 0.0
        %v4175 = vmax.f32 %v3838, 0.0
        %v4176 = vmax.f32 %v3840, 0.0
        %v4177 = vmax.f32 %v4031, 0.0
        %v4178 = vmax.f32 %v4033, 0.0
        %v4179 = vmax.f32 %v3842, 0.0
        %v4180 = vmax.f32 %v3844, 0.0
        %v4181 = vmax.f32 %v4035, 0.0
        %v4182 = vmax.f32 %v4037, 0.0
        %v4183 = vmax.f32 %v3848, 0.0
        %v4184 = vmax.f32 %v3850, 0.0
        %v4185 = vmax.f32 %v4041, 0.0
        %v4186 = vmax.f32 %v4043, 0.0
        %v4187 = vmax.f32 %v3852, 0.0
        %v4188 = vmax.f32 %v3854, 0.0
        %v4189 = vmax.f32 %v4045, 0.0
        %v4190 = vmax.f32 %v4047, 0.0
        %v4191 = vmax.f32 %v3858, 0.0
        %v4192 = vmax.f32 %v3860, 0.0
        %v4193 = vmax.f32 %v4051, 0.0
        %v4194 = vmax.f32 %v4053, 0.0
        %v4195 = vmax.f32 %v3862, 0.0
        %v4196 = vmax.f32 %v3864, 0.0
        %v4197 = vmax.f32 %v4055, 0.0
        %v4198 = vmax.f32 %v4057, 0.0
        %v4199 = vmax.f32 %v3868, 0.0
        %v4200 = vmax.f32 %v3870, 0.0
        %v4201 = vmax.f32 %v4061, 0.0
        %v4202 = vmax.f32 %v4063, 0.0
        %v4203 = vmax.f32 %v3872, 0.0
        %v4204 = vmax.f32 %v3874, 0.0
        %v4205 = vmax.f32 %v4065, 0.0
        %v4206 = vmax.f32 %v4067, 0.0
        %v4207 = vmax.f32 %v3878, 0.0
        %v4208 = vmax.f32 %v3880, 0.0
        %v4209 = vmax.f32 %v4071, 0.0
        %v4210 = vmax.f32 %v4073, 0.0
        %v4211 = vmax.f32 %v3882, 0.0
        %v4212 = vmax.f32 %v3884, 0.0
        %v4213 = vmax.f32 %v4075, 0.0
        %v4214 = vmax.f32 %v4077, 0.0
        %v4215 = vmax.f32 %v3888, 0.0
        %v4216 = vmax.f32 %v3890, 0.0
        %v4217 = vmax.f32 %v4081, 0.0
        %v4218 = vmax.f32 %v4083, 0.0
        %v4219 = vmax.f32 %v3892, 0.0
        %v4220 = vmax.f32 %v3894, 0.0
        %v4221 = vmax.f32 %v4085, 0.0
        %v4222 = vmax.f32 %v4087, 0.0
        %v4223 = vmax.f32 %v3898, 0.0
        %v4224 = vmax.f32 %v3900, 0.0
        %v4225 = vmax.f32 %v4091, 0.0
        %v4226 = vmax.f32 %v4093, 0.0
        %v4227 = vmax.f32 %v3902, 0.0
        %v4228 = vmax.f32 %v3904, 0.0
        %v4229 = vmax.f32 %v4095, 0.0
        %v4230 = vmax.f32 %v4097, 0.0
        %v4231 = vmax.f32 %v3908, 0.0
        %v4232 = vmax.f32 %v3910, 0.0
        %v4233 = vmax.f32 %v4101, 0.0
        %v4234 = vmax.f32 %v4103, 0.0
        %v4235 = vmax.f32 %v3912, 0.0
        %v4236 = vmax.f32 %v3914, 0.0
        %v4237 = vmax.f32 %v4105, 0.0
        %v4238 = vmax.f32 %v4107, 0.0
        %v4239 = vmax.f32 %v3918, 0.0
        %v4240 = vmax.f32 %v3920, 0.0
        %v4241 = vmax.f32 %v4111, 0.0
        %v4242 = vmax.f32 %v4113, 0.0
        %v4243 = vmax.f32 %v3922, 0.0
        %v4244 = vmax.f32 %v3924, 0.0
        %v4245 = vmax.f32 %v4115, 0.0
        %v4246 = vmax.f32 %v4117, 0.0
        %v4247 = vpack.c.bf16 %v4123, %v4119
        %v4248 = vpack.c.bf16 %v4124, %v4120
        %v4249 = vpack.c.bf16 %v4125, %v4121
        %v4250 = vpack.c.bf16 %v4126, %v4122
        %v4251 = vpack.c.bf16 %v4131, %v4127
        %v4252 = vpack.c.bf16 %v4132, %v4128
        %v4253 = vpack.c.bf16 %v4133, %v4129
        %v4254 = vpack.c.bf16 %v4134, %v4130
        %v4255 = vpack.c.bf16 %v4139, %v4135
        %v4256 = vpack.c.bf16 %v4140, %v4136
        %v4257 = vpack.c.bf16 %v4141, %v4137
        %v4258 = vpack.c.bf16 %v4142, %v4138
        %v4259 = vpack.c.bf16 %v4147, %v4143
        %v4260 = vpack.c.bf16 %v4148, %v4144
        %v4261 = vpack.c.bf16 %v4149, %v4145
        %v4262 = vpack.c.bf16 %v4150, %v4146
        %v4263 = vpack.c.bf16 %v4155, %v4151
        %v4264 = vpack.c.bf16 %v4156, %v4152
        %v4265 = vpack.c.bf16 %v4157, %v4153
        %v4266 = vpack.c.bf16 %v4158, %v4154
        %v4267 = vpack.c.bf16 %v4163, %v4159
        %v4268 = vpack.c.bf16 %v4164, %v4160
        %v4269 = vpack.c.bf16 %v4165, %v4161
        %v4270 = vpack.c.bf16 %v4166, %v4162
        %v4271 = vpack.c.bf16 %v4171, %v4167
        %v4272 = vpack.c.bf16 %v4172, %v4168
        %v4273 = vpack.c.bf16 %v4173, %v4169
        %v4274 = vpack.c.bf16 %v4174, %v4170
        %v4275 = vpack.c.bf16 %v4179, %v4175
        %v4276 = vpack.c.bf16 %v4180, %v4176
        %v4277 = vpack.c.bf16 %v4181, %v4177
        %v4278 = vpack.c.bf16 %v4182, %v4178
        %v4279 = vpack.c.bf16 %v4187, %v4183
        %v4280 = vpack.c.bf16 %v4188, %v4184
        %v4281 = vpack.c.bf16 %v4189, %v4185
        %v4282 = vpack.c.bf16 %v4190, %v4186
        %v4283 = vpack.c.bf16 %v4195, %v4191
        %v4284 = vpack.c.bf16 %v4196, %v4192
        %v4285 = vpack.c.bf16 %v4197, %v4193
        %v4286 = vpack.c.bf16 %v4198, %v4194
        %v4287 = vpack.c.bf16 %v4203, %v4199
        %v4288 = vpack.c.bf16 %v4204, %v4200
        %v4289 = vpack.c.bf16 %v4205, %v4201
        %v4290 = vpack.c.bf16 %v4206, %v4202
        %v4291 = vpack.c.bf16 %v4211, %v4207
        %v4292 = vpack.c.bf16 %v4212, %v4208
        %v4293 = vpack.c.bf16 %v4213, %v4209
        %v4294 = vpack.c.bf16 %v4214, %v4210
        %v4295 = vpack.c.bf16 %v4219, %v4215
        %v4296 = vpack.c.bf16 %v4220, %v4216
        %v4297 = vpack.c.bf16 %v4221, %v4217
        %v4298 = vpack.c.bf16 %v4222, %v4218
        %v4299 = vpack.c.bf16 %v4227, %v4223
        %v4300 = vpack.c.bf16 %v4228, %v4224
        %v4301 = vpack.c.bf16 %v4229, %v4225
        %v4302 = vpack.c.bf16 %v4230, %v4226
        %v4303 = vpack.c.bf16 %v4235, %v4231
        %v4304 = vpack.c.bf16 %v4236, %v4232
        %v4305 = vpack.c.bf16 %v4237, %v4233
        %v4306 = vpack.c.bf16 %v4238, %v4234
        %v4307 = vpack.c.bf16 %v4243, %v4239
        %v4308 = vpack.c.bf16 %v4244, %v4240
        %v4309 = vpack.c.bf16 %v4245, %v4241
        %v4310 = vpack.c.bf16 %v4246, %v4242
        %v4311 = vld [vmem:[%s12] sm:$0xf]
        %v4312 = vld [vmem:[%s12 + $0x4] sm:$0xf]
        %v4313 = vld [vmem:[%s12 + $0x8] sm:$0xf]
        %v4314 = vld [vmem:[%s12 + $0xc] sm:$0xf]
        %v4315 = vld [vmem:[%s12 + $0x10] sm:$0xf]
        %v4316 = vld [vmem:[%s12 + $0x14] sm:$0xf]
        %v4317 = vld [vmem:[%s12 + $0x18] sm:$0xf]
        %v4318 = vld [vmem:[%s12 + $0x1c] sm:$0xf]
        %v4319 = vld [vmem:[%s12 + $0x20] sm:$0xf]
        %v4320 = vld [vmem:[%s12 + $0x24] sm:$0xf]
        %v4321 = vld [vmem:[%s12 + $0x28] sm:$0xf]
        %v4322 = vld [vmem:[%s12 + $0x2c] sm:$0xf]
        %v4323 = vld [vmem:[%s12 + $0x30] sm:$0xf]
        %v4324 = vld [vmem:[%s12 + $0x34] sm:$0xf]
        %v4325 = vld [vmem:[%s12 + $0x38] sm:$0xf]
        %v4326 = vld [vmem:[%s12 + $0x3c] sm:$0xf]
        %v4327 = vld [vmem:[%s12 + $0x40] sm:$0xf]
        %v4328 = vld [vmem:[%s12 + $0x44] sm:$0xf]
        %v4329 = vld [vmem:[%s12 + $0x48] sm:$0xf]
        %v4330 = vld [vmem:[%s12 + $0x4c] sm:$0xf]
        %v4331 = vld [vmem:[%s12 + $0x50] sm:$0xf]
        %v4332 = vld [vmem:[%s12 + $0x54] sm:$0xf]
        %v4333 = vld [vmem:[%s12 + $0x58] sm:$0xf]
        %v4334 = vld [vmem:[%s12 + $0x5c] sm:$0xf]
        %v4335 = vld [vmem:[%s12 + $0x60] sm:$0xf]
        %v4336 = vld [vmem:[%s12 + $0x64] sm:$0xf]
        %v4337 = vld [vmem:[%s12 + $0x68] sm:$0xf]
        %v4338 = vld [vmem:[%s12 + $0x6c] sm:$0xf]
        %v4339 = vld [vmem:[%s12 + $0x70] sm:$0xf]
        %v4340 = vld [vmem:[%s12 + $0x74] sm:$0xf]
        %v4341 = vld [vmem:[%s12 + $0x78] sm:$0xf]
        %v4342 = vld [vmem:[%s12 + $0x7c] sm:$0xf]
        %v4343 = vld [vmem:[%s12 + $0x80] sm:$0xf]
        %v4344 = vld [vmem:[%s12 + $0x84] sm:$0xf]
        %v4345 = vld [vmem:[%s12 + $0x88] sm:$0xf]
        %v4346 = vld [vmem:[%s12 + $0x8c] sm:$0xf]
        %v4347 = vld [vmem:[%s12 + $0x90] sm:$0xf]
        %v4348 = vld [vmem:[%s12 + $0x94] sm:$0xf]
        %v4349 = vld [vmem:[%s12 + $0x98] sm:$0xf]
        %v4350 = vld [vmem:[%s12 + $0x9c] sm:$0xf]
        %v4351 = vld [vmem:[%s12 + $0xa0] sm:$0xf]
        %v4352 = vld [vmem:[%s12 + $0xa4] sm:$0xf]
        %v4353 = vld [vmem:[%s12 + $0xa8] sm:$0xf]
        %v4354 = vld [vmem:[%s12 + $0xac] sm:$0xf]
        %v4355 = vld [vmem:[%s12 + $0xb0] sm:$0xf]
        %v4356 = vld [vmem:[%s12 + $0xb4] sm:$0xf]
        %v4357 = vld [vmem:[%s12 + $0xb8] sm:$0xf]
        %v4358 = vld [vmem:[%s12 + $0xbc] sm:$0xf]
        %v4359 = vld [vmem:[%s12 + $0xc0] sm:$0xf]
        %v4360 = vld [vmem:[%s12 + $0xc4] sm:$0xf]
        %v4361 = vld [vmem:[%s12 + $0xc8] sm:$0xf]
        %v4362 = vld [vmem:[%s12 + $0xcc] sm:$0xf]
        %v4363 = vld [vmem:[%s12 + $0xd0] sm:$0xf]
        %v4364 = vld [vmem:[%s12 + $0xd4] sm:$0xf]
        %v4365 = vld [vmem:[%s12 + $0xd8] sm:$0xf]
        %v4366 = vld [vmem:[%s12 + $0xdc] sm:$0xf]
        %v4367 = vld [vmem:[%s12 + $0xe0] sm:$0xf]
        %v4368 = vld [vmem:[%s12 + $0xe4] sm:$0xf]
        %v4369 = vld [vmem:[%s12 + $0xe8] sm:$0xf]
        %v4370 = vld [vmem:[%s12 + $0xec] sm:$0xf]
        %v4371 = vld [vmem:[%s12 + $0xf0] sm:$0xf]
        %v4372 = vld [vmem:[%s12 + $0xf4] sm:$0xf]
        %v4373 = vld [vmem:[%s12 + $0xf8] sm:$0xf]
        %v4374 = vld [vmem:[%s12 + $0xfc] sm:$0xf]
        %v4375 = vld [vmem:[%s13] sm:$0x1]
        %v4377 = vlaneseq
        %v4378 = vshrl.u32 %v4377, 7
        %v4379 = vsub.s32 0, %v4378
        %v4380 = vrot.slane %v4375, %v4379
        %v4446 = vunpack.c.l.b16 %v4311
        %v4447 = vunpack.c.l.b16 %v4312
        %v4448 = vunpack.c.l.b16 %v4313
        %v4449 = vunpack.c.l.b16 %v4314
        %v4450 = vunpack.c.l.b16 %v4315
        %v4451 = vunpack.c.l.b16 %v4316
        %v4452 = vunpack.c.l.b16 %v4317
        %v4453 = vunpack.c.l.b16 %v4318
        %v4454 = vunpack.c.l.b16 %v4319
        %v4455 = vunpack.c.l.b16 %v4320
        %v4456 = vunpack.c.l.b16 %v4321
        %v4457 = vunpack.c.l.b16 %v4322
        %v4458 = vunpack.c.l.b16 %v4323
        %v4459 = vunpack.c.l.b16 %v4324
        %v4460 = vunpack.c.l.b16 %v4325
        %v4461 = vunpack.c.l.b16 %v4326
        %v4462 = vunpack.c.l.b16 %v4327
        %v4463 = vunpack.c.l.b16 %v4328
        %v4464 = vunpack.c.l.b16 %v4329
        %v4465 = vunpack.c.l.b16 %v4330
        %v4466 = vunpack.c.l.b16 %v4331
        %v4467 = vunpack.c.l.b16 %v4332
        %v4468 = vunpack.c.l.b16 %v4333
        %v4469 = vunpack.c.l.b16 %v4334
        %v4470 = vunpack.c.l.b16 %v4335
        %v4471 = vunpack.c.l.b16 %v4336
        %v4472 = vunpack.c.l.b16 %v4337
        %v4473 = vunpack.c.l.b16 %v4338
        %v4474 = vunpack.c.l.b16 %v4339
        %v4475 = vunpack.c.l.b16 %v4340
        %v4476 = vunpack.c.l.b16 %v4341
        %v4477 = vunpack.c.l.b16 %v4342
        %v4478 = vunpack.c.l.b16 %v4343
        %v4479 = vunpack.c.l.b16 %v4344
        %v4480 = vunpack.c.l.b16 %v4345
        %v4481 = vunpack.c.l.b16 %v4346
        %v4482 = vunpack.c.l.b16 %v4347
        %v4483 = vunpack.c.l.b16 %v4348
        %v4484 = vunpack.c.l.b16 %v4349
        %v4485 = vunpack.c.l.b16 %v4350
        %v4486 = vunpack.c.l.b16 %v4351
        %v4487 = vunpack.c.l.b16 %v4352
        %v4488 = vunpack.c.l.b16 %v4353
        %v4489 = vunpack.c.l.b16 %v4354
        %v4490 = vunpack.c.l.b16 %v4355
        %v4491 = vunpack.c.l.b16 %v4356
        %v4492 = vunpack.c.l.b16 %v4357
        %v4493 = vunpack.c.l.b16 %v4358
        %v4494 = vunpack.c.l.b16 %v4359
        %v4495 = vunpack.c.l.b16 %v4360
        %v4496 = vunpack.c.l.b16 %v4361
        %v4497 = vunpack.c.l.b16 %v4362
        %v4498 = vunpack.c.l.b16 %v4363
        %v4499 = vunpack.c.l.b16 %v4364
        %v4500 = vunpack.c.l.b16 %v4365
        %v4501 = vunpack.c.l.b16 %v4366
        %v4502 = vunpack.c.l.b16 %v4367
        %v4503 = vunpack.c.l.b16 %v4368
        %v4504 = vunpack.c.l.b16 %v4369
        %v4505 = vunpack.c.l.b16 %v4370
        %v4506 = vunpack.c.l.b16 %v4371
        %v4507 = vunpack.c.l.b16 %v4372
        %v4508 = vunpack.c.l.b16 %v4373
        %v4509 = vunpack.c.l.b16 %v4374
        %v4510 = vpack.c.b16 %v4447, %v4446
        %v4511 = vpack.c.b16 %v4449, %v4448
        %v4512 = vpack.c.b16 %v4451, %v4450
        %v4513 = vpack.c.b16 %v4453, %v4452
        %v4514 = vpack.c.b16 %v4455, %v4454
        %v4515 = vpack.c.b16 %v4457, %v4456
        %v4516 = vpack.c.b16 %v4459, %v4458
        %v4517 = vpack.c.b16 %v4461, %v4460
        %v4518 = vpack.c.b16 %v4463, %v4462
        %v4519 = vpack.c.b16 %v4465, %v4464
        %v4520 = vpack.c.b16 %v4467, %v4466
        %v4521 = vpack.c.b16 %v4469, %v4468
        %v4522 = vpack.c.b16 %v4471, %v4470
        %v4523 = vpack.c.b16 %v4473, %v4472
        %v4524 = vpack.c.b16 %v4475, %v4474
        %v4525 = vpack.c.b16 %v4477, %v4476
        %v4526 = vpack.c.b16 %v4479, %v4478
        %v4527 = vpack.c.b16 %v4481, %v4480
        %v4528 = vpack.c.b16 %v4483, %v4482
        %v4529 = vpack.c.b16 %v4485, %v4484
        %v4530 = vpack.c.b16 %v4487, %v4486
        %v4531 = vpack.c.b16 %v4489, %v4488
        %v4532 = vpack.c.b16 %v4491, %v4490
        %v4533 = vpack.c.b16 %v4493, %v4492
        %v4534 = vpack.c.b16 %v4495, %v4494
        %v4535 = vpack.c.b16 %v4497, %v4496
        %v4536 = vpack.c.b16 %v4499, %v4498
        %v4537 = vpack.c.b16 %v4501, %v4500
        %v4538 = vpack.c.b16 %v4503, %v4502
        %v4539 = vpack.c.b16 %v4505, %v4504
        %v4540 = vpack.c.b16 %v4507, %v4506
        %v4541 = vpack.c.b16 %v4509, %v4508
        %4574 = vmatprep.subr.bf16.mxu0 0
        %4575 = vmatpush1.bf16.msra.mxu0 %v4510
        %4576 = vmatprep.subr.bf16.mxu0 0
        %4577 = vmatpush1.bf16.msra.mxu0 %v4511
        %4578 = vmatprep.subr.bf16.mxu0 0
        %4579 = vmatpush1.bf16.msra.mxu0 %v4512
        %4580 = vmatprep.subr.bf16.mxu0 0
        %4581 = vmatpush1.bf16.msra.mxu0 %v4513
        %4582 = vmatprep.subr.bf16.mxu0 0
        %4583 = vmatpush1.bf16.msra.mxu0 %v4514
        %4584 = vmatprep.subr.bf16.mxu0 0
        %4585 = vmatpush1.bf16.msra.mxu0 %v4515
        %4586 = vmatprep.subr.bf16.mxu0 0
        %4587 = vmatpush1.bf16.msra.mxu0 %v4516
        %4588 = vmatprep.subr.bf16.mxu0 0
        %4589 = vmatpush1.bf16.msra.mxu0 %v4517
        %4590 = vmatprep.subr.bf16.mxu0 0
        %4591 = vmatpush1.bf16.msra.mxu0 %v4518
        %4592 = vmatprep.subr.bf16.mxu0 0
        %4593 = vmatpush1.bf16.msra.mxu0 %v4519
        %4594 = vmatprep.subr.bf16.mxu0 0
        %4595 = vmatpush1.bf16.msra.mxu0 %v4520
        %4596 = vmatprep.subr.bf16.mxu0 0
        %4597 = vmatpush1.bf16.msra.mxu0 %v4521
        %4598 = vmatprep.subr.bf16.mxu0 0
        %4599 = vmatpush1.bf16.msra.mxu0 %v4522
        %4600 = vmatprep.subr.bf16.mxu0 0
        %4601 = vmatpush1.bf16.msra.mxu0 %v4523
        %4602 = vmatprep.subr.bf16.mxu0 0
        %4603 = vmatpush1.bf16.msra.mxu0 %v4524
        %4604 = vmatprep.subr.bf16.mxu0 0
        %4605 = vmatpush1.bf16.msra.mxu0 %v4525
        %4606 = vmatprep.mubr.bf16.mxu0 %v4248
        %4607 = vmatmul.mubr.bf16.gmra.mrb[0].mxu0 %v4247
        %v4608 = vpop.f32.mrb[0].mxu0
        %v4609 = vadd.f32 %v4380, %v4608
        %v4610 = vpop.f32.mrb[0].mxu0
        %v4611 = vpop.f32.mrb[0].mxu0
        %v4612 = vadd.f32 %v4380, %v4611
        %v4613 = vpop.f32.mrb[0].mxu0
        %4614 = vmatprep.mubr.bf16.mxu0 %v4252
        %4615 = vmatmul.mubr.bf16.gmra.mrb[0].mxu0 %v4251
        %v4616 = vpop.f32.mrb[0].mxu0
        %v4617 = vadd.f32 %v4380, %v4616
        %v4618 = vpop.f32.mrb[0].mxu0
        %v4619 = vpop.f32.mrb[0].mxu0
        %v4620 = vadd.f32 %v4380, %v4619
        %v4621 = vpop.f32.mrb[0].mxu0
        %4622 = vmatprep.mubr.bf16.mxu0 %v4256
        %4623 = vmatmul.mubr.bf16.gmra.mrb[0].mxu0 %v4255
        %v4624 = vpop.f32.mrb[0].mxu0
        %v4625 = vadd.f32 %v4380, %v4624
        %v4626 = vpop.f32.mrb[0].mxu0
        %v4627 = vpop.f32.mrb[0].mxu0
        %v4628 = vadd.f32 %v4380, %v4627
        %v4629 = vpop.f32.mrb[0].mxu0
        %4630 = vmatprep.mubr.bf16.mxu0 %v4260
        %4631 = vmatmul.mubr.bf16.gmra.mrb[0].mxu0 %v4259
        %v4632 = vpop.f32.mrb[0].mxu0
        %v4633 = vadd.f32 %v4380, %v4632
        %v4634 = vpop.f32.mrb[0].mxu0
        %v4635 = vpop.f32.mrb[0].mxu0
        %v4636 = vadd.f32 %v4380, %v4635
        %v4637 = vpop.f32.mrb[0].mxu0
        %4638 = vmatprep.mubr.bf16.mxu0 %v4264
        %4639 = vmatmul.mubr.bf16.gmra.mrb[0].mxu0 %v4263
        %v4640 = vpop.f32.mrb[0].mxu0
        %v4641 = vadd.f32 %v4380, %v4640
        %v4642 = vpop.f32.mrb[0].mxu0
        %v4643 = vpop.f32.mrb[0].mxu0
        %v4644 = vadd.f32 %v4380, %v4643
        %v4645 = vpop.f32.mrb[0].mxu0
        %4646 = vmatprep.mubr.bf16.mxu0 %v4268
        %4647 = vmatmul.mubr.bf16.gmra.mrb[0].mxu0 %v4267
        %v4648 = vpop.f32.mrb[0].mxu0
        %v4649 = vadd.f32 %v4380, %v4648
        %v4650 = vpop.f32.mrb[0].mxu0
        %v4651 = vpop.f32.mrb[0].mxu0
        %v4652 = vadd.f32 %v4380, %v4651
        %v4653 = vpop.f32.mrb[0].mxu0
        %4654 = vmatprep.mubr.bf16.mxu0 %v4272
        %4655 = vmatmul.mubr.bf16.gmra.mrb[0].mxu0 %v4271
        %v4656 = vpop.f32.mrb[0].mxu0
        %v4657 = vadd.f32 %v4380, %v4656
        %v4658 = vpop.f32.mrb[0].mxu0
        %v4659 = vpop.f32.mrb[0].mxu0
        %v4660 = vadd.f32 %v4380, %v4659
        %v4661 = vpop.f32.mrb[0].mxu0
        %4662 = vmatprep.mubr.bf16.mxu0 %v4276
        %4663 = vmatmul.mubr.bf16.gmra.mrb[0].mxu0 %v4275
        %v4664 = vpop.f32.mrb[0].mxu0
        %v4665 = vadd.f32 %v4380, %v4664
        %v4666 = vpop.f32.mrb[0].mxu0
        %v4667 = vpop.f32.mrb[0].mxu0
        %v4668 = vadd.f32 %v4380, %v4667
        %v4669 = vpop.f32.mrb[0].mxu0
        %4670 = vmatprep.mubr.bf16.mxu0 %v4280
        %4671 = vmatmul.mubr.bf16.gmra.mrb[0].mxu0 %v4279
        %v4672 = vpop.f32.mrb[0].mxu0
        %v4673 = vadd.f32 %v4380, %v4672
        %v4674 = vpop.f32.mrb[0].mxu0
        %v4675 = vpop.f32.mrb[0].mxu0
        %v4676 = vadd.f32 %v4380, %v4675
        %v4677 = vpop.f32.mrb[0].mxu0
        %4678 = vmatprep.mubr.bf16.mxu0 %v4284
        %4679 = vmatmul.mubr.bf16.gmra.mrb[0].mxu0 %v4283
        %v4680 = vpop.f32.mrb[0].mxu0
        %v4681 = vadd.f32 %v4380, %v4680
        %v4682 = vpop.f32.mrb[0].mxu0
        %v4683 = vpop.f32.mrb[0].mxu0
        %v4684 = vadd.f32 %v4380, %v4683
        %v4685 = vpop.f32.mrb[0].mxu0
        %4686 = vmatprep.mubr.bf16.mxu0 %v4288
        %4687 = vmatmul.mubr.bf16.gmra.mrb[0].mxu0 %v4287
        %v4688 = vpop.f32.mrb[0].mxu0
        %v4689 = vadd.f32 %v4380, %v4688
        %v4690 = vpop.f32.mrb[0].mxu0
        %v4691 = vpop.f32.mrb[0].mxu0
        %v4692 = vadd.f32 %v4380, %v4691
        %v4693 = vpop.f32.mrb[0].mxu0
        %4694 = vmatprep.mubr.bf16.mxu0 %v4292
        %4695 = vmatmul.mubr.bf16.gmra.mrb[0].mxu0 %v4291
        %v4696 = vpop.f32.mrb[0].mxu0
        %v4697 = vadd.f32 %v4380, %v4696
        %v4698 = vpop.f32.mrb[0].mxu0
        %v4699 = vpop.f32.mrb[0].mxu0
        %v4700 = vadd.f32 %v4380, %v4699
        %v4701 = vpop.f32.mrb[0].mxu0
        %4702 = vmatprep.mubr.bf16.mxu0 %v4296
        %4703 = vmatmul.mubr.bf16.gmra.mrb[0].mxu0 %v4295
        %v4704 = vpop.f32.mrb[0].mxu0
        %v4705 = vadd.f32 %v4380, %v4704
        %v4706 = vpop.f32.mrb[0].mxu0
        %v4707 = vpop.f32.mrb[0].mxu0
        %v4708 = vadd.f32 %v4380, %v4707
        %v4709 = vpop.f32.mrb[0].mxu0
        %4710 = vmatprep.mubr.bf16.mxu0 %v4300
        %4711 = vmatmul.mubr.bf16.gmra.mrb[0].mxu0 %v4299
        %v4712 = vpop.f32.mrb[0].mxu0
        %v4713 = vadd.f32 %v4380, %v4712
        %v4714 = vpop.f32.mrb[0].mxu0
        %v4715 = vpop.f32.mrb[0].mxu0
        %v4716 = vadd.f32 %v4380, %v4715
        %v4717 = vpop.f32.mrb[0].mxu0
        %4718 = vmatprep.mubr.bf16.mxu0 %v4304
        %4719 = vmatmul.mubr.bf16.gmra.mrb[0].mxu0 %v4303
        %v4720 = vpop.f32.mrb[0].mxu0
        %v4721 = vadd.f32 %v4380, %v4720
        %v4722 = vpop.f32.mrb[0].mxu0
        %v4723 = vpop.f32.mrb[0].mxu0
        %v4724 = vadd.f32 %v4380, %v4723
        %v4725 = vpop.f32.mrb[0].mxu0
        %4726 = vmatprep.mubr.bf16.mxu0 %v4308
        %4727 = vmatmul.mubr.bf16.gmra.mrb[0].mxu0 %v4307
        %v4728 = vpop.f32.mrb[0].mxu0
        %v4729 = vadd.f32 %v4380, %v4728
        %v4730 = vpop.f32.mrb[0].mxu0
        %v4731 = vpop.f32.mrb[0].mxu0
        %v4732 = vadd.f32 %v4380, %v4731
        %v4733 = vpop.f32.mrb[0].mxu0
        %4734 = vdwg.mxu0
        %4735 = vmatprep.subr.bf16.mxu0 0
        %4736 = vmatpush1.bf16.msra.mxu0 %v4526
        %4737 = vmatprep.subr.bf16.mxu0 0
        %4738 = vmatpush1.bf16.msra.mxu0 %v4527
        %4739 = vmatprep.subr.bf16.mxu0 0
        %4740 = vmatpush1.bf16.msra.mxu0 %v4528
        %4741 = vmatprep.subr.bf16.mxu0 0
        %4742 = vmatpush1.bf16.msra.mxu0 %v4529
        %4743 = vmatprep.subr.bf16.mxu0 0
        %4744 = vmatpush1.bf16.msra.mxu0 %v4530
        %4745 = vmatprep.subr.bf16.mxu0 0
        %4746 = vmatpush1.bf16.msra.mxu0 %v4531
        %4747 = vmatprep.subr.bf16.mxu0 0
        %4748 = vmatpush1.bf16.msra.mxu0 %v4532
        %4749 = vmatprep.subr.bf16.mxu0 0
        %4750 = vmatpush1.bf16.msra.mxu0 %v4533
        %4751 = vmatprep.subr.bf16.mxu0 0
        %4752 = vmatpush1.bf16.msra.mxu0 %v4534
        %4753 = vmatprep.subr.bf16.mxu0 0
        %4754 = vmatpush1.bf16.msra.mxu0 %v4535
        %4755 = vmatprep.subr.bf16.mxu0 0
        %4756 = vmatpush1.bf16.msra.mxu0 %v4536
        %4757 = vmatprep.subr.bf16.mxu0 0
        %4758 = vmatpush1.bf16.msra.mxu0 %v4537
        %4759 = vmatprep.subr.bf16.mxu0 0
        %4760 = vmatpush1.bf16.msra.mxu0 %v4538
        %4761 = vmatprep.subr.bf16.mxu0 0
        %4762 = vmatpush1.bf16.msra.mxu0 %v4539
        %4763 = vmatprep.subr.bf16.mxu0 0
        %4764 = vmatpush1.bf16.msra.mxu0 %v4540
        %4765 = vmatprep.subr.bf16.mxu0 0
        %4766 = vmatpush1.bf16.msra.mxu0 %v4541
        %4767 = vmatprep.mubr.bf16.mxu0 %v4250
        %4768 = vmatmul.mubr.bf16.gmra.mrb[0].mxu0 %v4249
        %v4769 = vpop.f32.mrb[0].mxu0
        %v4770 = vadd.f32 %v4609, %v4769
        %v4771 = vpop.f32.mrb[0].mxu0
        %v4772 = vpop.f32.mrb[0].mxu0
        %v4773 = vadd.f32 %v4612, %v4772
        %v4774 = vpop.f32.mrb[0].mxu0
        %4775 = vmatprep.mubr.bf16.mxu0 %v4254
        %4776 = vmatmul.mubr.bf16.gmra.mrb[0].mxu0 %v4253
        %v4777 = vpop.f32.mrb[0].mxu0
        %v4778 = vadd.f32 %v4617, %v4777
        %v4779 = vpop.f32.mrb[0].mxu0
        %v4780 = vpop.f32.mrb[0].mxu0
        %v4781 = vadd.f32 %v4620, %v4780
        %v4782 = vpop.f32.mrb[0].mxu0
        %4783 = vmatprep.mubr.bf16.mxu0 %v4258
        %4784 = vmatmul.mubr.bf16.gmra.mrb[0].mxu0 %v4257
        %v4785 = vpop.f32.mrb[0].mxu0
        %v4786 = vadd.f32 %v4625, %v4785
        %v4787 = vpop.f32.mrb[0].mxu0
        %v4788 = vpop.f32.mrb[0].mxu0
        %v4789 = vadd.f32 %v4628, %v4788
        %v4790 = vpop.f32.mrb[0].mxu0
        %4791 = vmatprep.mubr.bf16.mxu0 %v4262
        %4792 = vmatmul.mubr.bf16.gmra.mrb[0].mxu0 %v4261
        %v4793 = vpop.f32.mrb[0].mxu0
        %v4794 = vadd.f32 %v4633, %v4793
        %v4795 = vpop.f32.mrb[0].mxu0
        %v4796 = vpop.f32.mrb[0].mxu0
        %v4797 = vadd.f32 %v4636, %v4796
        %v4798 = vpop.f32.mrb[0].mxu0
        %4799 = vmatprep.mubr.bf16.mxu0 %v4266
        %4800 = vmatmul.mubr.bf16.gmra.mrb[0].mxu0 %v4265
        %v4801 = vpop.f32.mrb[0].mxu0
        %v4802 = vadd.f32 %v4641, %v4801
        %v4803 = vpop.f32.mrb[0].mxu0
        %v4804 = vpop.f32.mrb[0].mxu0
        %v4805 = vadd.f32 %v4644, %v4804
        %v4806 = vpop.f32.mrb[0].mxu0
        %4807 = vmatprep.mubr.bf16.mxu0 %v4270
        %4808 = vmatmul.mubr.bf16.gmra.mrb[0].mxu0 %v4269
        %v4809 = vpop.f32.mrb[0].mxu0
        %v4810 = vadd.f32 %v4649, %v4809
        %v4811 = vpop.f32.mrb[0].mxu0
        %v4812 = vpop.f32.mrb[0].mxu0
        %v4813 = vadd.f32 %v4652, %v4812
        %v4814 = vpop.f32.mrb[0].mxu0
        %4815 = vmatprep.mubr.bf16.mxu0 %v4274
        %4816 = vmatmul.mubr.bf16.gmra.mrb[0].mxu0 %v4273
        %v4817 = vpop.f32.mrb[0].mxu0
        %v4818 = vadd.f32 %v4657, %v4817
        %v4819 = vpop.f32.mrb[0].mxu0
        %v4820 = vpop.f32.mrb[0].mxu0
        %v4821 = vadd.f32 %v4660, %v4820
        %v4822 = vpop.f32.mrb[0].mxu0
        %4823 = vmatprep.mubr.bf16.mxu0 %v4278
        %4824 = vmatmul.mubr.bf16.gmra.mrb[0].mxu0 %v4277
        %v4825 = vpop.f32.mrb[0].mxu0
        %v4826 = vadd.f32 %v4665, %v4825
        %v4827 = vpop.f32.mrb[0].mxu0
        %v4828 = vpop.f32.mrb[0].mxu0
        %v4829 = vadd.f32 %v4668, %v4828
        %v4830 = vpop.f32.mrb[0].mxu0
        %4831 = vmatprep.mubr.bf16.mxu0 %v4282
        %4832 = vmatmul.mubr.bf16.gmra.mrb[0].mxu0 %v4281
        %v4833 = vpop.f32.mrb[0].mxu0
        %v4834 = vadd.f32 %v4673, %v4833
        %v4835 = vpop.f32.mrb[0].mxu0
        %v4836 = vpop.f32.mrb[0].mxu0
        %v4837 = vadd.f32 %v4676, %v4836
        %v4838 = vpop.f32.mrb[0].mxu0
        %4839 = vmatprep.mubr.bf16.mxu0 %v4286
        %4840 = vmatmul.mubr.bf16.gmra.mrb[0].mxu0 %v4285
        %v4841 = vpop.f32.mrb[0].mxu0
        %v4842 = vadd.f32 %v4681, %v4841
        %v4843 = vpop.f32.mrb[0].mxu0
        %v4844 = vpop.f32.mrb[0].mxu0
        %v4845 = vadd.f32 %v4684, %v4844
        %v4846 = vpop.f32.mrb[0].mxu0
        %4847 = vmatprep.mubr.bf16.mxu0 %v4290
        %4848 = vmatmul.mubr.bf16.gmra.mrb[0].mxu0 %v4289
        %v4849 = vpop.f32.mrb[0].mxu0
        %v4850 = vadd.f32 %v4689, %v4849
        %v4851 = vpop.f32.mrb[0].mxu0
        %v4852 = vpop.f32.mrb[0].mxu0
        %v4853 = vadd.f32 %v4692, %v4852
        %v4854 = vpop.f32.mrb[0].mxu0
        %4855 = vmatprep.mubr.bf16.mxu0 %v4294
        %4856 = vmatmul.mubr.bf16.gmra.mrb[0].mxu0 %v4293
        %v4857 = vpop.f32.mrb[0].mxu0
        %v4858 = vadd.f32 %v4697, %v4857
        %v4859 = vpop.f32.mrb[0].mxu0
        %v4860 = vpop.f32.mrb[0].mxu0
        %v4861 = vadd.f32 %v4700, %v4860
        %v4862 = vpop.f32.mrb[0].mxu0
        %4863 = vmatprep.mubr.bf16.mxu0 %v4298
        %4864 = vmatmul.mubr.bf16.gmra.mrb[0].mxu0 %v4297
        %v4865 = vpop.f32.mrb[0].mxu0
        %v4866 = vadd.f32 %v4705, %v4865
        %v4867 = vpop.f32.mrb[0].mxu0
        %v4868 = vpop.f32.mrb[0].mxu0
        %v4869 = vadd.f32 %v4708, %v4868
        %v4870 = vpop.f32.mrb[0].mxu0
        %4871 = vmatprep.mubr.bf16.mxu0 %v4302
        %4872 = vmatmul.mubr.bf16.gmra.mrb[0].mxu0 %v4301
        %v4873 = vpop.f32.mrb[0].mxu0
        %v4874 = vadd.f32 %v4713, %v4873
        %v4875 = vpop.f32.mrb[0].mxu0
        %v4876 = vpop.f32.mrb[0].mxu0
        %v4877 = vadd.f32 %v4716, %v4876
        %v4878 = vpop.f32.mrb[0].mxu0
        %4879 = vmatprep.mubr.bf16.mxu0 %v4306
        %4880 = vmatmul.mubr.bf16.gmra.mrb[0].mxu0 %v4305
        %v4881 = vpop.f32.mrb[0].mxu0
        %v4882 = vadd.f32 %v4721, %v4881
        %v4883 = vpop.f32.mrb[0].mxu0
        %v4884 = vpop.f32.mrb[0].mxu0
        %v4885 = vadd.f32 %v4724, %v4884
        %v4886 = vpop.f32.mrb[0].mxu0
        %4887 = vmatprep.mubr.bf16.mxu0 %v4310
        %4888 = vmatmul.mubr.bf16.gmra.mrb[0].mxu0 %v4309
        %v4889 = vpop.f32.mrb[0].mxu0
        %v4890 = vadd.f32 %v4729, %v4889
        %v4891 = vpop.f32.mrb[0].mxu0
        %v4892 = vpop.f32.mrb[0].mxu0
        %v4893 = vadd.f32 %v4732, %v4892
        %v4894 = vpop.f32.mrb[0].mxu0
        %4895 = vdwg.mxu0
        %v4896 = vxor.u32 %v4770, 2147483648
        %v4897 = vxor.u32 %v4773, 2147483648
        %v4898 = vxor.u32 %v4778, 2147483648
        %v4899 = vxor.u32 %v4781, 2147483648
        %v4900 = vxor.u32 %v4786, 2147483648
        %v4901 = vxor.u32 %v4789, 2147483648
        %v4902 = vxor.u32 %v4794, 2147483648
        %v4903 = vxor.u32 %v4797, 2147483648
        %v4904 = vxor.u32 %v4802, 2147483648
        %v4905 = vxor.u32 %v4805, 2147483648
        %v4906 = vxor.u32 %v4810, 2147483648
        %v4907 = vxor.u32 %v4813, 2147483648
        %v4908 = vxor.u32 %v4818, 2147483648
        %v4909 = vxor.u32 %v4821, 2147483648
        %v4910 = vxor.u32 %v4826, 2147483648
        %v4911 = vxor.u32 %v4829, 2147483648
        %v4912 = vxor.u32 %v4834, 2147483648
        %v4913 = vxor.u32 %v4837, 2147483648
        %v4914 = vxor.u32 %v4842, 2147483648
        %v4915 = vxor.u32 %v4845, 2147483648
        %v4916 = vxor.u32 %v4850, 2147483648
        %v4917 = vxor.u32 %v4853, 2147483648
        %v4918 = vxor.u32 %v4858, 2147483648
        %v4919 = vxor.u32 %v4861, 2147483648
        %v4920 = vxor.u32 %v4866, 2147483648
        %v4921 = vxor.u32 %v4869, 2147483648
        %v4922 = vxor.u32 %v4874, 2147483648
        %v4923 = vxor.u32 %v4877, 2147483648
        %v4924 = vxor.u32 %v4882, 2147483648
        %v4925 = vxor.u32 %v4885, 2147483648
        %v4926 = vxor.u32 %v4890, 2147483648
        %v4927 = vxor.u32 %v4893, 2147483648
        %v4928 = vmul.f32 %v4896, 1.442695
        %v4929 = vpow.pop %v4928
        %v4930 = vmul.f32 %v4897, 1.442695
        %v4931 = vpow.pop %v4930
        %v4932 = vmul.f32 %v4898, 1.442695
        %v4933 = vpow.pop %v4932
        %v4934 = vmul.f32 %v4899, 1.442695
        %v4935 = vpow.pop %v4934
        %v4936 = vmul.f32 %v4900, 1.442695
        %v4937 = vpow.pop %v4936
        %v4938 = vmul.f32 %v4901, 1.442695
        %v4939 = vpow.pop %v4938
        %v4940 = vmul.f32 %v4902, 1.442695
        %v4941 = vpow.pop %v4940
        %v4942 = vmul.f32 %v4903, 1.442695
        %v4943 = vpow.pop %v4942
        %v4944 = vmul.f32 %v4904, 1.442695
        %v4945 = vpow.pop %v4944
        %v4946 = vmul.f32 %v4905, 1.442695
        %v4947 = vpow.pop %v4946
        %v4948 = vmul.f32 %v4906, 1.442695
        %v4949 = vpow.pop %v4948
        %v4950 = vmul.f32 %v4907, 1.442695
        %v4951 = vpow.pop %v4950
        %v4952 = vmul.f32 %v4908, 1.442695
        %v4953 = vpow.pop %v4952
        %v4954 = vmul.f32 %v4909, 1.442695
        %v4955 = vpow.pop %v4954
        %v4956 = vmul.f32 %v4910, 1.442695
        %v4957 = vpow.pop %v4956
        %v4958 = vmul.f32 %v4911, 1.442695
        %v4959 = vpow.pop %v4958
        %v4960 = vmul.f32 %v4912, 1.442695
        %v4961 = vpow.pop %v4960
        %v4962 = vmul.f32 %v4913, 1.442695
        %v4963 = vpow.pop %v4962
        %v4964 = vmul.f32 %v4914, 1.442695
        %v4965 = vpow.pop %v4964
        %v4966 = vmul.f32 %v4915, 1.442695
        %v4967 = vpow.pop %v4966
        %v4968 = vmul.f32 %v4916, 1.442695
        %v4969 = vpow.pop %v4968
        %v4970 = vmul.f32 %v4917, 1.442695
        %v4971 = vpow.pop %v4970
        %v4972 = vmul.f32 %v4918, 1.442695
        %v4973 = vpow.pop %v4972
        %v4974 = vmul.f32 %v4919, 1.442695
        %v4975 = vpow.pop %v4974
        %v4976 = vmul.f32 %v4920, 1.442695
        %v4977 = vpow.pop %v4976
        %v4978 = vmul.f32 %v4921, 1.442695
        %v4979 = vpow.pop %v4978
        %v4980 = vmul.f32 %v4922, 1.442695
        %v4981 = vpow.pop %v4980
        %v4982 = vmul.f32 %v4923, 1.442695
        %v4983 = vpow.pop %v4982
        %v4984 = vmul.f32 %v4924, 1.442695
        %v4985 = vpow.pop %v4984
        %v4986 = vmul.f32 %v4925, 1.442695
        %v4987 = vpow.pop %v4986
        %v4988 = vmul.f32 %v4926, 1.442695
        %v4989 = vpow.pop %v4988
        %v4990 = vmul.f32 %v4927, 1.442695
        %v4991 = vpow.pop %v4990
        %v4992 = vadd.f32 %v4929, 1.0
        %v4993 = vadd.f32 %v4931, 1.0
        %v4994 = vadd.f32 %v4933, 1.0
        %v4995 = vadd.f32 %v4935, 1.0
        %v4996 = vadd.f32 %v4937, 1.0
        %v4997 = vadd.f32 %v4939, 1.0
        %v4998 = vadd.f32 %v4941, 1.0
        %v4999 = vadd.f32 %v4943, 1.0
        %v5000 = vadd.f32 %v4945, 1.0
        %v5001 = vadd.f32 %v4947, 1.0
        %v5002 = vadd.f32 %v4949, 1.0
        %v5003 = vadd.f32 %v4951, 1.0
        %v5004 = vadd.f32 %v4953, 1.0
        %v5005 = vadd.f32 %v4955, 1.0
        %v5006 = vadd.f32 %v4957, 1.0
        %v5007 = vadd.f32 %v4959, 1.0
        %v5008 = vadd.f32 %v4961, 1.0
        %v5009 = vadd.f32 %v4963, 1.0
        %v5010 = vadd.f32 %v4965, 1.0
        %v5011 = vadd.f32 %v4967, 1.0
        %v5012 = vadd.f32 %v4969, 1.0
        %v5013 = vadd.f32 %v4971, 1.0
        %v5014 = vadd.f32 %v4973, 1.0
        %v5015 = vadd.f32 %v4975, 1.0
        %v5016 = vadd.f32 %v4977, 1.0
        %v5017 = vadd.f32 %v4979, 1.0
        %v5018 = vadd.f32 %v4981, 1.0
        %v5019 = vadd.f32 %v4983, 1.0
        %v5020 = vadd.f32 %v4985, 1.0
        %v5021 = vadd.f32 %v4987, 1.0
        %v5022 = vadd.f32 %v4989, 1.0
        %v5023 = vadd.f32 %v4991, 1.0
        %v5024 = vrcp.pop %v4992
        %v5025 = vmul.f32 1.0, %v5024
        %v5026 = vrcp.pop %v4993
        %v5027 = vmul.f32 1.0, %v5026
        %v5028 = vrcp.pop %v4994
        %v5029 = vmul.f32 1.0, %v5028
        %v5030 = vrcp.pop %v4995
        %v5031 = vmul.f32 1.0, %v5030
        %v5032 = vrcp.pop %v4996
        %v5033 = vmul.f32 1.0, %v5032
        %v5034 = vrcp.pop %v4997
        %v5035 = vmul.f32 1.0, %v5034
        %v5036 = vrcp.pop %v4998
        %v5037 = vmul.f32 1.0, %v5036
        %v5038 = vrcp.pop %v4999
        %v5039 = vmul.f32 1.0, %v5038
        %v5040 = vrcp.pop %v5000
        %v5041 = vmul.f32 1.0, %v5040
        %v5042 = vrcp.pop %v5001
        %v5043 = vmul.f32 1.0, %v5042
        %v5044 = vrcp.pop %v5002
        %v5045 = vmul.f32 1.0, %v5044
        %v5046 = vrcp.pop %v5003
        %v5047 = vmul.f32 1.0, %v5046
        %v5048 = vrcp.pop %v5004
        %v5049 = vmul.f32 1.0, %v5048
        %v5050 = vrcp.pop %v5005
        %v5051 = vmul.f32 1.0, %v5050
        %v5052 = vrcp.pop %v5006
        %v5053 = vmul.f32 1.0, %v5052
        %v5054 = vrcp.pop %v5007
        %v5055 = vmul.f32 1.0, %v5054
        %v5056 = vrcp.pop %v5008
        %v5057 = vmul.f32 1.0, %v5056
        %v5058 = vrcp.pop %v5009
        %v5059 = vmul.f32 1.0, %v5058
        %v5060 = vrcp.pop %v5010
        %v5061 = vmul.f32 1.0, %v5060
        %v5062 = vrcp.pop %v5011
        %v5063 = vmul.f32 1.0, %v5062
        %v5064 = vrcp.pop %v5012
        %v5065 = vmul.f32 1.0, %v5064
        %v5066 = vrcp.pop %v5013
        %v5067 = vmul.f32 1.0, %v5066
        %v5068 = vrcp.pop %v5014
        %v5069 = vmul.f32 1.0, %v5068
        %v5070 = vrcp.pop %v5015
        %v5071 = vmul.f32 1.0, %v5070
        %v5072 = vrcp.pop %v5016
        %v5073 = vmul.f32 1.0, %v5072
        %v5074 = vrcp.pop %v5017
        %v5075 = vmul.f32 1.0, %v5074
        %v5076 = vrcp.pop %v5018
        %v5077 = vmul.f32 1.0, %v5076
        %v5078 = vrcp.pop %v5019
        %v5079 = vmul.f32 1.0, %v5078
        %v5080 = vrcp.pop %v5020
        %v5081 = vmul.f32 1.0, %v5080
        %v5082 = vrcp.pop %v5021
        %v5083 = vmul.f32 1.0, %v5082
        %v5084 = vrcp.pop %v5022
        %v5085 = vmul.f32 1.0, %v5084
        %v5086 = vrcp.pop %v5023
        %v5087 = vmul.f32 1.0, %v5086
        %5088 = vst.msk [vmem:[%s586] sm:$0xff] %vm756, %v5025
        %5089 = vst.msk [vmem:[%s586 + $0x8] sm:$0xff] %vm756, %v5027
        %5090 = vst.msk [vmem:[%s586 + $0x10] sm:$0xff] %vm756, %v5029
        %5091 = vst.msk [vmem:[%s586 + $0x18] sm:$0xff] %vm756, %v5031
        %5092 = vst.msk [vmem:[%s586 + $0x20] sm:$0xff] %vm756, %v5033
        %5093 = vst.msk [vmem:[%s586 + $0x28] sm:$0xff] %vm756, %v5035
        %5094 = vst.msk [vmem:[%s586 + $0x30] sm:$0xff] %vm756, %v5037
        %5095 = vst.msk [vmem:[%s586 + $0x38] sm:$0xff] %vm756, %v5039
        %5096 = vst.msk [vmem:[%s586 + $0x40] sm:$0xff] %vm756, %v5041
        %5097 = vst.msk [vmem:[%s586 + $0x48] sm:$0xff] %vm756, %v5043
        %5098 = vst.msk [vmem:[%s586 + $0x50] sm:$0xff] %vm756, %v5045
        %5099 = vst.msk [vmem:[%s586 + $0x58] sm:$0xff] %vm756, %v5047
        %5100 = vst.msk [vmem:[%s586 + $0x60] sm:$0xff] %vm756, %v5049
        %5101 = vst.msk [vmem:[%s586 + $0x68] sm:$0xff] %vm756, %v5051
        %5102 = vst.msk [vmem:[%s586 + $0x70] sm:$0xff] %vm756, %v5053
        %5103 = vst.msk [vmem:[%s586 + $0x78] sm:$0xff] %vm756, %v5055
        %5104 = vst.msk [vmem:[%s586 + $0x80] sm:$0xff] %vm756, %v5057
        %5105 = vst.msk [vmem:[%s586 + $0x88] sm:$0xff] %vm756, %v5059
        %5106 = vst.msk [vmem:[%s586 + $0x90] sm:$0xff] %vm756, %v5061
        %5107 = vst.msk [vmem:[%s586 + $0x98] sm:$0xff] %vm756, %v5063
        %5108 = vst.msk [vmem:[%s586 + $0xa0] sm:$0xff] %vm756, %v5065
        %5109 = vst.msk [vmem:[%s586 + $0xa8] sm:$0xff] %vm756, %v5067
        %5110 = vst.msk [vmem:[%s586 + $0xb0] sm:$0xff] %vm756, %v5069
        %5111 = vst.msk [vmem:[%s586 + $0xb8] sm:$0xff] %vm756, %v5071
        %5112 = vst.msk [vmem:[%s586 + $0xc0] sm:$0xff] %vm756, %v5073
        %5113 = vst.msk [vmem:[%s586 + $0xc8] sm:$0xff] %vm756, %v5075
        %5114 = vst.msk [vmem:[%s586 + $0xd0] sm:$0xff] %vm756, %v5077
        %5115 = vst.msk [vmem:[%s586 + $0xd8] sm:$0xff] %vm756, %v5079
        %5116 = vst.msk [vmem:[%s586 + $0xe0] sm:$0xff] %vm756, %v5081
        %5117 = vst.msk [vmem:[%s586 + $0xe8] sm:$0xff] %vm756, %v5083
        %5118 = vst.msk [vmem:[%s586 + $0xf0] sm:$0xff] %vm756, %v5085
        %5119 = vst.msk [vmem:[%s586 + $0xf8] sm:$0xff] %vm756, %v5087
        %s5120 = smul.u32 32, %s33
        %p5121 = scmp.lt.s32.totalorder %s5120, 63
        %s5122 = scalar_select %p5121, %s5120, 63
        %s5123 = smul.addr %s5122, 8
        %s5124 = scalar_lea.vmem %s14, %s5123
        %s5125 = sand.u32 %s371, 1
        %s5126 = scalar_lea.sflag [#allocation4], %s5125
        %s5127 = sand.u32 %s371, 1
        %s5128 = smul.addr %s5127, 512
        %s5129 = scalar_lea.vmem [#allocation10], %s5128
        // Predicated region
        $region93: #{tpu_custom_call.1} parent=75 // pred_check
          %p5130 = pneg %p355
        $region94: #{tpu_custom_call.1} parent=75 // pred_check_branch
          %5132 = sbr.rel (%p5130) target = $region96
        $region95: #{tpu_custom_call.1} parent=75 // pred_region
          %s5133 = smul.u32 32, %s33
        $region96: #{tpu_custom_call.1} parent=75 // pred_fallthru
          _
        // Predicated region
        $region97: #{tpu_custom_call.1} parent=75 // pred_check
          %p5134 = pneg %p381
        $region98: #{tpu_custom_call.1} parent=75 // pred_check_branch
          %5136 = sbr.rel (%p5134) target = $region100
        $region99: #{tpu_custom_call.1} parent=75 // pred_region
          %s5137 = smul.u32 32, %s33
          %s5139 = ssub.s32 8192, 8192
          %5140 = vsyncadd %s5126, %s5139
          %s5141 = smul.addr %s5137, 2
          %s5142 = smul.addr %s5141, 128
          %s5143 = scalar_lea.hbm %s15, %s5142
          %s5144 = sshll.u32 %s5129, 4
          %s5145 = int_to_ptr.vmem [resolvable:$true] %s5144
          %5150 = dma.vmem_to_hbm [thread:$0]  %s5145, 8192, %s5143, %s5126, 256, 256, 16
        $region100: #{tpu_custom_call.1} parent=75 // pred_fallthru
          _
      $region76: #{tpu_custom_call.1} parent=5 // pred_fallthru
        _
      %p5151 = scmp.le.s32.totalorder 2, %s28
      // Predicated region
      $region101: #{tpu_custom_call.1} parent=5 // pred_check
        %p5152 = pneg %p5151
      $region102: #{tpu_custom_call.1} parent=5 // pred_check_branch
        %5154 = sbr.rel (%p5152) target = $region104
      $region103: #{tpu_custom_call.1} parent=5 // pred_region
        %s5155 = ssub.s32 %s28, 2
        // Predicated region
        $region105: #{tpu_custom_call.1} parent=103 // pred_check
          %p5156 = pneg %p361
        $region106: #{tpu_custom_call.1} parent=103 // pred_check_branch
          %5158 = sbr.rel (%p5156) target = $region108
        $region107: #{tpu_custom_call.1} parent=103 // pred_region
          %s5159 = smul.u32 32, %s34
          %p5160 = scmp.lt.s32.totalorder %s5159, 63
          %s5161 = scalar_select %p5160, %s5159, 63
          %s5162 = smul.addr %s5161, 8
          %s5163 = scalar_lea.vmem %s14, %s5162
        $region108: #{tpu_custom_call.1} parent=103 // pred_fallthru
          _
        // Predicated region
        $region109: #{tpu_custom_call.1} parent=103 // pred_check
          %p5164 = pneg %p387
        $region110: #{tpu_custom_call.1} parent=103 // pred_check_branch
          %5166 = sbr.rel (%p5164) target = $region112
        $region111: #{tpu_custom_call.1} parent=103 // pred_region
          %s5167 = sand.u32 %s372, 1
          %s5168 = scalar_lea.sflag [#allocation4], %s5167
          %s5169 = sand.u32 %s372, 1
          %s5170 = smul.addr %s5169, 512
          %s5171 = scalar_lea.vmem [#allocation10], %s5170
          %5172 = dma.done %s5168, 8192
        $region112: #{tpu_custom_call.1} parent=103 // pred_fallthru
          _
      $region104: #{tpu_custom_call.1} parent=5 // pred_fallthru
        _
    $region6: #{tpu_custom_call.1} parent=1 // loop_footer
      %s32 = sadd.s32 1, %s28
    $region7: #{tpu_custom_call.1} parent=1 // loop_footer_branch
      %27 = sbr.rel target = $region3
    $region8: #{tpu_custom_call.1} parent=1 // loop_exit
      _
    %5173 = vsyncpa [#allocation3], 1
    %s5174 = scalar_lea.sflag [#allocation3], 1
    %5175 = vsyncpa %s5174, 1
    %5176 = vsyncpa [#allocation6], 1
    %5177 = vsyncpa [#allocation9], 1
    %5178 = vsyncpa [#allocation4], 1
    %s5179 = scalar_lea.sflag [#allocation4], 1
    %5180 = vsyncpa %s5179, 1

</llo_original>
